<compile_context>
chip_gen: v7x
topology: tpu7x:2x2x1
jax: 0.10.0
libtpu: 0.0.40
codegen_flags: <defaults>
</compile_context>

<pallas_src>
import jax
import jax.numpy as jnp
from jax.experimental import pallas as pl
from jax.experimental.pallas import tpu as pltpu

_PAR = pltpu.CompilerParams(dimension_semantics=("parallel",))

# Row-tile targets (review: 256-1024). Actual tile = min(target, round_up(rows, 8)).
NODE_TILE = 256    # node_weight / out_weight rows
COEFF_TILE = 2048  # rows of the flattened (E*n_orb, coeff) activation
TRI_TILE = 256     # triplet rows
EDGE_TILE = 256    # edge rows


# ------------------------------------------------------------------ helpers

def _round_up(v, m):
    return ((v + m - 1) // m) * m


def _pick_tile(rows, target):
    # tile must be a multiple of 8 (f32 sublane packing); no need to exceed the
    # 8-padded problem size.
    return min(_round_up(target, 8), _round_up(max(rows, 1), 8))


def _pad_rows(a, rows_p):
    pad = rows_p - a.shape[0]
    if pad == 0:
        return a
    return jnp.pad(a, [(0, pad)] + [(0, 0)] * (a.ndim - 1))


# ------------------------------------------------------------------ kernels

def _node_kernel(x_ref, w_ref, b_ref, o_ref):
    # node_weight: Dense(emb, 2*conv, bias=True)
    o_ref[...] = (jnp.dot(x_ref[...], w_ref[...],
                          preferred_element_type=jnp.float32) + b_ref[...])


def _f_coeffs_kernel(c_ref, w1_ref, w2_ref, o_ref):
    # f_coeffs: Dense -> SiLU -> Dense -> SiLU (no biases), on flattened rows
    h = jnp.dot(c_ref[...], w1_ref[...], preferred_element_type=jnp.float32)
    h = h * jax.nn.sigmoid(h)
    h = jnp.dot(h, w2_ref[...], preferred_element_type=jnp.float32)
    o_ref[...] = h * jax.nn.sigmoid(h)


def _triplet_kernel(rbks_ref, shb_ref, cks_ref, xk_ref, o_ref):
    # three_body_orbs = rb[edge_idx_ks] * shb
    orbs = rbks_ref[...] * shb_ref[...]                          # (t, n_orb)
    # einsum('td,tdh->th', orbs, cks)
    w = jnp.sum(orbs[:, :, None] * cks_ref[...], axis=1)         # (t, conv)
    # F.normalize(dim=-1) via rsqrt (EUP)
    inv = jax.lax.rsqrt(jnp.maximum(
        jnp.sum(w * w, axis=-1, keepdims=True), 1e-24))
    # * sigmoid(xk[tri_idx_k])
    o_ref[...] = (w * inv) * jax.nn.sigmoid(xk_ref[...])


def _edge_kernel(c_ref, tw_ref, rb_ref, xst_ref,
                 w3_ref, wb_ref, wn1_ref, bn1_ref, wn2_ref, bn2_ref, o_ref):
    # cst <- cst * (1 + f_three(tw));  lcao_w = sum_d rb_d * cst_d
    # factored: lcao_w = (1 + g) * sum_d rb_d * c_d   (g independent of d)
    s = jnp.sum(rb_ref[...][:, :, None] * c_ref[...], axis=1)    # (e, conv)
    g = jnp.dot(tw_ref[...], w3_ref[...], preferred_element_type=jnp.float32)
    lw = s * (1.0 + g)
    inv = jax.lax.rsqrt(jnp.maximum(
        jnp.sum(lw * lw, axis=-1, keepdims=True), 1e-24))
    lw = lw * inv
    bw = jnp.dot(lw, wb_ref[...], preferred_element_type=jnp.float32)
    # f_node on pre-concatenated [x_s, x_t] -> single lane-dense matmul
    h = (jnp.dot(xst_ref[...], wn1_ref[...], preferred_element_type=jnp.float32)
         + bn1_ref[...])
    h = h * jax.nn.sigmoid(h)
    h = jnp.dot(h, wn2_ref[...], preferred_element_type=jnp.float32) + bn2_ref[...]
    h = h * jax.nn.sigmoid(h)
    o_ref[...] = bw * h                                          # per-edge message


def _out_kernel(agg_ref, xb_ref, wout_ref, o_ref):
    # x = x_before + out_weight(scatter(...))
    o_ref[...] = xb_ref[...] + jnp.dot(agg_ref[...], wout_ref[...],
                                       preferred_element_type=jnp.float32)


# --------------------------------------------------------------- pallas_call wrappers

def node_weight_call(x, w, b, target_tile=NODE_TILE):
    n, emb = x.shape
    out = w.shape[1]
    tile = _pick_tile(n, target_tile)
    n_p = _round_up(n, tile)
    res = pl.pallas_call(
        _node_kernel,
        out_shape=jax.ShapeDtypeStruct((n_p, out), jnp.float32),
        grid=(n_p // tile,),
        in_specs=[pl.BlockSpec((tile, emb), lambda i: (i, 0)),
                  pl.BlockSpec((emb, out), lambda i: (0, 0)),
                  pl.BlockSpec((1, out), lambda i: (0, 0))],
        out_specs=pl.BlockSpec((tile, out), lambda i: (i, 0)),
        compiler_params=_PAR,
    )(_pad_rows(x, n_p), w, b)
    return res[:n]


def f_coeffs_call(c2d, w1, w2, target_tile=COEFF_TILE):
    rows, coeff = c2d.shape
    conv = w2.shape[1]
    tile = _pick_tile(rows, target_tile)
    rows_p = _round_up(rows, tile)
    res = pl.pallas_call(
        _f_coeffs_kernel,
        out_shape=jax.ShapeDtypeStruct((rows_p, conv), jnp.float32),
        grid=(rows_p // tile,),
        in_specs=[pl.BlockSpec((tile, coeff), lambda i: (i, 0)),
                  pl.BlockSpec((coeff, conv), lambda i: (0, 0)),
                  pl.BlockSpec((conv, conv), lambda i: (0, 0))],
        out_specs=pl.BlockSpec((tile, conv), lambda i: (i, 0)),
        compiler_params=_PAR,
    )(_pad_rows(c2d, rows_p), w1, w2)
    return res[:rows]


def triplet_call(rbks, shb, cks, xkg, target_tile=TRI_TILE):
    t, n_orb = rbks.shape
    conv = cks.shape[2]
    tile = _pick_tile(t, target_tile)
    t_p = _round_up(t, tile)
    res = pl.pallas_call(
        _triplet_kernel,
        out_shape=jax.ShapeDtypeStruct((t_p, conv), jnp.float32),
        grid=(t_p // tile,),
        in_specs=[pl.BlockSpec((tile, n_orb), lambda i: (i, 0)),
                  pl.BlockSpec((tile, n_orb), lambda i: (i, 0)),
                  pl.BlockSpec((tile, n_orb, conv), lambda i: (i, 0, 0)),
                  pl.BlockSpec((tile, conv), lambda i: (i, 0))],
        out_specs=pl.BlockSpec((tile, conv), lambda i: (i, 0)),
        compiler_params=_PAR,
    )(_pad_rows(rbks, t_p), _pad_rows(shb, t_p),
      _pad_rows(cks, t_p), _pad_rows(xkg, t_p))
    return res[:t]


def edge_call(c, tw, rb, xst, p, target_tile=EDGE_TILE):
    e, n_orb, conv = c.shape
    tile = _pick_tile(e, target_tile)
    e_p = _round_up(e, tile)
    res = pl.pallas_call(
        _edge_kernel,
        out_shape=jax.ShapeDtypeStruct((e_p, conv), jnp.float32),
        grid=(e_p // tile,),
        in_specs=[pl.BlockSpec((tile, n_orb, conv), lambda i: (i, 0, 0)),
                  pl.BlockSpec((tile, conv), lambda i: (i, 0)),
                  pl.BlockSpec((tile, n_orb), lambda i: (i, 0)),
                  pl.BlockSpec((tile, 2 * conv), lambda i: (i, 0)),
                  pl.BlockSpec((conv, conv), lambda i: (0, 0)),
                  pl.BlockSpec((conv, conv), lambda i: (0, 0)),
                  pl.BlockSpec((2 * conv, conv), lambda i: (0, 0)),
                  pl.BlockSpec((1, conv), lambda i: (0, 0)),
                  pl.BlockSpec((conv, conv), lambda i: (0, 0)),
                  pl.BlockSpec((1, conv), lambda i: (0, 0))],
        out_specs=pl.BlockSpec((tile, conv), lambda i: (i, 0)),
        compiler_params=_PAR,
    )(_pad_rows(c, e_p), _pad_rows(tw, e_p), _pad_rows(rb, e_p),
      _pad_rows(xst, e_p),
      p["w_three"], p["w_basis"], p["w_n1"], p["b_n1"], p["w_n2"], p["b_n2"])
    return res[:e]


def out_call(agg, xb, wout, target_tile=NODE_TILE):
    n, conv = agg.shape
    emb = wout.shape[1]
    tile = _pick_tile(n, target_tile)
    n_p = _round_up(n, tile)
    res = pl.pallas_call(
        _out_kernel,
        out_shape=jax.ShapeDtypeStruct((n_p, emb), jnp.float32),
        grid=(n_p // tile,),
        in_specs=[pl.BlockSpec((tile, conv), lambda i: (i, 0)),
                  pl.BlockSpec((tile, emb), lambda i: (i, 0)),
                  pl.BlockSpec((conv, emb), lambda i: (0, 0))],
        out_specs=pl.BlockSpec((tile, emb), lambda i: (i, 0)),
        compiler_params=_PAR,
    )(_pad_rows(agg, n_p), _pad_rows(xb, n_p), wout)
    return res[:n]


# --------------------------------------------------------------- full forward

def lcao_interaction(p, x, cst, rb, shb, idx_s, idx_t, tri_idx_k,
                     edge_idx_ks, edge_idx_st):
    n, emb = x.shape
    e, n_orb, coeff = cst.shape
    conv = p["w_basis"].shape[0]
    x_before = x

    # node_weight + chunk
    h = node_weight_call(x, p["w_node"], p["b_node"])
    xh, xk = h[:, :conv], h[:, conv:]

    # f_coeffs on flattened (E*n_orb, coeff)
    c2d = f_coeffs_call(cst.reshape(e * n_orb, coeff), p["w_c1"], p["w_c2"])
    c = c2d.reshape(e, n_orb, conv)

    # glue: data-dependent gathers (kept in XLA)
    cks = jnp.take(c, edge_idx_ks, axis=0)
    rb_ks = jnp.take(rb, edge_idx_ks, axis=0)
    xk_g = jnp.take(xk, tri_idx_k, axis=0)

    # triplet message (orbital contraction + normalize + gating)
    tw_tri = triplet_call(rb_ks, shb, cks, xk_g)
    # glue: scatter-add triplet messages onto edges (k->s triplets -> s->t edge)
    tw = jax.ops.segment_sum(tw_tri, edge_idx_st, num_segments=e)

    # pre-concatenate [x_s, x_t] so f_node's first layer is a single matmul
    xst = jnp.concatenate([jnp.take(xh, idx_s, axis=0),
                           jnp.take(xh, idx_t, axis=0)], axis=-1)

    # per-edge message (factored f_three gate, lcao reduction, normalize,
    # basis_weight, f_node)
    msg = edge_call(c, tw, rb, xst, p)
    # glue: scatter-add edge messages onto source nodes
    agg = jax.ops.segment_sum(msg, idx_s, num_segments=n)

    # residual + out_weight
    return out_call(agg, x_before, p["w_out"])


# --------------------------------------------------------------- reference (pure JAX)

def lcao_reference(p, x, cst, rb, shb, idx_s, idx_t, tri_idx_k,
                   edge_idx_ks, edge_idx_st):
    n, emb = x.shape
    e, n_orb, coeff = cst.shape
    conv = p["w_basis"].shape[0]
    x_before = x
    h = x @ p["w_node"] + p["b_node"][0]
    xh, xk = h[:, :conv], h[:, conv:]
    c = cst.reshape(e * n_orb, coeff) @ p["w_c1"]
    c = c * jax.nn.sigmoid(c)
    c = c @ p["w_c2"]
    c = (c * jax.nn.sigmoid(c)).reshape(e, n_orb, conv)
    cks = c[edge_idx_ks]
    orbs = rb[edge_idx_ks] * shb
    tw = jnp.einsum("td,tdh->th", orbs, cks)
    tw = tw / jnp.maximum(jnp.linalg.norm(tw, axis=-1, keepdims=True), 1e-12)
    tw = tw * jax.nn.sigmoid(xk[tri_idx_k])
    tw = jax.ops.segment_sum(tw, edge_idx_st, num_segments=e)
    g = tw @ p["w_three"]
    c2 = c + c * g[:, None, :]
    lw = jnp.einsum("ed,edh->eh", rb, c2)
    lw = lw / jnp.maximum(jnp.linalg.norm(lw, axis=-1, keepdims=True), 1e-12)
    bw = lw @ p["w_basis"]
    xcat = jnp.concatenate([xh[idx_s], xh[idx_t]], axis=-1)
    hn = xcat @ p["w_n1"] + p["b_n1"][0]
    hn = hn * jax.nn.sigmoid(hn)
    hn = hn @ p["w_n2"] + p["b_n2"][0]
    hn = hn * jax.nn.sigmoid(hn)
    msg = bw * hn
    agg = jax.ops.segment_sum(msg, idx_s, num_segments=n)
    return x_before + agg @ p["w_out"]


# --------------------------------------------------------------- params

def init_params(key, emb, coeff, conv):
    ks = jax.random.split(key, 11)

    def w(k, fin, fout):
        return jax.random.normal(k, (fin, fout), jnp.float32) / jnp.sqrt(float(fin))

    def b(k, fout):
        return 0.1 * jax.random.normal(k, (1, fout), jnp.float32)

    return {
        "w_node": w(ks[0], emb, 2 * conv),   # node_weight (emb -> 2*conv, bias)
        "b_node": b(ks[1], 2 * conv),
        "w_c1":   w(ks[2], coeff, conv),     # f_coeffs[0]
        "w_c2":   w(ks[3], conv, conv),      # f_coeffs[2]
        "w_three": w(ks[4], conv, conv),     # f_three
        "w_basis": w(ks[5], conv, conv),     # basis_weight
        "w_n1":   w(ks[6], 2 * conv, conv),  # f_node[0] (bias)
        "b_n1":   b(ks[7], conv),
        "w_n2":   w(ks[8], conv, conv),      # f_node[2] (bias)
        "b_n2":   b(ks[9], conv),
        "w_out":  w(ks[10], conv, emb),      # out_weight
    }


# --------------------------------------------------------------- main

if __name__ == "__main__":
    emb_size, emb_size_coeff, emb_size_conv = 32, 16, 32
    # deliberately NOT tile-aligned sizes to exercise the padding path
    N, E, T, n_orb = 10, 22, 27, 8

    key = jax.random.PRNGKey(0)
    kp, kx, kc, kr, ksh, ki = jax.random.split(key, 6)
    params = init_params(kp, emb_size, emb_size_coeff, emb_size_conv)

    x = jax.random.normal(kx, (N, emb_size), jnp.float32)
    cst = jax.random.normal(kc, (E, n_orb, emb_size_coeff), jnp.float32)
    rb = jax.random.normal(kr, (E, n_orb), jnp.float32)
    shb = jax.random.normal(ksh, (T, n_orb), jnp.float32)
    k1, k2, k3, k4, k5 = jax.random.split(ki, 5)
    idx_s = jax.random.randint(k1, (E,), 0, N, jnp.int32)
    idx_t = jax.random.randint(k2, (E,), 0, N, jnp.int32)
    tri_idx_k = jax.random.randint(k3, (T,), 0, N, jnp.int32)
    edge_idx_ks = jax.random.randint(k4, (T,), 0, E, jnp.int32)
    edge_idx_st = jax.random.randint(k5, (T,), 0, E, jnp.int32)

    out = jax.jit(lcao_interaction)(params, x, cst, rb, shb, idx_s, idx_t,
                                    tri_idx_k, edge_idx_ks, edge_idx_st)
    out = jax.block_until_ready(out)

    ref = lcao_reference(params, x, cst, rb, shb, idx_s, idx_t,
                         tri_idx_k, edge_idx_ks, edge_idx_st)
    assert out.shape == (N, emb_size) and out.dtype == jnp.float32
    max_err = float(jnp.max(jnp.abs(out - ref)))
    assert jnp.allclose(out, ref, atol=1e-2, rtol=1e-2), max_err
    print("KERNEL_OK")
</pallas_src>

<mosaic_0001>
module attributes {stable_mosaic.version = 11 : i64} {
  func.func @_node_kernel(%arg0: i32, %arg1: memref<16x32xf32, #tpu.memory_space<vmem>>, %arg2: memref<32x64xf32, #tpu.memory_space<vmem>>, %arg3: memref<1x64xf32, #tpu.memory_space<vmem>>, %arg4: memref<16x64xf32, #tpu.memory_space<vmem>>) attributes {dimension_semantics = [#tpu.dimension_semantics<parallel>], iteration_bounds = array<i64: 1>, scalar_prefetch = 0 : i64, scratch_operands = 0 : i64, tpu.core_type = #tpu.core_type<tc>, window_params = [{transform_indices = @transform_0, window_bounds = array<i64: 16, 32>}, {pipeline_mode = #tpu.pipeline_mode<synchronous>, transform_indices = @transform_1, window_bounds = array<i64: 32, 64>}, {pipeline_mode = #tpu.pipeline_mode<synchronous>, transform_indices = @transform_2, window_bounds = array<i64: 1, 64>}, {transform_indices = @transform_3, window_bounds = array<i64: 16, 64>}]} {
    %c0 = arith.constant 0 : index
    %c0_0 = arith.constant 0 : index
    %0 = vector.load %arg1[%c0, %c0_0] : memref<16x32xf32, #tpu.memory_space<vmem>>, vector<16x32xf32>
    %c0_1 = arith.constant 0 : index
    %c0_2 = arith.constant 0 : index
    %1 = vector.load %arg2[%c0_1, %c0_2] : memref<32x64xf32, #tpu.memory_space<vmem>>, vector<32x64xf32>
    %cst = arith.constant dense<0.000000e+00> : vector<16x64xf32>
    %2 = tpu.matmul %0, %1, %cst {dimension_numbers = #tpu.dot_dimension_numbers<[1], [0], [0], [1], [0, 0, 1, 1], [], []>} : vector<16x32xf32>, vector<32x64xf32>, vector<16x64xf32> -> vector<16x64xf32>
    %c0_3 = arith.constant 0 : index
    %c0_4 = arith.constant 0 : index
    %3 = vector.load %arg3[%c0_3, %c0_4] : memref<1x64xf32, #tpu.memory_space<vmem>>, vector<1x64xf32>
    %4 = vector.broadcast %3 : vector<1x64xf32> to vector<16x64xf32>
    %5 = arith.addf %2, %4 : vector<16x64xf32>
    %c0_5 = arith.constant 0 : index
    %c0_6 = arith.constant 0 : index
    %6 = vector.load %arg4[%c0_5, %c0_6] : memref<16x64xf32, #tpu.memory_space<vmem>>, vector<16x64xf32>
    tpu.vector_store %arg4[%c0_5, %c0_6], %5 {strides = array<i32>} : memref<16x64xf32, #tpu.memory_space<vmem>>, vector<16x64xf32>,
    return
  }
  func.func @transform_0(%arg0: i32) -> (i32, i32) {
    %c0_i32 = arith.constant 0 : i32
    %c0_i32_0 = arith.constant 0 : i32
    return %arg0, %c0_i32 : i32, i32
  }
  func.func @transform_1(%arg0: i32) -> (i32, i32) {
    %c0_i32 = arith.constant 0 : i32
    %c0_i32_0 = arith.constant 0 : i32
    %c0_i32_1 = arith.constant 0 : i32
    return %c0_i32, %c0_i32_0 : i32, i32
  }
  func.func @transform_2(%arg0: i32) -> (i32, i32) {
    %c0_i32 = arith.constant 0 : i32
    %c0_i32_0 = arith.constant 0 : i32
    %c0_i32_1 = arith.constant 0 : i32
    return %c0_i32, %c0_i32_0 : i32, i32
  }
  func.func @transform_3(%arg0: i32) -> (i32, i32) {
    %c0_i32 = arith.constant 0 : i32
    %c0_i32_0 = arith.constant 0 : i32
    return %arg0, %c0_i32 : i32, i32
  }
}

module attributes {stable_mosaic.version = 11 : i64} {
  func.func @_f_coeffs_kernel(%arg0: i32, %arg1: memref<176x16xf32, #tpu.memory_space<vmem>>, %arg2: memref<16x32xf32, #tpu.memory_space<vmem>>, %arg3: memref<32x32xf32, #tpu.memory_space<vmem>>, %arg4: memref<176x32xf32, #tpu.memory_space<vmem>>) attributes {dimension_semantics = [#tpu.dimension_semantics<parallel>], iteration_bounds = array<i64: 1>, scalar_prefetch = 0 : i64, scratch_operands = 0 : i64, tpu.core_type = #tpu.core_type<tc>, window_params = [{transform_indices = @transform_0, window_bounds = array<i64: 176, 16>}, {pipeline_mode = #tpu.pipeline_mode<synchronous>, transform_indices = @transform_1, window_bounds = array<i64: 16, 32>}, {pipeline_mode = #tpu.pipeline_mode<synchronous>, transform_indices = @transform_2, window_bounds = array<i64: 32, 32>}, {transform_indices = @transform_3, window_bounds = array<i64: 176, 32>}]} {
    %c0 = arith.constant 0 : index
    %c0_0 = arith.constant 0 : index
    %0 = vector.load %arg1[%c0, %c0_0] : memref<176x16xf32, #tpu.memory_space<vmem>>, vector<176x16xf32>
    %c0_1 = arith.constant 0 : index
    %c0_2 = arith.constant 0 : index
    %1 = vector.load %arg2[%c0_1, %c0_2] : memref<16x32xf32, #tpu.memory_space<vmem>>, vector<16x32xf32>
    %cst = arith.constant dense<0.000000e+00> : vector<176x32xf32>
    %2 = tpu.matmul %0, %1, %cst {dimension_numbers = #tpu.dot_dimension_numbers<[1], [0], [0], [1], [0, 0, 1, 1], [], []>} : vector<176x16xf32>, vector<16x32xf32>, vector<176x32xf32> -> vector<176x32xf32>
    %3 = arith.negf %2 : vector<176x32xf32>
    %4 = math.exp %3 : vector<176x32xf32>
    %cst_3 = arith.constant 1.000000e+00 : f32
    %5 = vector.broadcast %cst_3 : f32 to vector<176x32xf32>
    %6 = arith.addf %5, %4 : vector<176x32xf32>
    %7 = arith.divf %5, %6 : vector<176x32xf32>
    %8 = arith.mulf %2, %7 : vector<176x32xf32>
    %c0_4 = arith.constant 0 : index
    %c0_5 = arith.constant 0 : index
    %9 = vector.load %arg3[%c0_4, %c0_5] : memref<32x32xf32, #tpu.memory_space<vmem>>, vector<32x32xf32>
    %cst_6 = arith.constant dense<0.000000e+00> : vector<176x32xf32>
    %10 = tpu.matmul %8, %9, %cst_6 {dimension_numbers = #tpu.dot_dimension_numbers<[1], [0], [0], [1], [0, 0, 1, 1], [], []>} : vector<176x32xf32>, vector<32x32xf32>, vector<176x32xf32> -> vector<176x32xf32>
    %11 = arith.negf %10 : vector<176x32xf32>
    %12 = math.exp %11 : vector<176x32xf32>
    %cst_7 = arith.constant 1.000000e+00 : f32
    %13 = vector.broadcast %cst_7 : f32 to vector<176x32xf32>
    %14 = arith.addf %13, %12 : vector<176x32xf32>
    %15 = arith.divf %13, %14 : vector<176x32xf32>
    %16 = arith.mulf %10, %15 : vector<176x32xf32>
    %c0_8 = arith.constant 0 : index
    %c0_9 = arith.constant 0 : index
    %17 = vector.load %arg4[%c0_8, %c0_9] : memref<176x32xf32, #tpu.memory_space<vmem>>, vector<176x32xf32>
    tpu.vector_store %arg4[%c0_8, %c0_9], %16 {strides = array<i32>} : memref<176x32xf32, #tpu.memory_space<vmem>>, vector<176x32xf32>,
    return
  }
  func.func @transform_0(%arg0: i32) -> (i32, i32) {
    %c0_i32 = arith.constant 0 : i32
    %c0_i32_0 = arith.constant 0 : i32
    return %arg0, %c0_i32 : i32, i32
  }
  func.func @transform_1(%arg0: i32) -> (i32, i32) {
    %c0_i32 = arith.constant 0 : i32
    %c0_i32_0 = arith.constant 0 : i32
    %c0_i32_1 = arith.constant 0 : i32
    return %c0_i32, %c0_i32_0 : i32, i32
  }
  func.func @transform_2(%arg0: i32) -> (i32, i32) {
    %c0_i32 = arith.constant 0 : i32
    %c0_i32_0 = arith.constant 0 : i32
    %c0_i32_1 = arith.constant 0 : i32
    return %c0_i32, %c0_i32_0 : i32, i32
  }
  func.func @transform_3(%arg0: i32) -> (i32, i32) {
    %c0_i32 = arith.constant 0 : i32
    %c0_i32_0 = arith.constant 0 : i32
    return %arg0, %c0_i32 : i32, i32
  }
}

module attributes {stable_mosaic.version = 11 : i64} {
  func.func @_triplet_kernel(%arg0: i32, %arg1: memref<32x8xf32, #tpu.memory_space<vmem>>, %arg2: memref<32x8xf32, #tpu.memory_space<vmem>>, %arg3: memref<32x8x32xf32, #tpu.memory_space<vmem>>, %arg4: memref<32x32xf32, #tpu.memory_space<vmem>>, %arg5: memref<32x32xf32, #tpu.memory_space<vmem>>) attributes {dimension_semantics = [#tpu.dimension_semantics<parallel>], iteration_bounds = array<i64: 1>, scalar_prefetch = 0 : i64, scratch_operands = 0 : i64, tpu.core_type = #tpu.core_type<tc>, window_params = [{transform_indices = @transform_0, window_bounds = array<i64: 32, 8>}, {transform_indices = @transform_1, window_bounds = array<i64: 32, 8>}, {transform_indices = @transform_2, window_bounds = array<i64: 32, 8, 32>}, {transform_indices = @transform_3, window_bounds = array<i64: 32, 32>}, {transform_indices = @transform_4, window_bounds = array<i64: 32, 32>}]} {
    %c0 = arith.constant 0 : index
    %c0_0 = arith.constant 0 : index
    %0 = vector.load %arg1[%c0, %c0_0] : memref<32x8xf32, #tpu.memory_space<vmem>>, vector<32x8xf32>
    %c0_1 = arith.constant 0 : index
    %c0_2 = arith.constant 0 : index
    %1 = vector.load %arg2[%c0_1, %c0_2] : memref<32x8xf32, #tpu.memory_space<vmem>>, vector<32x8xf32>
    %2 = arith.mulf %0, %1 : vector<32x8xf32>
    %3 = vector.shape_cast %2 : vector<32x8xf32> to vector<32x8x1xf32>
    %c0_3 = arith.constant 0 : index
    %c0_4 = arith.constant 0 : index
    %c0_5 = arith.constant 0 : index
    %4 = vector.load %arg3[%c0_3, %c0_4, %c0_5] : memref<32x8x32xf32, #tpu.memory_space<vmem>>, vector<32x8x32xf32>
    %5 = vector.broadcast %3 : vector<32x8x1xf32> to vector<32x8x32xf32>
    %6 = arith.mulf %5, %4 : vector<32x8x32xf32>
    %cst = arith.constant dense<0.000000e+00> : vector<32x32xf32>
    %7 = vector.multi_reduction <add>, %6, %cst [1] : vector<32x8x32xf32> to vector<32x32xf32>
    %8 = arith.mulf %7, %7 : vector<32x32xf32>
    %cst_6 = arith.constant dense<0.000000e+00> : vector<32xf32>
    %9 = vector.multi_reduction <add>, %8, %cst_6 [1] : vector<32x32xf32> to vector<32xf32>
    %10 = vector.shape_cast %9 : vector<32xf32> to vector<32x1xf32>
    %cst_7 = arith.constant 1.000000e-24 : f32
    %11 = vector.broadcast %cst_7 : f32 to vector<32x1xf32>
    %12 = arith.maximumf %10, %11 : vector<32x1xf32>
    %13 = math.rsqrt %12 : vector<32x1xf32>
    %14 = vector.broadcast %13 : vector<32x1xf32> to vector<32x32xf32>
    %15 = arith.mulf %7, %14 : vector<32x32xf32>
    %c0_8 = arith.constant 0 : index
    %c0_9 = arith.constant 0 : index
    %16 = vector.load %arg4[%c0_8, %c0_9] : memref<32x32xf32, #tpu.memory_space<vmem>>, vector<32x32xf32>
    %17 = arith.negf %16 : vector<32x32xf32>
    %18 = math.exp %17 : vector<32x32xf32>
    %cst_10 = arith.constant 1.000000e+00 : f32
    %19 = vector.broadcast %cst_10 : f32 to vector<32x32xf32>
    %20 = arith.addf %19, %18 : vector<32x32xf32>
    %21 = arith.divf %19, %20 : vector<32x32xf32>
    %22 = arith.mulf %15, %21 : vector<32x32xf32>
    %c0_11 = arith.constant 0 : index
    %c0_12 = arith.constant 0 : index
    %23 = vector.load %arg5[%c0_11, %c0_12] : memref<32x32xf32, #tpu.memory_space<vmem>>, vector<32x32xf32>
    tpu.vector_store %arg5[%c0_11, %c0_12], %22 {strides = array<i32>} : memref<32x32xf32, #tpu.memory_space<vmem>>, vector<32x32xf32>,
    return
  }
  func.func @transform_0(%arg0: i32) -> (i32, i32) {
    %c0_i32 = arith.constant 0 : i32
    %c0_i32_0 = arith.constant 0 : i32
    return %arg0, %c0_i32 : i32, i32
  }
  func.func @transform_1(%arg0: i32) -> (i32, i32) {
    %c0_i32 = arith.constant 0 : i32
    %c0_i32_0 = arith.constant 0 : i32
    return %arg0, %c0_i32 : i32, i32
  }
  func.func @transform_2(%arg0: i32) -> (i32, i32, i32) {
    %c0_i32 = arith.constant 0 : i32
    %c0_i32_0 = arith.constant 0 : i32
    %c0_i32_1 = arith.constant 0 : i32
    return %arg0, %c0_i32, %c0_i32_0 : i32, i32, i32
  }
  func.func @transform_3(%arg0: i32) -> (i32, i32) {
    %c0_i32 = arith.constant 0 : i32
    %c0_i32_0 = arith.constant 0 : i32
    return %arg0, %c0_i32 : i32, i32
  }
  func.func @transform_4(%arg0: i32) -> (i32, i32) {
    %c0_i32 = arith.constant 0 : i32
    %c0_i32_0 = arith.constant 0 : i32
    return %arg0, %c0_i32 : i32, i32
  }
}

module attributes {stable_mosaic.version = 11 : i64} {
  func.func @_edge_kernel(%arg0: i32, %arg1: memref<24x8x32xf32, #tpu.memory_space<vmem>>, %arg2: memref<24x32xf32, #tpu.memory_space<vmem>>, %arg3: memref<24x8xf32, #tpu.memory_space<vmem>>, %arg4: memref<24x64xf32, #tpu.memory_space<vmem>>, %arg5: memref<32x32xf32, #tpu.memory_space<vmem>>, %arg6: memref<32x32xf32, #tpu.memory_space<vmem>>, %arg7: memref<64x32xf32, #tpu.memory_space<vmem>>, %arg8: memref<1x32xf32, #tpu.memory_space<vmem>>, %arg9: memref<32x32xf32, #tpu.memory_space<vmem>>, %arg10: memref<1x32xf32, #tpu.memory_space<vmem>>, %arg11: memref<24x32xf32, #tpu.memory_space<vmem>>) attributes {dimension_semantics = [#tpu.dimension_semantics<parallel>], iteration_bounds = array<i64: 1>, scalar_prefetch = 0 : i64, scratch_operands = 0 : i64, tpu.core_type = #tpu.core_type<tc>, window_params = [{transform_indices = @transform_0, window_bounds = array<i64: 24, 8, 32>}, {transform_indices = @transform_1, window_bounds = array<i64: 24, 32>}, {transform_indices = @transform_2, window_bounds = array<i64: 24, 8>}, {transform_indices = @transform_3, window_bounds = array<i64: 24, 64>}, {pipeline_mode = #tpu.pipeline_mode<synchronous>, transform_indices = @transform_4, window_bounds = array<i64: 32, 32>}, {pipeline_mode = #tpu.pipeline_mode<synchronous>, transform_indices = @transform_5, window_bounds = array<i64: 32, 32>}, {pipeline_mode = #tpu.pipeline_mode<synchronous>, transform_indices = @transform_6, window_bounds = array<i64: 64, 32>}, {pipeline_mode = #tpu.pipeline_mode<synchronous>, transform_indices = @transform_7, window_bounds = array<i64: 1, 32>}, {pipeline_mode = #tpu.pipeline_mode<synchronous>, transform_indices = @transform_8, window_bounds = array<i64: 32, 32>}, {pipeline_mode = #tpu.pipeline_mode<synchronous>, transform_indices = @transform_9, window_bounds = array<i64: 1, 32>}, {transform_indices = @transform_10, window_bounds = array<i64: 24, 32>}]} {
    %c0 = arith.constant 0 : index
    %c0_0 = arith.constant 0 : index
    %0 = vector.load %arg3[%c0, %c0_0] : memref<24x8xf32, #tpu.memory_space<vmem>>, vector<24x8xf32>
    %1 = vector.shape_cast %0 : vector<24x8xf32> to vector<24x8x1xf32>
    %c0_1 = arith.constant 0 : index
    %c0_2 = arith.constant 0 : index
    %c0_3 = arith.constant 0 : index
    %2 = vector.load %arg1[%c0_1, %c0_2, %c0_3] : memref<24x8x32xf32, #tpu.memory_space<vmem>>, vector<24x8x32xf32>
    %3 = vector.broadcast %1 : vector<24x8x1xf32> to vector<24x8x32xf32>
    %4 = arith.mulf %3, %2 : vector<24x8x32xf32>
    %cst = arith.constant dense<0.000000e+00> : vector<24x32xf32>
    %5 = vector.multi_reduction <add>, %4, %cst [1] : vector<24x8x32xf32> to vector<24x32xf32>
    %c0_4 = arith.constant 0 : index
    %c0_5 = arith.constant 0 : index
    %6 = vector.load %arg2[%c0_4, %c0_5] : memref<24x32xf32, #tpu.memory_space<vmem>>, vector<24x32xf32>
    %c0_6 = arith.constant 0 : index
    %c0_7 = arith.constant 0 : index
    %7 = vector.load %arg5[%c0_6, %c0_7] : memref<32x32xf32, #tpu.memory_space<vmem>>, vector<32x32xf32>
    %cst_8 = arith.constant dense<0.000000e+00> : vector<24x32xf32>
    %8 = tpu.matmul %6, %7, %cst_8 {dimension_numbers = #tpu.dot_dimension_numbers<[1], [0], [0], [1], [0, 0, 1, 1], [], []>} : vector<24x32xf32>, vector<32x32xf32>, vector<24x32xf32> -> vector<24x32xf32>
    %cst_9 = arith.constant 1.000000e+00 : f32
    %9 = vector.broadcast %cst_9 : f32 to vector<24x32xf32>
    %10 = arith.addf %9, %8 : vector<24x32xf32>
    %11 = arith.mulf %5, %10 : vector<24x32xf32>
    %12 = arith.mulf %11, %11 : vector<24x32xf32>
    %cst_10 = arith.constant dense<0.000000e+00> : vector<24xf32>
    %13 = vector.multi_reduction <add>, %12, %cst_10 [1] : vector<24x32xf32> to vector<24xf32>
    %14 = vector.shape_cast %13 : vector<24xf32> to vector<24x1xf32>
    %cst_11 = arith.constant 1.000000e-24 : f32
    %15 = vector.broadcast %cst_11 : f32 to vector<24x1xf32>
    %16 = arith.maximumf %14, %15 : vector<24x1xf32>
    %17 = math.rsqrt %16 : vector<24x1xf32>
    %18 = vector.broadcast %17 : vector<24x1xf32> to vector<24x32xf32>
    %19 = arith.mulf %11, %18 : vector<24x32xf32>
    %c0_12 = arith.constant 0 : index
    %c0_13 = arith.constant 0 : index
    %20 = vector.load %arg6[%c0_12, %c0_13] : memref<32x32xf32, #tpu.memory_space<vmem>>, vector<32x32xf32>
    %cst_14 = arith.constant dense<0.000000e+00> : vector<24x32xf32>
    %21 = tpu.matmul %19, %20, %cst_14 {dimension_numbers = #tpu.dot_dimension_numbers<[1], [0], [0], [1], [0, 0, 1, 1], [], []>} : vector<24x32xf32>, vector<32x32xf32>, vector<24x32xf32> -> vector<24x32xf32>
    %c0_15 = arith.constant 0 : index
    %c0_16 = arith.constant 0 : index
    %22 = vector.load %arg4[%c0_15, %c0_16] : memref<24x64xf32, #tpu.memory_space<vmem>>, vector<24x64xf32>
    %c0_17 = arith.constant 0 : index
    %c0_18 = arith.constant 0 : index
    %23 = vector.load %arg7[%c0_17, %c0_18] : memref<64x32xf32, #tpu.memory_space<vmem>>, vector<64x32xf32>
    %cst_19 = arith.constant dense<0.000000e+00> : vector<24x32xf32>
    %24 = tpu.matmul %22, %23, %cst_19 {dimension_numbers = #tpu.dot_dimension_numbers<[1], [0], [0], [1], [0, 0, 1, 1], [], []>} : vector<24x64xf32>, vector<64x32xf32>, vector<24x32xf32> -> vector<24x32xf32>
    %c0_20 = arith.constant 0 : index
    %c0_21 = arith.constant 0 : index
    %25 = vector.load %arg8[%c0_20, %c0_21] : memref<1x32xf32, #tpu.memory_space<vmem>>, vector<1x32xf32>
    %26 = vector.broadcast %25 : vector<1x32xf32> to vector<24x32xf32>
    %27 = arith.addf %24, %26 : vector<24x32xf32>
    %28 = arith.negf %27 : vector<24x32xf32>
    %29 = math.exp %28 : vector<24x32xf32>
    %cst_22 = arith.constant 1.000000e+00 : f32
    %30 = vector.broadcast %cst_22 : f32 to vector<24x32xf32>
    %31 = arith.addf %30, %29 : vector<24x32xf32>
    %32 = arith.divf %30, %31 : vector<24x32xf32>
    %33 = arith.mulf %27, %32 : vector<24x32xf32>
    %c0_23 = arith.constant 0 : index
    %c0_24 = arith.constant 0 : index
    %34 = vector.load %arg9[%c0_23, %c0_24] : memref<32x32xf32, #tpu.memory_space<vmem>>, vector<32x32xf32>
    %cst_25 = arith.constant dense<0.000000e+00> : vector<24x32xf32>
    %35 = tpu.matmul %33, %34, %cst_25 {dimension_numbers = #tpu.dot_dimension_numbers<[1], [0], [0], [1], [0, 0, 1, 1], [], []>} : vector<24x32xf32>, vector<32x32xf32>, vector<24x32xf32> -> vector<24x32xf32>
    %c0_26 = arith.constant 0 : index
    %c0_27 = arith.constant 0 : index
    %36 = vector.load %arg10[%c0_26, %c0_27] : memref<1x32xf32, #tpu.memory_space<vmem>>, vector<1x32xf32>
    %37 = vector.broadcast %36 : vector<1x32xf32> to vector<24x32xf32>
    %38 = arith.addf %35, %37 : vector<24x32xf32>
    %39 = arith.negf %38 : vector<24x32xf32>
    %40 = math.exp %39 : vector<24x32xf32>
    %cst_28 = arith.constant 1.000000e+00 : f32
    %41 = vector.broadcast %cst_28 : f32 to vector<24x32xf32>
    %42 = arith.addf %41, %40 : vector<24x32xf32>
    %43 = arith.divf %41, %42 : vector<24x32xf32>
    %44 = arith.mulf %38, %43 : vector<24x32xf32>
    %45 = arith.mulf %21, %44 : vector<24x32xf32>
    %c0_29 = arith.constant 0 : index
    %c0_30 = arith.constant 0 : index
    %46 = vector.load %arg11[%c0_29, %c0_30] : memref<24x32xf32, #tpu.memory_space<vmem>>, vector<24x32xf32>
    tpu.vector_store %arg11[%c0_29, %c0_30], %45 {strides = array<i32>} : memref<24x32xf32, #tpu.memory_space<vmem>>, vector<24x32xf32>,
    return
  }
  func.func @transform_0(%arg0: i32) -> (i32, i32, i32) {
    %c0_i32 = arith.constant 0 : i32
    %c0_i32_0 = arith.constant 0 : i32
    %c0_i32_1 = arith.constant 0 : i32
    return %arg0, %c0_i32, %c0_i32_0 : i32, i32, i32
  }
  func.func @transform_1(%arg0: i32) -> (i32, i32) {
    %c0_i32 = arith.constant 0 : i32
    %c0_i32_0 = arith.constant 0 : i32
    return %arg0, %c0_i32 : i32, i32
  }
  func.func @transform_2(%arg0: i32) -> (i32, i32) {
    %c0_i32 = arith.constant 0 : i32
    %c0_i32_0 = arith.constant 0 : i32
    return %arg0, %c0_i32 : i32, i32
  }
  func.func @transform_3(%arg0: i32) -> (i32, i32) {
    %c0_i32 = arith.constant 0 : i32
    %c0_i32_0 = arith.constant 0 : i32
    return %arg0, %c0_i32 : i32, i32
  }
  func.func @transform_4(%arg0: i32) -> (i32, i32) {
    %c0_i32 = arith.constant 0 : i32
    %c0_i32_0 = arith.constant 0 : i32
    %c0_i32_1 = arith.constant 0 : i32
    return %c0_i32, %c0_i32_0 : i32, i32
  }
  func.func @transform_5(%arg0: i32) -> (i32, i32) {
    %c0_i32 = arith.constant 0 : i32
    %c0_i32_0 = arith.constant 0 : i32
    %c0_i32_1 = arith.constant 0 : i32
    return %c0_i32, %c0_i32_0 : i32, i32
  }
  func.func @transform_6(%arg0: i32) -> (i32, i32) {
    %c0_i32 = arith.constant 0 : i32
    %c0_i32_0 = arith.constant 0 : i32
    %c0_i32_1 = arith.constant 0 : i32
    return %c0_i32, %c0_i32_0 : i32, i32
  }
  func.func @transform_7(%arg0: i32) -> (i32, i32) {
    %c0_i32 = arith.constant 0 : i32
    %c0_i32_0 = arith.constant 0 : i32
    %c0_i32_1 = arith.constant 0 : i32
    return %c0_i32, %c0_i32_0 : i32, i32
  }
  func.func @transform_8(%arg0: i32) -> (i32, i32) {
    %c0_i32 = arith.constant 0 : i32
    %c0_i32_0 = arith.constant 0 : i32
    %c0_i32_1 = arith.constant 0 : i32
    return %c0_i32, %c0_i32_0 : i32, i32
  }
  func.func @transform_9(%arg0: i32) -> (i32, i32) {
    %c0_i32 = arith.constant 0 : i32
    %c0_i32_0 = arith.constant 0 : i32
    %c0_i32_1 = arith.constant 0 : i32
    return %c0_i32, %c0_i32_0 : i32, i32
  }
  func.func @transform_10(%arg0: i32) -> (i32, i32) {
    %c0_i32 = arith.constant 0 : i32
    %c0_i32_0 = arith.constant 0 : i32
    return %arg0, %c0_i32 : i32, i32
  }
}

module attributes {stable_mosaic.version = 11 : i64} {
  func.func @_out_kernel(%arg0: i32, %arg1: memref<16x32xf32, #tpu.memory_space<vmem>>, %arg2: memref<16x32xf32, #tpu.memory_space<vmem>>, %arg3: memref<32x32xf32, #tpu.memory_space<vmem>>, %arg4: memref<16x32xf32, #tpu.memory_space<vmem>>) attributes {dimension_semantics = [#tpu.dimension_semantics<parallel>], iteration_bounds = array<i64: 1>, scalar_prefetch = 0 : i64, scratch_operands = 0 : i64, tpu.core_type = #tpu.core_type<tc>, window_params = [{transform_indices = @transform_0, window_bounds = array<i64: 16, 32>}, {transform_indices = @transform_1, window_bounds = array<i64: 16, 32>}, {pipeline_mode = #tpu.pipeline_mode<synchronous>, transform_indices = @transform_2, window_bounds = array<i64: 32, 32>}, {transform_indices = @transform_3, window_bounds = array<i64: 16, 32>}]} {
    %c0 = arith.constant 0 : index
    %c0_0 = arith.constant 0 : index
    %0 = vector.load %arg2[%c0, %c0_0] : memref<16x32xf32, #tpu.memory_space<vmem>>, vector<16x32xf32>
    %c0_1 = arith.constant 0 : index
    %c0_2 = arith.constant 0 : index
    %1 = vector.load %arg1[%c0_1, %c0_2] : memref<16x32xf32, #tpu.memory_space<vmem>>, vector<16x32xf32>
    %c0_3 = arith.constant 0 : index
    %c0_4 = arith.constant 0 : index
    %2 = vector.load %arg3[%c0_3, %c0_4] : memref<32x32xf32, #tpu.memory_space<vmem>>, vector<32x32xf32>
    %cst = arith.constant dense<0.000000e+00> : vector<16x32xf32>
    %3 = tpu.matmul %1, %2, %cst {dimension_numbers = #tpu.dot_dimension_numbers<[1], [0], [0], [1], [0, 0, 1, 1], [], []>} : vector<16x32xf32>, vector<32x32xf32>, vector<16x32xf32> -> vector<16x32xf32>
    %4 = arith.addf %0, %3 : vector<16x32xf32>
    %c0_5 = arith.constant 0 : index
    %c0_6 = arith.constant 0 : index
    %5 = vector.load %arg4[%c0_5, %c0_6] : memref<16x32xf32, #tpu.memory_space<vmem>>, vector<16x32xf32>
    tpu.vector_store %arg4[%c0_5, %c0_6], %4 {strides = array<i32>} : memref<16x32xf32, #tpu.memory_space<vmem>>, vector<16x32xf32>,
    return
  }
  func.func @transform_0(%arg0: i32) -> (i32, i32) {
    %c0_i32 = arith.constant 0 : i32
    %c0_i32_0 = arith.constant 0 : i32
    return %arg0, %c0_i32 : i32, i32
  }
  func.func @transform_1(%arg0: i32) -> (i32, i32) {
    %c0_i32 = arith.constant 0 : i32
    %c0_i32_0 = arith.constant 0 : i32
    return %arg0, %c0_i32 : i32, i32
  }
  func.func @transform_2(%arg0: i32) -> (i32, i32) {
    %c0_i32 = arith.constant 0 : i32
    %c0_i32_0 = arith.constant 0 : i32
    %c0_i32_1 = arith.constant 0 : i32
    return %c0_i32, %c0_i32_0 : i32, i32
  }
  func.func @transform_3(%arg0: i32) -> (i32, i32) {
    %c0_i32 = arith.constant 0 : i32
    %c0_i32_0 = arith.constant 0 : i32
    return %arg0, %c0_i32 : i32, i32
  }
}

</mosaic_0001>

<llo_original>
// kernel: lcao_interaction.5
$region0: #{lcao_interaction.5}
  #allocation0 [shape = 'u32[]', space=smem, size = 0x4, offset = 0x4, fixed_abs, tag = 'smem constant byte address 0x4 - core index']
  #allocation1 [shape = 'u32[144,128]{1,0:T(1,128)}', space=vmem, size = 0x12000, scoped, tag = 'internal scratch']
  %s0 = inlined_call_operand.vmem [shape: f32[16,32], index: 0, kind: input, shape index: {}]
  %s1 = inlined_call_operand.vmem [shape: f32[32,64], index: 1, kind: input, shape index: {}]
  %s2 = inlined_call_operand.vmem [shape: f32[1,64], index: 2, kind: input, shape index: {}]
  %s3 = inlined_call_operand.vmem [shape: f32[16,64], index: 3, kind: output, shape index: {}]
  %s4 = sld [smem:[#allocation0]]
  $region22: #{lcao_interaction.5} parent=0
    _
  %s6 = ssub.s32 1, %s4
  %s7 = scalar_select 0, %s6, %s4
  // Predicated region
  $region2: #{lcao_interaction.5} parent=0 // pred_check
    _
  $region3: #{lcao_interaction.5} parent=0 // pred_check_branch
    %9 = sbr.rel (0) target = $region5
  $region4: #{lcao_interaction.5} parent=0 // pred_region
    _
  $region5: #{lcao_interaction.5} parent=0 // pred_fallthru
    _
  // Predicated region
  $region6: #{lcao_interaction.5} parent=0 // pred_check
    _
  $region7: #{lcao_interaction.5} parent=0 // pred_check_branch
    %11 = sbr.rel (0) target = $region9
  $region8: #{lcao_interaction.5} parent=0 // pred_region
    _
  $region9: #{lcao_interaction.5} parent=0 // pred_fallthru
    _
  // Predicated region
  $region10: #{lcao_interaction.5} parent=0 // pred_check
    _
  $region11: #{lcao_interaction.5} parent=0 // pred_check_branch
    %13 = sbr.rel (0) target = $region13
  $region12: #{lcao_interaction.5} parent=0 // pred_region
    _
  $region13: #{lcao_interaction.5} parent=0 // pred_fallthru
    _
  %v14 = vld [vmem:[%s0] sm:$0xff]
  %v15 = vld [vmem:[%s0 + $0x8] sm:$0xff]
  %v16 = vld [vmem:[%s1] sm:$0xff]
  %v17 = vld [vmem:[%s1 + $0x8] sm:$0xff]
  %v18 = vld [vmem:[%s1 + $0x10] sm:$0xff]
  %v19 = vld [vmem:[%s1 + $0x18] sm:$0xff]
  %v20 = vld [vmem:[%s2] sm:$0x1]
  %v22 = vlaneseq
  %v23 = vshrl.u32 %v22, 7
  %v24 = vsub.s32 0, %v23
  %v25 = vrot.slane %v20, %v24
  %vm27 = vcmask 261120
  %v29 = vsel %vm27, %v14, 0
  %v32 = vsel %vm27, %v15, 0
  %34 = vmatprep.subr.mxu0 0.0
  %35 = vmatpush1.msra.mxu0 %v16
  %36 = vmatprep.subr.mxu0 0.0
  %37 = vmatpush1.msra.mxu0 %v17
  %38 = vmatprep.subr.mxu0 0.0
  %39 = vmatpush1.msra.mxu0 %v18
  %40 = vmatprep.subr.mxu0 0.0
  %41 = vmatpush1.msra.mxu0 %v19
  %42 = vmatprep.subr.mxu0 0.0
  %43 = vmatpush1.msra.mxu0 0.0
  %44 = vmatprep.subr.mxu0 0.0
  %45 = vmatpush1.msra.mxu0 0.0
  %46 = vmatprep.subr.mxu0 0.0
  %47 = vmatpush1.msra.mxu0 0.0
  %48 = vmatprep.subr.mxu0 0.0
  %49 = vmatpush1.msra.mxu0 0.0
  %50 = vmatprep.subr.mxu0 0.0
  %51 = vmatpush1.msra.mxu0 0.0
  %52 = vmatprep.subr.mxu0 0.0
  %53 = vmatpush1.msra.mxu0 0.0
  %54 = vmatprep.subr.mxu0 0.0
  %55 = vmatpush1.msra.mxu0 0.0
  %56 = vmatprep.subr.mxu0 0.0
  %57 = vmatpush1.msra.mxu0 0.0
  %58 = vmatprep.subr.mxu0 0.0
  %59 = vmatpush1.msra.mxu0 0.0
  %60 = vmatprep.subr.mxu0 0.0
  %61 = vmatpush1.msra.mxu0 0.0
  %62 = vmatprep.subr.mxu0 0.0
  %63 = vmatpush1.msra.mxu0 0.0
  %64 = vmatprep.subr.mxu0 0.0
  %65 = vmatpush1.msra.mxu0 0.0
  %66 = vmatprep.subr.mxu0 0.0
  %67 = vmatpush1.msra.mxu0 0.0
  %68 = vmatprep.subr.mxu0 0.0
  %69 = vmatpush1.msra.mxu0 0.0
  %70 = vmatprep.subr.mxu0 0.0
  %71 = vmatpush1.msra.mxu0 0.0
  %72 = vmatprep.subr.mxu0 0.0
  %73 = vmatpush1.msra.mxu0 0.0
  %74 = vmatprep.subr.mxu0 0.0
  %75 = vmatpush1.msra.mxu0 0.0
  %76 = vmatprep.subr.mxu0 0.0
  %77 = vmatpush1.msra.mxu0 0.0
  %78 = vmatprep.subr.mxu0 0.0
  %79 = vmatpush1.msra.mxu0 0.0
  %80 = vmatprep.subr.mxu0 0.0
  %81 = vmatpush1.msra.mxu0 0.0
  %82 = vmatprep.subr.mxu0 0.0
  %83 = vmatpush1.msra.mxu0 0.0
  %84 = vmatprep.subr.mxu0 0.0
  %85 = vmatpush1.msra.mxu0 0.0
  %86 = vmatprep.subr.mxu0 0.0
  %87 = vmatpush1.msra.mxu0 0.0
  %88 = vmatprep.subr.mxu0 0.0
  %89 = vmatpush1.msra.mxu0 0.0
  %90 = vmatprep.subr.mxu0 0.0
  %91 = vmatpush1.msra.mxu0 0.0
  %92 = vmatprep.subr.mxu0 0.0
  %93 = vmatpush1.msra.mxu0 0.0
  %94 = vmatprep.subr.mxu0 0.0
  %95 = vmatpush1.msra.mxu0 0.0
  %96 = vmatprep.subr.mxu0 0.0
  %97 = vmatpush1.msra.mxu0 0.0
  %98 = vmatprep.mubr.f32.mxu0 0.0
  %99 = vmatmul.mubr.f32.gmra.mrb[0].mxu0 %v29
  %v100 = vpop.f32.mrb[0].mxu0
  %v101 = vadd.f32 %v25, %v100
  %v102 = vpop.f32.mrb[0].mxu0
  %103 = vmatprep.mubr.f32.mxu0 0.0
  %104 = vmatmul.mubr.f32.gmra.mrb[0].mxu0 %v32
  %v105 = vpop.f32.mrb[0].mxu0
  %v106 = vadd.f32 %v25, %v105
  %v107 = vpop.f32.mrb[0].mxu0
  %108 = vdwg.mxu0
  %vm109 = vcmask 523264
  %110 = vst.msk [vmem:[%s3] sm:$0xff] %vm109, %v101
  %111 = vst.msk [vmem:[%s3 + $0x8] sm:$0xff] %vm109, %v106
  // Predicated region
  $region14: #{lcao_interaction.5} parent=0 // pred_check
    _
  $region15: #{lcao_interaction.5} parent=0 // pred_check_branch
    %113 = sbr.rel (0) target = $region17
  $region16: #{lcao_interaction.5} parent=0 // pred_region
    _
  $region17: #{lcao_interaction.5} parent=0 // pred_fallthru
    _
  // Predicated region
  $region18: #{lcao_interaction.5} parent=0 // pred_check
    _
  $region19: #{lcao_interaction.5} parent=0 // pred_check_branch
    %115 = sbr.rel (0) target = $region21
  $region20: #{lcao_interaction.5} parent=0 // pred_region
    _
  $region21: #{lcao_interaction.5} parent=0 // pred_fallthru
    _

// kernel: lcao_interaction.6
$region0: #{lcao_interaction.6}
  #allocation0 [shape = 'u32[]', space=smem, size = 0x4, offset = 0x4, fixed_abs, tag = 'smem constant byte address 0x4 - core index']
  #allocation1 [shape = 'u32[144,128]{1,0:T(1,128)}', space=vmem, size = 0x12000, scoped, tag = 'internal scratch']
  %s0 = inlined_call_operand.vmem [shape: f32[176,16], index: 0, kind: input, shape index: {}]
  %s1 = inlined_call_operand.vmem [shape: f32[16,32], index: 1, kind: input, shape index: {}]
  %s2 = inlined_call_operand.vmem [shape: f32[32,32], index: 2, kind: input, shape index: {}]
  %s3 = inlined_call_operand.vmem [shape: f32[176,32], index: 3, kind: output, shape index: {}]
  %s4 = sld [smem:[#allocation0]]
  $region22: #{lcao_interaction.6} parent=0
    _
  %s6 = ssub.s32 1, %s4
  %s7 = scalar_select 0, %s6, %s4
  // Predicated region
  $region2: #{lcao_interaction.6} parent=0 // pred_check
    _
  $region3: #{lcao_interaction.6} parent=0 // pred_check_branch
    %9 = sbr.rel (0) target = $region5
  $region4: #{lcao_interaction.6} parent=0 // pred_region
    _
  $region5: #{lcao_interaction.6} parent=0 // pred_fallthru
    _
  // Predicated region
  $region6: #{lcao_interaction.6} parent=0 // pred_check
    _
  $region7: #{lcao_interaction.6} parent=0 // pred_check_branch
    %11 = sbr.rel (0) target = $region9
  $region8: #{lcao_interaction.6} parent=0 // pred_region
    _
  $region9: #{lcao_interaction.6} parent=0 // pred_fallthru
    _
  // Predicated region
  $region10: #{lcao_interaction.6} parent=0 // pred_check
    _
  $region11: #{lcao_interaction.6} parent=0 // pred_check_branch
    %13 = sbr.rel (0) target = $region13
  $region12: #{lcao_interaction.6} parent=0 // pred_region
    _
  $region13: #{lcao_interaction.6} parent=0 // pred_fallthru
    _
  %v14 = vld [vmem:[%s0] sm:$0xff]
  %v15 = vld [vmem:[%s0 + $0x8] sm:$0xff]
  %v16 = vld [vmem:[%s0 + $0x10] sm:$0xff]
  %v17 = vld [vmem:[%s0 + $0x18] sm:$0xff]
  %v18 = vld [vmem:[%s0 + $0x20] sm:$0xff]
  %v19 = vld [vmem:[%s0 + $0x28] sm:$0xff]
  %v20 = vld [vmem:[%s0 + $0x30] sm:$0xff]
  %v21 = vld [vmem:[%s0 + $0x38] sm:$0xff]
  %v22 = vld [vmem:[%s0 + $0x40] sm:$0xff]
  %v23 = vld [vmem:[%s0 + $0x48] sm:$0xff]
  %v24 = vld [vmem:[%s0 + $0x50] sm:$0xff]
  %v25 = vld [vmem:[%s0 + $0x58] sm:$0xff]
  %v26 = vld [vmem:[%s0 + $0x60] sm:$0xff]
  %v27 = vld [vmem:[%s0 + $0x68] sm:$0xff]
  %v28 = vld [vmem:[%s0 + $0x70] sm:$0xff]
  %v29 = vld [vmem:[%s0 + $0x78] sm:$0xff]
  %v30 = vld [vmem:[%s0 + $0x80] sm:$0xff]
  %v31 = vld [vmem:[%s0 + $0x88] sm:$0xff]
  %v32 = vld [vmem:[%s0 + $0x90] sm:$0xff]
  %v33 = vld [vmem:[%s0 + $0x98] sm:$0xff]
  %v34 = vld [vmem:[%s0 + $0xa0] sm:$0xff]
  %v35 = vld [vmem:[%s0 + $0xa8] sm:$0xff]
  %v36 = vld [vmem:[%s1] sm:$0xff]
  %v37 = vld [vmem:[%s1 + $0x8] sm:$0xff]
  %vm38 = vcmask 130048
  %v40 = vsel %vm38, %v14, 0
  %v43 = vsel %vm38, %v15, 0
  %v46 = vsel %vm38, %v16, 0
  %v49 = vsel %vm38, %v17, 0
  %v52 = vsel %vm38, %v18, 0
  %v55 = vsel %vm38, %v19, 0
  %v58 = vsel %vm38, %v20, 0
  %v61 = vsel %vm38, %v21, 0
  %v64 = vsel %vm38, %v22, 0
  %v67 = vsel %vm38, %v23, 0
  %v70 = vsel %vm38, %v24, 0
  %v73 = vsel %vm38, %v25, 0
  %v76 = vsel %vm38, %v26, 0
  %v79 = vsel %vm38, %v27, 0
  %v82 = vsel %vm38, %v28, 0
  %v85 = vsel %vm38, %v29, 0
  %v88 = vsel %vm38, %v30, 0
  %v91 = vsel %vm38, %v31, 0
  %v94 = vsel %vm38, %v32, 0
  %v97 = vsel %vm38, %v33, 0
  %v100 = vsel %vm38, %v34, 0
  %v103 = vsel %vm38, %v35, 0
  %105 = vmatprep.subr.mxu0 0.0
  %106 = vmatpush1.msra.mxu0 %v36
  %107 = vmatprep.subr.mxu0 0.0
  %108 = vmatpush1.msra.mxu0 %v37
  %109 = vmatprep.subr.mxu0 0.0
  %110 = vmatpush1.msra.mxu0 0.0
  %111 = vmatprep.subr.mxu0 0.0
  %112 = vmatpush1.msra.mxu0 0.0
  %113 = vmatprep.subr.mxu0 0.0
  %114 = vmatpush1.msra.mxu0 0.0
  %115 = vmatprep.subr.mxu0 0.0
  %116 = vmatpush1.msra.mxu0 0.0
  %117 = vmatprep.subr.mxu0 0.0
  %118 = vmatpush1.msra.mxu0 0.0
  %119 = vmatprep.subr.mxu0 0.0
  %120 = vmatpush1.msra.mxu0 0.0
  %121 = vmatprep.subr.mxu0 0.0
  %122 = vmatpush1.msra.mxu0 0.0
  %123 = vmatprep.subr.mxu0 0.0
  %124 = vmatpush1.msra.mxu0 0.0
  %125 = vmatprep.subr.mxu0 0.0
  %126 = vmatpush1.msra.mxu0 0.0
  %127 = vmatprep.subr.mxu0 0.0
  %128 = vmatpush1.msra.mxu0 0.0
  %129 = vmatprep.subr.mxu0 0.0
  %130 = vmatpush1.msra.mxu0 0.0
  %131 = vmatprep.subr.mxu0 0.0
  %132 = vmatpush1.msra.mxu0 0.0
  %133 = vmatprep.subr.mxu0 0.0
  %134 = vmatpush1.msra.mxu0 0.0
  %135 = vmatprep.subr.mxu0 0.0
  %136 = vmatpush1.msra.mxu0 0.0
  %137 = vmatprep.subr.mxu0 0.0
  %138 = vmatpush1.msra.mxu0 0.0
  %139 = vmatprep.subr.mxu0 0.0
  %140 = vmatpush1.msra.mxu0 0.0
  %141 = vmatprep.subr.mxu0 0.0
  %142 = vmatpush1.msra.mxu0 0.0
  %143 = vmatprep.subr.mxu0 0.0
  %144 = vmatpush1.msra.mxu0 0.0
  %145 = vmatprep.subr.mxu0 0.0
  %146 = vmatpush1.msra.mxu0 0.0
  %147 = vmatprep.subr.mxu0 0.0
  %148 = vmatpush1.msra.mxu0 0.0
  %149 = vmatprep.subr.mxu0 0.0
  %150 = vmatpush1.msra.mxu0 0.0
  %151 = vmatprep.subr.mxu0 0.0
  %152 = vmatpush1.msra.mxu0 0.0
  %153 = vmatprep.subr.mxu0 0.0
  %154 = vmatpush1.msra.mxu0 0.0
  %155 = vmatprep.subr.mxu0 0.0
  %156 = vmatpush1.msra.mxu0 0.0
  %157 = vmatprep.subr.mxu0 0.0
  %158 = vmatpush1.msra.mxu0 0.0
  %159 = vmatprep.subr.mxu0 0.0
  %160 = vmatpush1.msra.mxu0 0.0
  %161 = vmatprep.subr.mxu0 0.0
  %162 = vmatpush1.msra.mxu0 0.0
  %163 = vmatprep.subr.mxu0 0.0
  %164 = vmatpush1.msra.mxu0 0.0
  %165 = vmatprep.subr.mxu0 0.0
  %166 = vmatpush1.msra.mxu0 0.0
  %167 = vmatprep.subr.mxu0 0.0
  %168 = vmatpush1.msra.mxu0 0.0
  %169 = vmatprep.mubr.f32.mxu0 0.0
  %170 = vmatmul.mubr.f32.gmra.mrb[0].mxu0 %v40
  %v171 = vpop.f32.mrb[0].mxu0
  %v172 = vadd.f32 0.0, %v171
  %v173 = vpop.f32.mrb[0].mxu0
  %174 = vmatprep.mubr.f32.mxu0 0.0
  %175 = vmatmul.mubr.f32.gmra.mrb[0].mxu0 %v43
  %v176 = vpop.f32.mrb[0].mxu0
  %v177 = vadd.f32 0.0, %v176
  %v178 = vpop.f32.mrb[0].mxu0
  %179 = vmatprep.mubr.f32.mxu0 0.0
  %180 = vmatmul.mubr.f32.gmra.mrb[0].mxu0 %v46
  %v181 = vpop.f32.mrb[0].mxu0
  %v182 = vadd.f32 0.0, %v181
  %v183 = vpop.f32.mrb[0].mxu0
  %184 = vmatprep.mubr.f32.mxu0 0.0
  %185 = vmatmul.mubr.f32.gmra.mrb[0].mxu0 %v49
  %v186 = vpop.f32.mrb[0].mxu0
  %v187 = vadd.f32 0.0, %v186
  %v188 = vpop.f32.mrb[0].mxu0
  %189 = vmatprep.mubr.f32.mxu0 0.0
  %190 = vmatmul.mubr.f32.gmra.mrb[0].mxu0 %v52
  %v191 = vpop.f32.mrb[0].mxu0
  %v192 = vadd.f32 0.0, %v191
  %v193 = vpop.f32.mrb[0].mxu0
  %194 = vmatprep.mubr.f32.mxu0 0.0
  %195 = vmatmul.mubr.f32.gmra.mrb[0].mxu0 %v55
  %v196 = vpop.f32.mrb[0].mxu0
  %v197 = vadd.f32 0.0, %v196
  %v198 = vpop.f32.mrb[0].mxu0
  %199 = vmatprep.mubr.f32.mxu0 0.0
  %200 = vmatmul.mubr.f32.gmra.mrb[0].mxu0 %v58
  %v201 = vpop.f32.mrb[0].mxu0
  %v202 = vadd.f32 0.0, %v201
  %v203 = vpop.f32.mrb[0].mxu0
  %204 = vmatprep.mubr.f32.mxu0 0.0
  %205 = vmatmul.mubr.f32.gmra.mrb[0].mxu0 %v61
  %v206 = vpop.f32.mrb[0].mxu0
  %v207 = vadd.f32 0.0, %v206
  %v208 = vpop.f32.mrb[0].mxu0
  %209 = vmatprep.mubr.f32.mxu0 0.0
  %210 = vmatmul.mubr.f32.gmra.mrb[0].mxu0 %v64
  %v211 = vpop.f32.mrb[0].mxu0
  %v212 = vadd.f32 0.0, %v211
  %v213 = vpop.f32.mrb[0].mxu0
  %214 = vmatprep.mubr.f32.mxu0 0.0
  %215 = vmatmul.mubr.f32.gmra.mrb[0].mxu0 %v67
  %v216 = vpop.f32.mrb[0].mxu0
  %v217 = vadd.f32 0.0, %v216
  %v218 = vpop.f32.mrb[0].mxu0
  %219 = vmatprep.mubr.f32.mxu0 0.0
  %220 = vmatmul.mubr.f32.gmra.mrb[0].mxu0 %v70
  %v221 = vpop.f32.mrb[0].mxu0
  %v222 = vadd.f32 0.0, %v221
  %v223 = vpop.f32.mrb[0].mxu0
  %224 = vmatprep.mubr.f32.mxu0 0.0
  %225 = vmatmul.mubr.f32.gmra.mrb[0].mxu0 %v73
  %v226 = vpop.f32.mrb[0].mxu0
  %v227 = vadd.f32 0.0, %v226
  %v228 = vpop.f32.mrb[0].mxu0
  %229 = vmatprep.mubr.f32.mxu0 0.0
  %230 = vmatmul.mubr.f32.gmra.mrb[0].mxu0 %v76
  %v231 = vpop.f32.mrb[0].mxu0
  %v232 = vadd.f32 0.0, %v231
  %v233 = vpop.f32.mrb[0].mxu0
  %234 = vmatprep.mubr.f32.mxu0 0.0
  %235 = vmatmul.mubr.f32.gmra.mrb[0].mxu0 %v79
  %v236 = vpop.f32.mrb[0].mxu0
  %v237 = vadd.f32 0.0, %v236
  %v238 = vpop.f32.mrb[0].mxu0
  %239 = vmatprep.mubr.f32.mxu0 0.0
  %240 = vmatmul.mubr.f32.gmra.mrb[0].mxu0 %v82
  %v241 = vpop.f32.mrb[0].mxu0
  %v242 = vadd.f32 0.0, %v241
  %v243 = vpop.f32.mrb[0].mxu0
  %244 = vmatprep.mubr.f32.mxu0 0.0
  %245 = vmatmul.mubr.f32.gmra.mrb[0].mxu0 %v85
  %v246 = vpop.f32.mrb[0].mxu0
  %v247 = vadd.f32 0.0, %v246
  %v248 = vpop.f32.mrb[0].mxu0
  %249 = vmatprep.mubr.f32.mxu0 0.0
  %250 = vmatmul.mubr.f32.gmra.mrb[0].mxu0 %v88
  %v251 = vpop.f32.mrb[0].mxu0
  %v252 = vadd.f32 0.0, %v251
  %v253 = vpop.f32.mrb[0].mxu0
  %254 = vmatprep.mubr.f32.mxu0 0.0
  %255 = vmatmul.mubr.f32.gmra.mrb[0].mxu0 %v91
  %v256 = vpop.f32.mrb[0].mxu0
  %v257 = vadd.f32 0.0, %v256
  %v258 = vpop.f32.mrb[0].mxu0
  %259 = vmatprep.mubr.f32.mxu0 0.0
  %260 = vmatmul.mubr.f32.gmra.mrb[0].mxu0 %v94
  %v261 = vpop.f32.mrb[0].mxu0
  %v262 = vadd.f32 0.0, %v261
  %v263 = vpop.f32.mrb[0].mxu0
  %264 = vmatprep.mubr.f32.mxu0 0.0
  %265 = vmatmul.mubr.f32.gmra.mrb[0].mxu0 %v97
  %v266 = vpop.f32.mrb[0].mxu0
  %v267 = vadd.f32 0.0, %v266
  %v268 = vpop.f32.mrb[0].mxu0
  %269 = vmatprep.mubr.f32.mxu0 0.0
  %270 = vmatmul.mubr.f32.gmra.mrb[0].mxu0 %v100
  %v271 = vpop.f32.mrb[0].mxu0
  %v272 = vadd.f32 0.0, %v271
  %v273 = vpop.f32.mrb[0].mxu0
  %274 = vmatprep.mubr.f32.mxu0 0.0
  %275 = vmatmul.mubr.f32.gmra.mrb[0].mxu0 %v103
  %v276 = vpop.f32.mrb[0].mxu0
  %v277 = vadd.f32 0.0, %v276
  %v278 = vpop.f32.mrb[0].mxu0
  %279 = vdwg.mxu0
  %v280 = vxor.u32 %v172, 2147483648
  %v281 = vxor.u32 %v177, 2147483648
  %v282 = vxor.u32 %v182, 2147483648
  %v283 = vxor.u32 %v187, 2147483648
  %v284 = vxor.u32 %v192, 2147483648
  %v285 = vxor.u32 %v197, 2147483648
  %v286 = vxor.u32 %v202, 2147483648
  %v287 = vxor.u32 %v207, 2147483648
  %v288 = vxor.u32 %v212, 2147483648
  %v289 = vxor.u32 %v217, 2147483648
  %v290 = vxor.u32 %v222, 2147483648
  %v291 = vxor.u32 %v227, 2147483648
  %v292 = vxor.u32 %v232, 2147483648
  %v293 = vxor.u32 %v237, 2147483648
  %v294 = vxor.u32 %v242, 2147483648
  %v295 = vxor.u32 %v247, 2147483648
  %v296 = vxor.u32 %v252, 2147483648
  %v297 = vxor.u32 %v257, 2147483648
  %v298 = vxor.u32 %v262, 2147483648
  %v299 = vxor.u32 %v267, 2147483648
  %v300 = vxor.u32 %v272, 2147483648
  %v301 = vxor.u32 %v277, 2147483648
  %v302 = vmul.f32 %v280, 1.442695
  %v303 = vpow.pop %v302
  %v304 = vmul.f32 %v281, 1.442695
  %v305 = vpow.pop %v304
  %v306 = vmul.f32 %v282, 1.442695
  %v307 = vpow.pop %v306
  %v308 = vmul.f32 %v283, 1.442695
  %v309 = vpow.pop %v308
  %v310 = vmul.f32 %v284, 1.442695
  %v311 = vpow.pop %v310
  %v312 = vmul.f32 %v285, 1.442695
  %v313 = vpow.pop %v312
  %v314 = vmul.f32 %v286, 1.442695
  %v315 = vpow.pop %v314
  %v316 = vmul.f32 %v287, 1.442695
  %v317 = vpow.pop %v316
  %v318 = vmul.f32 %v288, 1.442695
  %v319 = vpow.pop %v318
  %v320 = vmul.f32 %v289, 1.442695
  %v321 = vpow.pop %v320
  %v322 = vmul.f32 %v290, 1.442695
  %v323 = vpow.pop %v322
  %v324 = vmul.f32 %v291, 1.442695
  %v325 = vpow.pop %v324
  %v326 = vmul.f32 %v292, 1.442695
  %v327 = vpow.pop %v326
  %v328 = vmul.f32 %v293, 1.442695
  %v329 = vpow.pop %v328
  %v330 = vmul.f32 %v294, 1.442695
  %v331 = vpow.pop %v330
  %v332 = vmul.f32 %v295, 1.442695
  %v333 = vpow.pop %v332
  %v334 = vmul.f32 %v296, 1.442695
  %v335 = vpow.pop %v334
  %v336 = vmul.f32 %v297, 1.442695
  %v337 = vpow.pop %v336
  %v338 = vmul.f32 %v298, 1.442695
  %v339 = vpow.pop %v338
  %v340 = vmul.f32 %v299, 1.442695
  %v341 = vpow.pop %v340
  %v342 = vmul.f32 %v300, 1.442695
  %v343 = vpow.pop %v342
  %v344 = vmul.f32 %v301, 1.442695
  %v345 = vpow.pop %v344
  %v346 = vadd.f32 %v303, 1.0
  %v347 = vadd.f32 %v305, 1.0
  %v348 = vadd.f32 %v307, 1.0
  %v349 = vadd.f32 %v309, 1.0
  %v350 = vadd.f32 %v311, 1.0
  %v351 = vadd.f32 %v313, 1.0
  %v352 = vadd.f32 %v315, 1.0
  %v353 = vadd.f32 %v317, 1.0
  %v354 = vadd.f32 %v319, 1.0
  %v355 = vadd.f32 %v321, 1.0
  %v356 = vadd.f32 %v323, 1.0
  %v357 = vadd.f32 %v325, 1.0
  %v358 = vadd.f32 %v327, 1.0
  %v359 = vadd.f32 %v329, 1.0
  %v360 = vadd.f32 %v331, 1.0
  %v361 = vadd.f32 %v333, 1.0
  %v362 = vadd.f32 %v335, 1.0
  %v363 = vadd.f32 %v337, 1.0
  %v364 = vadd.f32 %v339, 1.0
  %v365 = vadd.f32 %v341, 1.0
  %v366 = vadd.f32 %v343, 1.0
  %v367 = vadd.f32 %v345, 1.0
  %v368 = vrcp.pop %v346
  %v369 = vmul.f32 1.0, %v368
  %v370 = vrcp.pop %v347
  %v371 = vmul.f32 1.0, %v370
  %v372 = vrcp.pop %v348
  %v373 = vmul.f32 1.0, %v372
  %v374 = vrcp.pop %v349
  %v375 = vmul.f32 1.0, %v374
  %v376 = vrcp.pop %v350
  %v377 = vmul.f32 1.0, %v376
  %v378 = vrcp.pop %v351
  %v379 = vmul.f32 1.0, %v378
  %v380 = vrcp.pop %v352
  %v381 = vmul.f32 1.0, %v380
  %v382 = vrcp.pop %v353
  %v383 = vmul.f32 1.0, %v382
  %v384 = vrcp.pop %v354
  %v385 = vmul.f32 1.0, %v384
  %v386 = vrcp.pop %v355
  %v387 = vmul.f32 1.0, %v386
  %v388 = vrcp.pop %v356
  %v389 = vmul.f32 1.0, %v388
  %v390 = vrcp.pop %v357
  %v391 = vmul.f32 1.0, %v390
  %v392 = vrcp.pop %v358
  %v393 = vmul.f32 1.0, %v392
  %v394 = vrcp.pop %v359
  %v395 = vmul.f32 1.0, %v394
  %v396 = vrcp.pop %v360
  %v397 = vmul.f32 1.0, %v396
  %v398 = vrcp.pop %v361
  %v399 = vmul.f32 1.0, %v398
  %v400 = vrcp.pop %v362
  %v401 = vmul.f32 1.0, %v400
  %v402 = vrcp.pop %v363
  %v403 = vmul.f32 1.0, %v402
  %v404 = vrcp.pop %v364
  %v405 = vmul.f32 1.0, %v404
  %v406 = vrcp.pop %v365
  %v407 = vmul.f32 1.0, %v406
  %v408 = vrcp.pop %v366
  %v409 = vmul.f32 1.0, %v408
  %v410 = vrcp.pop %v367
  %v411 = vmul.f32 1.0, %v410
  %v412 = vmul.f32 %v172, %v369
  %v413 = vmul.f32 %v177, %v371
  %v414 = vmul.f32 %v182, %v373
  %v415 = vmul.f32 %v187, %v375
  %v416 = vmul.f32 %v192, %v377
  %v417 = vmul.f32 %v197, %v379
  %v418 = vmul.f32 %v202, %v381
  %v419 = vmul.f32 %v207, %v383
  %v420 = vmul.f32 %v212, %v385
  %v421 = vmul.f32 %v217, %v387
  %v422 = vmul.f32 %v222, %v389
  %v423 = vmul.f32 %v227, %v391
  %v424 = vmul.f32 %v232, %v393
  %v425 = vmul.f32 %v237, %v395
  %v426 = vmul.f32 %v242, %v397
  %v427 = vmul.f32 %v247, %v399
  %v428 = vmul.f32 %v252, %v401
  %v429 = vmul.f32 %v257, %v403
  %v430 = vmul.f32 %v262, %v405
  %v431 = vmul.f32 %v267, %v407
  %v432 = vmul.f32 %v272, %v409
  %v433 = vmul.f32 %v277, %v411
  %v434 = vld [vmem:[%s2] sm:$0xff]
  %v435 = vld [vmem:[%s2 + $0x8] sm:$0xff]
  %v436 = vld [vmem:[%s2 + $0x10] sm:$0xff]
  %v437 = vld [vmem:[%s2 + $0x18] sm:$0xff]
  %vm438 = vcmask 261120
  %v440 = vsel %vm438, %v412, 0
  %v443 = vsel %vm438, %v413, 0
  %v446 = vsel %vm438, %v414, 0
  %v449 = vsel %vm438, %v415, 0
  %v452 = vsel %vm438, %v416, 0
  %v455 = vsel %vm438, %v417, 0
  %v458 = vsel %vm438, %v418, 0
  %v461 = vsel %vm438, %v419, 0
  %v464 = vsel %vm438, %v420, 0
  %v467 = vsel %vm438, %v421, 0
  %v470 = vsel %vm438, %v422, 0
  %v473 = vsel %vm438, %v423, 0
  %v476 = vsel %vm438, %v424, 0
  %v479 = vsel %vm438, %v425, 0
  %v482 = vsel %vm438, %v426, 0
  %v485 = vsel %vm438, %v427, 0
  %v488 = vsel %vm438, %v428, 0
  %v491 = vsel %vm438, %v429, 0
  %v494 = vsel %vm438, %v430, 0
  %v497 = vsel %vm438, %v431, 0
  %v500 = vsel %vm438, %v432, 0
  %v503 = vsel %vm438, %v433, 0
  %505 = vmatprep.subr.mxu0 0.0
  %506 = vmatpush1.msra.mxu0 %v434
  %507 = vmatprep.subr.mxu0 0.0
  %508 = vmatpush1.msra.mxu0 %v435
  %509 = vmatprep.subr.mxu0 0.0
  %510 = vmatpush1.msra.mxu0 %v436
  %511 = vmatprep.subr.mxu0 0.0
  %512 = vmatpush1.msra.mxu0 %v437
  %513 = vmatprep.subr.mxu0 0.0
  %514 = vmatpush1.msra.mxu0 0.0
  %515 = vmatprep.subr.mxu0 0.0
  %516 = vmatpush1.msra.mxu0 0.0
  %517 = vmatprep.subr.mxu0 0.0
  %518 = vmatpush1.msra.mxu0 0.0
  %519 = vmatprep.subr.mxu0 0.0
  %520 = vmatpush1.msra.mxu0 0.0
  %521 = vmatprep.subr.mxu0 0.0
  %522 = vmatpush1.msra.mxu0 0.0
  %523 = vmatprep.subr.mxu0 0.0
  %524 = vmatpush1.msra.mxu0 0.0
  %525 = vmatprep.subr.mxu0 0.0
  %526 = vmatpush1.msra.mxu0 0.0
  %527 = vmatprep.subr.mxu0 0.0
  %528 = vmatpush1.msra.mxu0 0.0
  %529 = vmatprep.subr.mxu0 0.0
  %530 = vmatpush1.msra.mxu0 0.0
  %531 = vmatprep.subr.mxu0 0.0
  %532 = vmatpush1.msra.mxu0 0.0
  %533 = vmatprep.subr.mxu0 0.0
  %534 = vmatpush1.msra.mxu0 0.0
  %535 = vmatprep.subr.mxu0 0.0
  %536 = vmatpush1.msra.mxu0 0.0
  %537 = vmatprep.subr.mxu0 0.0
  %538 = vmatpush1.msra.mxu0 0.0
  %539 = vmatprep.subr.mxu0 0.0
  %540 = vmatpush1.msra.mxu0 0.0
  %541 = vmatprep.subr.mxu0 0.0
  %542 = vmatpush1.msra.mxu0 0.0
  %543 = vmatprep.subr.mxu0 0.0
  %544 = vmatpush1.msra.mxu0 0.0
  %545 = vmatprep.subr.mxu0 0.0
  %546 = vmatpush1.msra.mxu0 0.0
  %547 = vmatprep.subr.mxu0 0.0
  %548 = vmatpush1.msra.mxu0 0.0
  %549 = vmatprep.subr.mxu0 0.0
  %550 = vmatpush1.msra.mxu0 0.0
  %551 = vmatprep.subr.mxu0 0.0
  %552 = vmatpush1.msra.mxu0 0.0
  %553 = vmatprep.subr.mxu0 0.0
  %554 = vmatpush1.msra.mxu0 0.0
  %555 = vmatprep.subr.mxu0 0.0
  %556 = vmatpush1.msra.mxu0 0.0
  %557 = vmatprep.subr.mxu0 0.0
  %558 = vmatpush1.msra.mxu0 0.0
  %559 = vmatprep.subr.mxu0 0.0
  %560 = vmatpush1.msra.mxu0 0.0
  %561 = vmatprep.subr.mxu0 0.0
  %562 = vmatpush1.msra.mxu0 0.0
  %563 = vmatprep.subr.mxu0 0.0
  %564 = vmatpush1.msra.mxu0 0.0
  %565 = vmatprep.subr.mxu0 0.0
  %566 = vmatpush1.msra.mxu0 0.0
  %567 = vmatprep.subr.mxu0 0.0
  %568 = vmatpush1.msra.mxu0 0.0
  %569 = vmatprep.mubr.f32.mxu0 0.0
  %570 = vmatmul.mubr.f32.gmra.mrb[0].mxu0 %v440
  %v571 = vpop.f32.mrb[0].mxu0
  %v572 = vadd.f32 0.0, %v571
  %v573 = vpop.f32.mrb[0].mxu0
  %574 = vmatprep.mubr.f32.mxu0 0.0
  %575 = vmatmul.mubr.f32.gmra.mrb[0].mxu0 %v443
  %v576 = vpop.f32.mrb[0].mxu0
  %v577 = vadd.f32 0.0, %v576
  %v578 = vpop.f32.mrb[0].mxu0
  %579 = vmatprep.mubr.f32.mxu0 0.0
  %580 = vmatmul.mubr.f32.gmra.mrb[0].mxu0 %v446
  %v581 = vpop.f32.mrb[0].mxu0
  %v582 = vadd.f32 0.0, %v581
  %v583 = vpop.f32.mrb[0].mxu0
  %584 = vmatprep.mubr.f32.mxu0 0.0
  %585 = vmatmul.mubr.f32.gmra.mrb[0].mxu0 %v449
  %v586 = vpop.f32.mrb[0].mxu0
  %v587 = vadd.f32 0.0, %v586
  %v588 = vpop.f32.mrb[0].mxu0
  %589 = vmatprep.mubr.f32.mxu0 0.0
  %590 = vmatmul.mubr.f32.gmra.mrb[0].mxu0 %v452
  %v591 = vpop.f32.mrb[0].mxu0
  %v592 = vadd.f32 0.0, %v591
  %v593 = vpop.f32.mrb[0].mxu0
  %594 = vmatprep.mubr.f32.mxu0 0.0
  %595 = vmatmul.mubr.f32.gmra.mrb[0].mxu0 %v455
  %v596 = vpop.f32.mrb[0].mxu0
  %v597 = vadd.f32 0.0, %v596
  %v598 = vpop.f32.mrb[0].mxu0
  %599 = vmatprep.mubr.f32.mxu0 0.0
  %600 = vmatmul.mubr.f32.gmra.mrb[0].mxu0 %v458
  %v601 = vpop.f32.mrb[0].mxu0
  %v602 = vadd.f32 0.0, %v601
  %v603 = vpop.f32.mrb[0].mxu0
  %604 = vmatprep.mubr.f32.mxu0 0.0
  %605 = vmatmul.mubr.f32.gmra.mrb[0].mxu0 %v461
  %v606 = vpop.f32.mrb[0].mxu0
  %v607 = vadd.f32 0.0, %v606
  %v608 = vpop.f32.mrb[0].mxu0
  %609 = vmatprep.mubr.f32.mxu0 0.0
  %610 = vmatmul.mubr.f32.gmra.mrb[0].mxu0 %v464
  %v611 = vpop.f32.mrb[0].mxu0
  %v612 = vadd.f32 0.0, %v611
  %v613 = vpop.f32.mrb[0].mxu0
  %614 = vmatprep.mubr.f32.mxu0 0.0
  %615 = vmatmul.mubr.f32.gmra.mrb[0].mxu0 %v467
  %v616 = vpop.f32.mrb[0].mxu0
  %v617 = vadd.f32 0.0, %v616
  %v618 = vpop.f32.mrb[0].mxu0
  %619 = vmatprep.mubr.f32.mxu0 0.0
  %620 = vmatmul.mubr.f32.gmra.mrb[0].mxu0 %v470
  %v621 = vpop.f32.mrb[0].mxu0
  %v622 = vadd.f32 0.0, %v621
  %v623 = vpop.f32.mrb[0].mxu0
  %624 = vmatprep.mubr.f32.mxu0 0.0
  %625 = vmatmul.mubr.f32.gmra.mrb[0].mxu0 %v473
  %v626 = vpop.f32.mrb[0].mxu0
  %v627 = vadd.f32 0.0, %v626
  %v628 = vpop.f32.mrb[0].mxu0
  %629 = vmatprep.mubr.f32.mxu0 0.0
  %630 = vmatmul.mubr.f32.gmra.mrb[0].mxu0 %v476
  %v631 = vpop.f32.mrb[0].mxu0
  %v632 = vadd.f32 0.0, %v631
  %v633 = vpop.f32.mrb[0].mxu0
  %634 = vmatprep.mubr.f32.mxu0 0.0
  %635 = vmatmul.mubr.f32.gmra.mrb[0].mxu0 %v479
  %v636 = vpop.f32.mrb[0].mxu0
  %v637 = vadd.f32 0.0, %v636
  %v638 = vpop.f32.mrb[0].mxu0
  %639 = vmatprep.mubr.f32.mxu0 0.0
  %640 = vmatmul.mubr.f32.gmra.mrb[0].mxu0 %v482
  %v641 = vpop.f32.mrb[0].mxu0
  %v642 = vadd.f32 0.0, %v641
  %v643 = vpop.f32.mrb[0].mxu0
  %644 = vmatprep.mubr.f32.mxu0 0.0
  %645 = vmatmul.mubr.f32.gmra.mrb[0].mxu0 %v485
  %v646 = vpop.f32.mrb[0].mxu0
  %v647 = vadd.f32 0.0, %v646
  %v648 = vpop.f32.mrb[0].mxu0
  %649 = vmatprep.mubr.f32.mxu0 0.0
  %650 = vmatmul.mubr.f32.gmra.mrb[0].mxu0 %v488
  %v651 = vpop.f32.mrb[0].mxu0
  %v652 = vadd.f32 0.0, %v651
  %v653 = vpop.f32.mrb[0].mxu0
  %654 = vmatprep.mubr.f32.mxu0 0.0
  %655 = vmatmul.mubr.f32.gmra.mrb[0].mxu0 %v491
  %v656 = vpop.f32.mrb[0].mxu0
  %v657 = vadd.f32 0.0, %v656
  %v658 = vpop.f32.mrb[0].mxu0
  %659 = vmatprep.mubr.f32.mxu0 0.0
  %660 = vmatmul.mubr.f32.gmra.mrb[0].mxu0 %v494
  %v661 = vpop.f32.mrb[0].mxu0
  %v662 = vadd.f32 0.0, %v661
  %v663 = vpop.f32.mrb[0].mxu0
  %664 = vmatprep.mubr.f32.mxu0 0.0
  %665 = vmatmul.mubr.f32.gmra.mrb[0].mxu0 %v497
  %v666 = vpop.f32.mrb[0].mxu0
  %v667 = vadd.f32 0.0, %v666
  %v668 = vpop.f32.mrb[0].mxu0
  %669 = vmatprep.mubr.f32.mxu0 0.0
  %670 = vmatmul.mubr.f32.gmra.mrb[0].mxu0 %v500
  %v671 = vpop.f32.mrb[0].mxu0
  %v672 = vadd.f32 0.0, %v671
  %v673 = vpop.f32.mrb[0].mxu0
  %674 = vmatprep.mubr.f32.mxu0 0.0
  %675 = vmatmul.mubr.f32.gmra.mrb[0].mxu0 %v503
  %v676 = vpop.f32.mrb[0].mxu0
  %v677 = vadd.f32 0.0, %v676
  %v678 = vpop.f32.mrb[0].mxu0
  %679 = vdwg.mxu0
  %v680 = vxor.u32 %v572, 2147483648
  %v681 = vxor.u32 %v577, 2147483648
  %v682 = vxor.u32 %v582, 2147483648
  %v683 = vxor.u32 %v587, 2147483648
  %v684 = vxor.u32 %v592, 2147483648
  %v685 = vxor.u32 %v597, 2147483648
  %v686 = vxor.u32 %v602, 2147483648
  %v687 = vxor.u32 %v607, 2147483648
  %v688 = vxor.u32 %v612, 2147483648
  %v689 = vxor.u32 %v617, 2147483648
  %v690 = vxor.u32 %v622, 2147483648
  %v691 = vxor.u32 %v627, 2147483648
  %v692 = vxor.u32 %v632, 2147483648
  %v693 = vxor.u32 %v637, 2147483648
  %v694 = vxor.u32 %v642, 2147483648
  %v695 = vxor.u32 %v647, 2147483648
  %v696 = vxor.u32 %v652, 2147483648
  %v697 = vxor.u32 %v657, 2147483648
  %v698 = vxor.u32 %v662, 2147483648
  %v699 = vxor.u32 %v667, 2147483648
  %v700 = vxor.u32 %v672, 2147483648
  %v701 = vxor.u32 %v677, 2147483648
  %v702 = vmul.f32 %v680, 1.442695
  %v703 = vpow.pop %v702
  %v704 = vmul.f32 %v681, 1.442695
  %v705 = vpow.pop %v704
  %v706 = vmul.f32 %v682, 1.442695
  %v707 = vpow.pop %v706
  %v708 = vmul.f32 %v683, 1.442695
  %v709 = vpow.pop %v708
  %v710 = vmul.f32 %v684, 1.442695
  %v711 = vpow.pop %v710
  %v712 = vmul.f32 %v685, 1.442695
  %v713 = vpow.pop %v712
  %v714 = vmul.f32 %v686, 1.442695
  %v715 = vpow.pop %v714
  %v716 = vmul.f32 %v687, 1.442695
  %v717 = vpow.pop %v716
  %v718 = vmul.f32 %v688, 1.442695
  %v719 = vpow.pop %v718
  %v720 = vmul.f32 %v689, 1.442695
  %v721 = vpow.pop %v720
  %v722 = vmul.f32 %v690, 1.442695
  %v723 = vpow.pop %v722
  %v724 = vmul.f32 %v691, 1.442695
  %v725 = vpow.pop %v724
  %v726 = vmul.f32 %v692, 1.442695
  %v727 = vpow.pop %v726
  %v728 = vmul.f32 %v693, 1.442695
  %v729 = vpow.pop %v728
  %v730 = vmul.f32 %v694, 1.442695
  %v731 = vpow.pop %v730
  %v732 = vmul.f32 %v695, 1.442695
  %v733 = vpow.pop %v732
  %v734 = vmul.f32 %v696, 1.442695
  %v735 = vpow.pop %v734
  %v736 = vmul.f32 %v697, 1.442695
  %v737 = vpow.pop %v736
  %v738 = vmul.f32 %v698, 1.442695
  %v739 = vpow.pop %v738
  %v740 = vmul.f32 %v699, 1.442695
  %v741 = vpow.pop %v740
  %v742 = vmul.f32 %v700, 1.442695
  %v743 = vpow.pop %v742
  %v744 = vmul.f32 %v701, 1.442695
  %v745 = vpow.pop %v744
  %v746 = vadd.f32 %v703, 1.0
  %v747 = vadd.f32 %v705, 1.0
  %v748 = vadd.f32 %v707, 1.0
  %v749 = vadd.f32 %v709, 1.0
  %v750 = vadd.f32 %v711, 1.0
  %v751 = vadd.f32 %v713, 1.0
  %v752 = vadd.f32 %v715, 1.0
  %v753 = vadd.f32 %v717, 1.0
  %v754 = vadd.f32 %v719, 1.0
  %v755 = vadd.f32 %v721, 1.0
  %v756 = vadd.f32 %v723, 1.0
  %v757 = vadd.f32 %v725, 1.0
  %v758 = vadd.f32 %v727, 1.0
  %v759 = vadd.f32 %v729, 1.0
  %v760 = vadd.f32 %v731, 1.0
  %v761 = vadd.f32 %v733, 1.0
  %v762 = vadd.f32 %v735, 1.0
  %v763 = vadd.f32 %v737, 1.0
  %v764 = vadd.f32 %v739, 1.0
  %v765 = vadd.f32 %v741, 1.0
  %v766 = vadd.f32 %v743, 1.0
  %v767 = vadd.f32 %v745, 1.0
  %v768 = vrcp.pop %v746
  %v769 = vmul.f32 1.0, %v768
  %v770 = vrcp.pop %v747
  %v771 = vmul.f32 1.0, %v770
  %v772 = vrcp.pop %v748
  %v773 = vmul.f32 1.0, %v772
  %v774 = vrcp.pop %v749
  %v775 = vmul.f32 1.0, %v774
  %v776 = vrcp.pop %v750
  %v777 = vmul.f32 1.0, %v776
  %v778 = vrcp.pop %v751
  %v779 = vmul.f32 1.0, %v778
  %v780 = vrcp.pop %v752
  %v781 = vmul.f32 1.0, %v780
  %v782 = vrcp.pop %v753
  %v783 = vmul.f32 1.0, %v782
  %v784 = vrcp.pop %v754
  %v785 = vmul.f32 1.0, %v784
  %v786 = vrcp.pop %v755
  %v787 = vmul.f32 1.0, %v786
  %v788 = vrcp.pop %v756
  %v789 = vmul.f32 1.0, %v788
  %v790 = vrcp.pop %v757
  %v791 = vmul.f32 1.0, %v790
  %v792 = vrcp.pop %v758
  %v793 = vmul.f32 1.0, %v792
  %v794 = vrcp.pop %v759
  %v795 = vmul.f32 1.0, %v794
  %v796 = vrcp.pop %v760
  %v797 = vmul.f32 1.0, %v796
  %v798 = vrcp.pop %v761
  %v799 = vmul.f32 1.0, %v798
  %v800 = vrcp.pop %v762
  %v801 = vmul.f32 1.0, %v800
  %v802 = vrcp.pop %v763
  %v803 = vmul.f32 1.0, %v802
  %v804 = vrcp.pop %v764
  %v805 = vmul.f32 1.0, %v804
  %v806 = vrcp.pop %v765
  %v807 = vmul.f32 1.0, %v806
  %v808 = vrcp.pop %v766
  %v809 = vmul.f32 1.0, %v808
  %v810 = vrcp.pop %v767
  %v811 = vmul.f32 1.0, %v810
  %v812 = vmul.f32 %v572, %v769
  %v813 = vmul.f32 %v577, %v771
  %v814 = vmul.f32 %v582, %v773
  %v815 = vmul.f32 %v587, %v775
  %v816 = vmul.f32 %v592, %v777
  %v817 = vmul.f32 %v597, %v779
  %v818 = vmul.f32 %v602, %v781
  %v819 = vmul.f32 %v607, %v783
  %v820 = vmul.f32 %v612, %v785
  %v821 = vmul.f32 %v617, %v787
  %v822 = vmul.f32 %v622, %v789
  %v823 = vmul.f32 %v627, %v791
  %v824 = vmul.f32 %v632, %v793
  %v825 = vmul.f32 %v637, %v795
  %v826 = vmul.f32 %v642, %v797
  %v827 = vmul.f32 %v647, %v799
  %v828 = vmul.f32 %v652, %v801
  %v829 = vmul.f32 %v657, %v803
  %v830 = vmul.f32 %v662, %v805
  %v831 = vmul.f32 %v667, %v807
  %v832 = vmul.f32 %v672, %v809
  %v833 = vmul.f32 %v677, %v811
  %834 = vst.msk [vmem:[%s3] sm:$0xff] %vm438, %v812
  %835 = vst.msk [vmem:[%s3 + $0x8] sm:$0xff] %vm438, %v813
  %836 = vst.msk [vmem:[%s3 + $0x10] sm:$0xff] %vm438, %v814
  %837 = vst.msk [vmem:[%s3 + $0x18] sm:$0xff] %vm438, %v815
  %838 = vst.msk [vmem:[%s3 + $0x20] sm:$0xff] %vm438, %v816
  %839 = vst.msk [vmem:[%s3 + $0x28] sm:$0xff] %vm438, %v817
  %840 = vst.msk [vmem:[%s3 + $0x30] sm:$0xff] %vm438, %v818
  %841 = vst.msk [vmem:[%s3 + $0x38] sm:$0xff] %vm438, %v819
  %842 = vst.msk [vmem:[%s3 + $0x40] sm:$0xff] %vm438, %v820
  %843 = vst.msk [vmem:[%s3 + $0x48] sm:$0xff] %vm438, %v821
  %844 = vst.msk [vmem:[%s3 + $0x50] sm:$0xff] %vm438, %v822
  %845 = vst.msk [vmem:[%s3 + $0x58] sm:$0xff] %vm438, %v823
  %846 = vst.msk [vmem:[%s3 + $0x60] sm:$0xff] %vm438, %v824
  %847 = vst.msk [vmem:[%s3 + $0x68] sm:$0xff] %vm438, %v825
  %848 = vst.msk [vmem:[%s3 + $0x70] sm:$0xff] %vm438, %v826
  %849 = vst.msk [vmem:[%s3 + $0x78] sm:$0xff] %vm438, %v827
  %850 = vst.msk [vmem:[%s3 + $0x80] sm:$0xff] %vm438, %v828
  %851 = vst.msk [vmem:[%s3 + $0x88] sm:$0xff] %vm438, %v829
  %852 = vst.msk [vmem:[%s3 + $0x90] sm:$0xff] %vm438, %v830
  %853 = vst.msk [vmem:[%s3 + $0x98] sm:$0xff] %vm438, %v831
  %854 = vst.msk [vmem:[%s3 + $0xa0] sm:$0xff] %vm438, %v832
  %855 = vst.msk [vmem:[%s3 + $0xa8] sm:$0xff] %vm438, %v833
  // Predicated region
  $region14: #{lcao_interaction.6} parent=0 // pred_check
    _
  $region15: #{lcao_interaction.6} parent=0 // pred_check_branch
    %857 = sbr.rel (0) target = $region17
  $region16: #{lcao_interaction.6} parent=0 // pred_region
    _
  $region17: #{lcao_interaction.6} parent=0 // pred_fallthru
    _
  // Predicated region
  $region18: #{lcao_interaction.6} parent=0 // pred_check
    _
  $region19: #{lcao_interaction.6} parent=0 // pred_check_branch
    %859 = sbr.rel (0) target = $region21
  $region20: #{lcao_interaction.6} parent=0 // pred_region
    _
  $region21: #{lcao_interaction.6} parent=0 // pred_fallthru
    _

// kernel: lcao_interaction.7
$region0: #{lcao_interaction.7}
  #allocation0 [shape = 'u32[]', space=smem, size = 0x4, offset = 0x4, fixed_abs, tag = 'smem constant byte address 0x4 - core index']
  #allocation1 [shape = 'u32[144,128]{1,0:T(1,128)}', space=vmem, size = 0x12000, scoped, tag = 'internal scratch']
  %s0 = inlined_call_operand.vmem [shape: f32[32,8], index: 0, kind: input, shape index: {}]
  %s1 = inlined_call_operand.vmem [shape: f32[32,8], index: 1, kind: input, shape index: {}]
  %s2 = inlined_call_operand.vmem [shape: f32[32,8,32], index: 2, kind: input, shape index: {}]
  %s3 = inlined_call_operand.vmem [shape: f32[32,32], index: 3, kind: input, shape index: {}]
  %s4 = inlined_call_operand.vmem [shape: f32[32,32], index: 4, kind: output, shape index: {}]
  %s5 = sld [smem:[#allocation0]]
  $region26: #{lcao_interaction.7} parent=0
    _
  %s7 = ssub.s32 1, %s5
  %s8 = scalar_select 0, %s7, %s5
  // Predicated region
  $region2: #{lcao_interaction.7} parent=0 // pred_check
    _
  $region3: #{lcao_interaction.7} parent=0 // pred_check_branch
    %10 = sbr.rel (0) target = $region5
  $region4: #{lcao_interaction.7} parent=0 // pred_region
    _
  $region5: #{lcao_interaction.7} parent=0 // pred_fallthru
    _
  // Predicated region
  $region6: #{lcao_interaction.7} parent=0 // pred_check
    _
  $region7: #{lcao_interaction.7} parent=0 // pred_check_branch
    %12 = sbr.rel (0) target = $region9
  $region8: #{lcao_interaction.7} parent=0 // pred_region
    _
  $region9: #{lcao_interaction.7} parent=0 // pred_fallthru
    _
  // Predicated region
  $region10: #{lcao_interaction.7} parent=0 // pred_check
    _
  $region11: #{lcao_interaction.7} parent=0 // pred_check_branch
    %14 = sbr.rel (0) target = $region13
  $region12: #{lcao_interaction.7} parent=0 // pred_region
    _
  $region13: #{lcao_interaction.7} parent=0 // pred_fallthru
    _
  // Predicated region
  $region14: #{lcao_interaction.7} parent=0 // pred_check
    _
  $region15: #{lcao_interaction.7} parent=0 // pred_check_branch
    %16 = sbr.rel (0) target = $region17
  $region16: #{lcao_interaction.7} parent=0 // pred_region
    _
  $region17: #{lcao_interaction.7} parent=0 // pred_fallthru
    _
  %v17 = vld [vmem:[%s0] sm:$0xff]
  %v18 = vld [vmem:[%s0 + $0x8] sm:$0xff]
  %v19 = vld [vmem:[%s0 + $0x10] sm:$0xff]
  %v20 = vld [vmem:[%s0 + $0x18] sm:$0xff]
  %v21 = vld [vmem:[%s1] sm:$0xff]
  %v22 = vld [vmem:[%s1 + $0x8] sm:$0xff]
  %v23 = vld [vmem:[%s1 + $0x10] sm:$0xff]
  %v24 = vld [vmem:[%s1 + $0x18] sm:$0xff]
  %v25 = vmul.f32 %v17, %v21
  %v26 = vmul.f32 %v18, %v22
  %v27 = vmul.f32 %v19, %v23
  %v28 = vmul.f32 %v20, %v24
  %v29 = vlaneseq
  %v30 = vshrl.u32 %v29, 7
  %v31 = vsub.s32 0, %v30
  %v32 = vrot.slane %v25, %v31
  %34 = vbcast.lane.b32.xlu0 %v32, 256
  %v35 = vpop.permute.xlu0 %34
  %v36 = vlaneseq
  %v37 = vshrl.u32 %v36, 7
  %v38 = vsub.s32 1, %v37
  %v39 = vrot.slane %v25, %v38
  %41 = vbcast.lane.b32.xlu0 %v39, 256
  %v42 = vpop.permute.xlu0 %41
  %v43 = vlaneseq
  %v44 = vshrl.u32 %v43, 7
  %v45 = vsub.s32 2, %v44
  %v46 = vrot.slane %v25, %v45
  %48 = vbcast.lane.b32.xlu0 %v46, 256
  %v49 = vpop.permute.xlu0 %48
  %v50 = vlaneseq
  %v51 = vshrl.u32 %v50, 7
  %v52 = vsub.s32 3, %v51
  %v53 = vrot.slane %v25, %v52
  %55 = vbcast.lane.b32.xlu0 %v53, 256
  %v56 = vpop.permute.xlu0 %55
  %v57 = vlaneseq
  %v58 = vshrl.u32 %v57, 7
  %v59 = vsub.s32 4, %v58
  %v60 = vrot.slane %v25, %v59
  %62 = vbcast.lane.b32.xlu0 %v60, 256
  %v63 = vpop.permute.xlu0 %62
  %v64 = vlaneseq
  %v65 = vshrl.u32 %v64, 7
  %v66 = vsub.s32 5, %v65
  %v67 = vrot.slane %v25, %v66
  %69 = vbcast.lane.b32.xlu0 %v67, 256
  %v70 = vpop.permute.xlu0 %69
  %v71 = vlaneseq
  %v72 = vshrl.u32 %v71, 7
  %v73 = vsub.s32 6, %v72
  %v74 = vrot.slane %v25, %v73
  %76 = vbcast.lane.b32.xlu0 %v74, 256
  %v77 = vpop.permute.xlu0 %76
  %v78 = vlaneseq
  %v79 = vshrl.u32 %v78, 7
  %v80 = vsub.s32 7, %v79
  %v81 = vrot.slane %v25, %v80
  %83 = vbcast.lane.b32.xlu0 %v81, 256
  %v84 = vpop.permute.xlu0 %83
  %v85 = vlaneseq
  %v86 = vshrl.u32 %v85, 7
  %v87 = vsub.s32 0, %v86
  %v88 = vrot.slane %v26, %v87
  %90 = vbcast.lane.b32.xlu0 %v88, 256
  %v91 = vpop.permute.xlu0 %90
  %v92 = vlaneseq
  %v93 = vshrl.u32 %v92, 7
  %v94 = vsub.s32 1, %v93
  %v95 = vrot.slane %v26, %v94
  %97 = vbcast.lane.b32.xlu0 %v95, 256
  %v98 = vpop.permute.xlu0 %97
  %v99 = vlaneseq
  %v100 = vshrl.u32 %v99, 7
  %v101 = vsub.s32 2, %v100
  %v102 = vrot.slane %v26, %v101
  %104 = vbcast.lane.b32.xlu0 %v102, 256
  %v105 = vpop.permute.xlu0 %104
  %v106 = vlaneseq
  %v107 = vshrl.u32 %v106, 7
  %v108 = vsub.s32 3, %v107
  %v109 = vrot.slane %v26, %v108
  %111 = vbcast.lane.b32.xlu0 %v109, 256
  %v112 = vpop.permute.xlu0 %111
  %v113 = vlaneseq
  %v114 = vshrl.u32 %v113, 7
  %v115 = vsub.s32 4, %v114
  %v116 = vrot.slane %v26, %v115
  %118 = vbcast.lane.b32.xlu0 %v116, 256
  %v119 = vpop.permute.xlu0 %118
  %v120 = vlaneseq
  %v121 = vshrl.u32 %v120, 7
  %v122 = vsub.s32 5, %v121
  %v123 = vrot.slane %v26, %v122
  %125 = vbcast.lane.b32.xlu0 %v123, 256
  %v126 = vpop.permute.xlu0 %125
  %v127 = vlaneseq
  %v128 = vshrl.u32 %v127, 7
  %v129 = vsub.s32 6, %v128
  %v130 = vrot.slane %v26, %v129
  %132 = vbcast.lane.b32.xlu0 %v130, 256
  %v133 = vpop.permute.xlu0 %132
  %v134 = vlaneseq
  %v135 = vshrl.u32 %v134, 7
  %v136 = vsub.s32 7, %v135
  %v137 = vrot.slane %v26, %v136
  %139 = vbcast.lane.b32.xlu0 %v137, 256
  %v140 = vpop.permute.xlu0 %139
  %v141 = vlaneseq
  %v142 = vshrl.u32 %v141, 7
  %v143 = vsub.s32 0, %v142
  %v144 = vrot.slane %v27, %v143
  %146 = vbcast.lane.b32.xlu0 %v144, 256
  %v147 = vpop.permute.xlu0 %146
  %v148 = vlaneseq
  %v149 = vshrl.u32 %v148, 7
  %v150 = vsub.s32 1, %v149
  %v151 = vrot.slane %v27, %v150
  %153 = vbcast.lane.b32.xlu0 %v151, 256
  %v154 = vpop.permute.xlu0 %153
  %v155 = vlaneseq
  %v156 = vshrl.u32 %v155, 7
  %v157 = vsub.s32 2, %v156
  %v158 = vrot.slane %v27, %v157
  %160 = vbcast.lane.b32.xlu0 %v158, 256
  %v161 = vpop.permute.xlu0 %160
  %v162 = vlaneseq
  %v163 = vshrl.u32 %v162, 7
  %v164 = vsub.s32 3, %v163
  %v165 = vrot.slane %v27, %v164
  %167 = vbcast.lane.b32.xlu0 %v165, 256
  %v168 = vpop.permute.xlu0 %167
  %v169 = vlaneseq
  %v170 = vshrl.u32 %v169, 7
  %v171 = vsub.s32 4, %v170
  %v172 = vrot.slane %v27, %v171
  %174 = vbcast.lane.b32.xlu0 %v172, 256
  %v175 = vpop.permute.xlu0 %174
  %v176 = vlaneseq
  %v177 = vshrl.u32 %v176, 7
  %v178 = vsub.s32 5, %v177
  %v179 = vrot.slane %v27, %v178
  %181 = vbcast.lane.b32.xlu0 %v179, 256
  %v182 = vpop.permute.xlu0 %181
  %v183 = vlaneseq
  %v184 = vshrl.u32 %v183, 7
  %v185 = vsub.s32 6, %v184
  %v186 = vrot.slane %v27, %v185
  %188 = vbcast.lane.b32.xlu0 %v186, 256
  %v189 = vpop.permute.xlu0 %188
  %v190 = vlaneseq
  %v191 = vshrl.u32 %v190, 7
  %v192 = vsub.s32 7, %v191
  %v193 = vrot.slane %v27, %v192
  %195 = vbcast.lane.b32.xlu0 %v193, 256
  %v196 = vpop.permute.xlu0 %195
  %v197 = vlaneseq
  %v198 = vshrl.u32 %v197, 7
  %v199 = vsub.s32 0, %v198
  %v200 = vrot.slane %v28, %v199
  %202 = vbcast.lane.b32.xlu0 %v200, 256
  %v203 = vpop.permute.xlu0 %202
  %v204 = vlaneseq
  %v205 = vshrl.u32 %v204, 7
  %v206 = vsub.s32 1, %v205
  %v207 = vrot.slane %v28, %v206
  %209 = vbcast.lane.b32.xlu0 %v207, 256
  %v210 = vpop.permute.xlu0 %209
  %v211 = vlaneseq
  %v212 = vshrl.u32 %v211, 7
  %v213 = vsub.s32 2, %v212
  %v214 = vrot.slane %v28, %v213
  %216 = vbcast.lane.b32.xlu0 %v214, 256
  %v217 = vpop.permute.xlu0 %216
  %v218 = vlaneseq
  %v219 = vshrl.u32 %v218, 7
  %v220 = vsub.s32 3, %v219
  %v221 = vrot.slane %v28, %v220
  %223 = vbcast.lane.b32.xlu0 %v221, 256
  %v224 = vpop.permute.xlu0 %223
  %v225 = vlaneseq
  %v226 = vshrl.u32 %v225, 7
  %v227 = vsub.s32 4, %v226
  %v228 = vrot.slane %v28, %v227
  %230 = vbcast.lane.b32.xlu0 %v228, 256
  %v231 = vpop.permute.xlu0 %230
  %v232 = vlaneseq
  %v233 = vshrl.u32 %v232, 7
  %v234 = vsub.s32 5, %v233
  %v235 = vrot.slane %v28, %v234
  %237 = vbcast.lane.b32.xlu0 %v235, 256
  %v238 = vpop.permute.xlu0 %237
  %v239 = vlaneseq
  %v240 = vshrl.u32 %v239, 7
  %v241 = vsub.s32 6, %v240
  %v242 = vrot.slane %v28, %v241
  %244 = vbcast.lane.b32.xlu0 %v242, 256
  %v245 = vpop.permute.xlu0 %244
  %v246 = vlaneseq
  %v247 = vshrl.u32 %v246, 7
  %v248 = vsub.s32 7, %v247
  %v249 = vrot.slane %v28, %v248
  %251 = vbcast.lane.b32.xlu0 %v249, 256
  %v252 = vpop.permute.xlu0 %251
  %v253 = vld [vmem:[%s2] sm:$0xff]
  %v254 = vld [vmem:[%s2 + $0x8] sm:$0xff]
  %v255 = vld [vmem:[%s2 + $0x10] sm:$0xff]
  %v256 = vld [vmem:[%s2 + $0x18] sm:$0xff]
  %v257 = vld [vmem:[%s2 + $0x20] sm:$0xff]
  %v258 = vld [vmem:[%s2 + $0x28] sm:$0xff]
  %v259 = vld [vmem:[%s2 + $0x30] sm:$0xff]
  %v260 = vld [vmem:[%s2 + $0x38] sm:$0xff]
  %v261 = vld [vmem:[%s2 + $0x40] sm:$0xff]
  %v262 = vld [vmem:[%s2 + $0x48] sm:$0xff]
  %v263 = vld [vmem:[%s2 + $0x50] sm:$0xff]
  %v264 = vld [vmem:[%s2 + $0x58] sm:$0xff]
  %v265 = vld [vmem:[%s2 + $0x60] sm:$0xff]
  %v266 = vld [vmem:[%s2 + $0x68] sm:$0xff]
  %v267 = vld [vmem:[%s2 + $0x70] sm:$0xff]
  %v268 = vld [vmem:[%s2 + $0x78] sm:$0xff]
  %v269 = vld [vmem:[%s2 + $0x80] sm:$0xff]
  %v270 = vld [vmem:[%s2 + $0x88] sm:$0xff]
  %v271 = vld [vmem:[%s2 + $0x90] sm:$0xff]
  %v272 = vld [vmem:[%s2 + $0x98] sm:$0xff]
  %v273 = vld [vmem:[%s2 + $0xa0] sm:$0xff]
  %v274 = vld [vmem:[%s2 + $0xa8] sm:$0xff]
  %v275 = vld [vmem:[%s2 + $0xb0] sm:$0xff]
  %v276 = vld [vmem:[%s2 + $0xb8] sm:$0xff]
  %v277 = vld [vmem:[%s2 + $0xc0] sm:$0xff]
  %v278 = vld [vmem:[%s2 + $0xc8] sm:$0xff]
  %v279 = vld [vmem:[%s2 + $0xd0] sm:$0xff]
  %v280 = vld [vmem:[%s2 + $0xd8] sm:$0xff]
  %v281 = vld [vmem:[%s2 + $0xe0] sm:$0xff]
  %v282 = vld [vmem:[%s2 + $0xe8] sm:$0xff]
  %v283 = vld [vmem:[%s2 + $0xf0] sm:$0xff]
  %v284 = vld [vmem:[%s2 + $0xf8] sm:$0xff]
  %v285 = vmul.f32 %v35, %v253
  %v286 = vmul.f32 %v42, %v254
  %v287 = vmul.f32 %v49, %v255
  %v288 = vmul.f32 %v56, %v256
  %v289 = vmul.f32 %v63, %v257
  %v290 = vmul.f32 %v70, %v258
  %v291 = vmul.f32 %v77, %v259
  %v292 = vmul.f32 %v84, %v260
  %v293 = vmul.f32 %v91, %v261
  %v294 = vmul.f32 %v98, %v262
  %v295 = vmul.f32 %v105, %v263
  %v296 = vmul.f32 %v112, %v264
  %v297 = vmul.f32 %v119, %v265
  %v298 = vmul.f32 %v126, %v266
  %v299 = vmul.f32 %v133, %v267
  %v300 = vmul.f32 %v140, %v268
  %v301 = vmul.f32 %v147, %v269
  %v302 = vmul.f32 %v154, %v270
  %v303 = vmul.f32 %v161, %v271
  %v304 = vmul.f32 %v168, %v272
  %v305 = vmul.f32 %v175, %v273
  %v306 = vmul.f32 %v182, %v274
  %v307 = vmul.f32 %v189, %v275
  %v308 = vmul.f32 %v196, %v276
  %v309 = vmul.f32 %v203, %v277
  %v310 = vmul.f32 %v210, %v278
  %v311 = vmul.f32 %v217, %v279
  %v312 = vmul.f32 %v224, %v280
  %v313 = vmul.f32 %v231, %v281
  %v314 = vmul.f32 %v238, %v282
  %v315 = vmul.f32 %v245, %v283
  %v316 = vmul.f32 %v252, %v284
  %vm317 = vcmask 261120
  %v318 = vsel %vm317, %v285, 0.0
  %v319 = vrot.slane %v318, 4
  %v320 = vadd.f32 %v318, %v319
  %v321 = vrot.slane %v320, 2
  %v322 = vadd.f32 %v320, %v321
  %v323 = vrot.slane %v322, 1
  %v324 = vadd.f32 %v322, %v323
  %v325 = vsel %vm317, %v286, 0.0
  %v326 = vrot.slane %v325, 4
  %v327 = vadd.f32 %v325, %v326
  %v328 = vrot.slane %v327, 2
  %v329 = vadd.f32 %v327, %v328
  %v330 = vrot.slane %v329, 1
  %v331 = vadd.f32 %v329, %v330
  %v332 = vsel %vm317, %v287, 0.0
  %v333 = vrot.slane %v332, 4
  %v334 = vadd.f32 %v332, %v333
  %v335 = vrot.slane %v334, 2
  %v336 = vadd.f32 %v334, %v335
  %v337 = vrot.slane %v336, 1
  %v338 = vadd.f32 %v336, %v337
  %v339 = vsel %vm317, %v288, 0.0
  %v340 = vrot.slane %v339, 4
  %v341 = vadd.f32 %v339, %v340
  %v342 = vrot.slane %v341, 2
  %v343 = vadd.f32 %v341, %v342
  %v344 = vrot.slane %v343, 1
  %v345 = vadd.f32 %v343, %v344
  %v346 = vsel %vm317, %v289, 0.0
  %v347 = vrot.slane %v346, 4
  %v348 = vadd.f32 %v346, %v347
  %v349 = vrot.slane %v348, 2
  %v350 = vadd.f32 %v348, %v349
  %v351 = vrot.slane %v350, 1
  %v352 = vadd.f32 %v350, %v351
  %v353 = vsel %vm317, %v290, 0.0
  %v354 = vrot.slane %v353, 4
  %v355 = vadd.f32 %v353, %v354
  %v356 = vrot.slane %v355, 2
  %v357 = vadd.f32 %v355, %v356
  %v358 = vrot.slane %v357, 1
  %v359 = vadd.f32 %v357, %v358
  %v360 = vsel %vm317, %v291, 0.0
  %v361 = vrot.slane %v360, 4
  %v362 = vadd.f32 %v360, %v361
  %v363 = vrot.slane %v362, 2
  %v364 = vadd.f32 %v362, %v363
  %v365 = vrot.slane %v364, 1
  %v366 = vadd.f32 %v364, %v365
  %v367 = vsel %vm317, %v292, 0.0
  %v368 = vrot.slane %v367, 4
  %v369 = vadd.f32 %v367, %v368
  %v370 = vrot.slane %v369, 2
  %v371 = vadd.f32 %v369, %v370
  %v372 = vrot.slane %v371, 1
  %v373 = vadd.f32 %v371, %v372
  %v374 = vsel %vm317, %v293, 0.0
  %v375 = vrot.slane %v374, 4
  %v376 = vadd.f32 %v374, %v375
  %v377 = vrot.slane %v376, 2
  %v378 = vadd.f32 %v376, %v377
  %v379 = vrot.slane %v378, 1
  %v380 = vadd.f32 %v378, %v379
  %v381 = vsel %vm317, %v294, 0.0
  %v382 = vrot.slane %v381, 4
  %v383 = vadd.f32 %v381, %v382
  %v384 = vrot.slane %v383, 2
  %v385 = vadd.f32 %v383, %v384
  %v386 = vrot.slane %v385, 1
  %v387 = vadd.f32 %v385, %v386
  %v388 = vsel %vm317, %v295, 0.0
  %v389 = vrot.slane %v388, 4
  %v390 = vadd.f32 %v388, %v389
  %v391 = vrot.slane %v390, 2
  %v392 = vadd.f32 %v390, %v391
  %v393 = vrot.slane %v392, 1
  %v394 = vadd.f32 %v392, %v393
  %v395 = vsel %vm317, %v296, 0.0
  %v396 = vrot.slane %v395, 4
  %v397 = vadd.f32 %v395, %v396
  %v398 = vrot.slane %v397, 2
  %v399 = vadd.f32 %v397, %v398
  %v400 = vrot.slane %v399, 1
  %v401 = vadd.f32 %v399, %v400
  %v402 = vsel %vm317, %v297, 0.0
  %v403 = vrot.slane %v402, 4
  %v404 = vadd.f32 %v402, %v403
  %v405 = vrot.slane %v404, 2
  %v406 = vadd.f32 %v404, %v405
  %v407 = vrot.slane %v406, 1
  %v408 = vadd.f32 %v406, %v407
  %v409 = vsel %vm317, %v298, 0.0
  %v410 = vrot.slane %v409, 4
  %v411 = vadd.f32 %v409, %v410
  %v412 = vrot.slane %v411, 2
  %v413 = vadd.f32 %v411, %v412
  %v414 = vrot.slane %v413, 1
  %v415 = vadd.f32 %v413, %v414
  %v416 = vsel %vm317, %v299, 0.0
  %v417 = vrot.slane %v416, 4
  %v418 = vadd.f32 %v416, %v417
  %v419 = vrot.slane %v418, 2
  %v420 = vadd.f32 %v418, %v419
  %v421 = vrot.slane %v420, 1
  %v422 = vadd.f32 %v420, %v421
  %v423 = vsel %vm317, %v300, 0.0
  %v424 = vrot.slane %v423, 4
  %v425 = vadd.f32 %v423, %v424
  %v426 = vrot.slane %v425, 2
  %v427 = vadd.f32 %v425, %v426
  %v428 = vrot.slane %v427, 1
  %v429 = vadd.f32 %v427, %v428
  %v430 = vsel %vm317, %v301, 0.0
  %v431 = vrot.slane %v430, 4
  %v432 = vadd.f32 %v430, %v431
  %v433 = vrot.slane %v432, 2
  %v434 = vadd.f32 %v432, %v433
  %v435 = vrot.slane %v434, 1
  %v436 = vadd.f32 %v434, %v435
  %v437 = vsel %vm317, %v302, 0.0
  %v438 = vrot.slane %v437, 4
  %v439 = vadd.f32 %v437, %v438
  %v440 = vrot.slane %v439, 2
  %v441 = vadd.f32 %v439, %v440
  %v442 = vrot.slane %v441, 1
  %v443 = vadd.f32 %v441, %v442
  %v444 = vsel %vm317, %v303, 0.0
  %v445 = vrot.slane %v444, 4
  %v446 = vadd.f32 %v444, %v445
  %v447 = vrot.slane %v446, 2
  %v448 = vadd.f32 %v446, %v447
  %v449 = vrot.slane %v448, 1
  %v450 = vadd.f32 %v448, %v449
  %v451 = vsel %vm317, %v304, 0.0
  %v452 = vrot.slane %v451, 4
  %v453 = vadd.f32 %v451, %v452
  %v454 = vrot.slane %v453, 2
  %v455 = vadd.f32 %v453, %v454
  %v456 = vrot.slane %v455, 1
  %v457 = vadd.f32 %v455, %v456
  %v458 = vsel %vm317, %v305, 0.0
  %v459 = vrot.slane %v458, 4
  %v460 = vadd.f32 %v458, %v459
  %v461 = vrot.slane %v460, 2
  %v462 = vadd.f32 %v460, %v461
  %v463 = vrot.slane %v462, 1
  %v464 = vadd.f32 %v462, %v463
  %v465 = vsel %vm317, %v306, 0.0
  %v466 = vrot.slane %v465, 4
  %v467 = vadd.f32 %v465, %v466
  %v468 = vrot.slane %v467, 2
  %v469 = vadd.f32 %v467, %v468
  %v470 = vrot.slane %v469, 1
  %v471 = vadd.f32 %v469, %v470
  %v472 = vsel %vm317, %v307, 0.0
  %v473 = vrot.slane %v472, 4
  %v474 = vadd.f32 %v472, %v473
  %v475 = vrot.slane %v474, 2
  %v476 = vadd.f32 %v474, %v475
  %v477 = vrot.slane %v476, 1
  %v478 = vadd.f32 %v476, %v477
  %v479 = vsel %vm317, %v308, 0.0
  %v480 = vrot.slane %v479, 4
  %v481 = vadd.f32 %v479, %v480
  %v482 = vrot.slane %v481, 2
  %v483 = vadd.f32 %v481, %v482
  %v484 = vrot.slane %v483, 1
  %v485 = vadd.f32 %v483, %v484
  %v486 = vsel %vm317, %v309, 0.0
  %v487 = vrot.slane %v486, 4
  %v488 = vadd.f32 %v486, %v487
  %v489 = vrot.slane %v488, 2
  %v490 = vadd.f32 %v488, %v489
  %v491 = vrot.slane %v490, 1
  %v492 = vadd.f32 %v490, %v491
  %v493 = vsel %vm317, %v310, 0.0
  %v494 = vrot.slane %v493, 4
  %v495 = vadd.f32 %v493, %v494
  %v496 = vrot.slane %v495, 2
  %v497 = vadd.f32 %v495, %v496
  %v498 = vrot.slane %v497, 1
  %v499 = vadd.f32 %v497, %v498
  %v500 = vsel %vm317, %v311, 0.0
  %v501 = vrot.slane %v500, 4
  %v502 = vadd.f32 %v500, %v501
  %v503 = vrot.slane %v502, 2
  %v504 = vadd.f32 %v502, %v503
  %v505 = vrot.slane %v504, 1
  %v506 = vadd.f32 %v504, %v505
  %v507 = vsel %vm317, %v312, 0.0
  %v508 = vrot.slane %v507, 4
  %v509 = vadd.f32 %v507, %v508
  %v510 = vrot.slane %v509, 2
  %v511 = vadd.f32 %v509, %v510
  %v512 = vrot.slane %v511, 1
  %v513 = vadd.f32 %v511, %v512
  %v514 = vsel %vm317, %v313, 0.0
  %v515 = vrot.slane %v514, 4
  %v516 = vadd.f32 %v514, %v515
  %v517 = vrot.slane %v516, 2
  %v518 = vadd.f32 %v516, %v517
  %v519 = vrot.slane %v518, 1
  %v520 = vadd.f32 %v518, %v519
  %v521 = vsel %vm317, %v314, 0.0
  %v522 = vrot.slane %v521, 4
  %v523 = vadd.f32 %v521, %v522
  %v524 = vrot.slane %v523, 2
  %v525 = vadd.f32 %v523, %v524
  %v526 = vrot.slane %v525, 1
  %v527 = vadd.f32 %v525, %v526
  %v528 = vsel %vm317, %v315, 0.0
  %v529 = vrot.slane %v528, 4
  %v530 = vadd.f32 %v528, %v529
  %v531 = vrot.slane %v530, 2
  %v532 = vadd.f32 %v530, %v531
  %v533 = vrot.slane %v532, 1
  %v534 = vadd.f32 %v532, %v533
  %v535 = vsel %vm317, %v316, 0.0
  %v536 = vrot.slane %v535, 4
  %v537 = vadd.f32 %v535, %v536
  %v538 = vrot.slane %v537, 2
  %v539 = vadd.f32 %v537, %v538
  %v540 = vrot.slane %v539, 1
  %v541 = vadd.f32 %v539, %v540
  %v542 = vmul.f32 %v324, %v324
  %v543 = vmul.f32 %v331, %v331
  %v544 = vmul.f32 %v338, %v338
  %v545 = vmul.f32 %v345, %v345
  %v546 = vmul.f32 %v352, %v352
  %v547 = vmul.f32 %v359, %v359
  %v548 = vmul.f32 %v366, %v366
  %v549 = vmul.f32 %v373, %v373
  %v550 = vmul.f32 %v380, %v380
  %v551 = vmul.f32 %v387, %v387
  %v552 = vmul.f32 %v394, %v394
  %v553 = vmul.f32 %v401, %v401
  %v554 = vmul.f32 %v408, %v408
  %v555 = vmul.f32 %v415, %v415
  %v556 = vmul.f32 %v422, %v422
  %v557 = vmul.f32 %v429, %v429
  %v558 = vmul.f32 %v436, %v436
  %v559 = vmul.f32 %v443, %v443
  %v560 = vmul.f32 %v450, %v450
  %v561 = vmul.f32 %v457, %v457
  %v562 = vmul.f32 %v464, %v464
  %v563 = vmul.f32 %v471, %v471
  %v564 = vmul.f32 %v478, %v478
  %v565 = vmul.f32 %v485, %v485
  %v566 = vmul.f32 %v492, %v492
  %v567 = vmul.f32 %v499, %v499
  %v568 = vmul.f32 %v506, %v506
  %v569 = vmul.f32 %v513, %v513
  %v570 = vmul.f32 %v520, %v520
  %v571 = vmul.f32 %v527, %v527
  %v572 = vmul.f32 %v534, %v534
  %v573 = vmul.f32 %v541, %v541
  %vm606 = vcmask 1041409
  %v607 = vsel %vm606, %v543, %v542
  %vm608 = vcmask 1042434
  %v609 = vsel %vm608, %v544, %v607
  %vm610 = vcmask 1043459
  %v611 = vsel %vm610, %v545, %v609
  %vm612 = vcmask 1044484
  %v613 = vsel %vm612, %v546, %v611
  %vm614 = vcmask 1045509
  %v615 = vsel %vm614, %v547, %v613
  %vm616 = vcmask 1046534
  %v617 = vsel %vm616, %v548, %v615
  %vm618 = vcmask 1047559
  %v619 = vsel %vm618, %v549, %v617
  %v620 = vsel %vm606, %v551, %v550
  %v621 = vsel %vm608, %v552, %v620
  %v622 = vsel %vm610, %v553, %v621
  %v623 = vsel %vm612, %v554, %v622
  %v624 = vsel %vm614, %v555, %v623
  %v625 = vsel %vm616, %v556, %v624
  %v626 = vsel %vm618, %v557, %v625
  %v627 = vsel %vm606, %v559, %v558
  %v628 = vsel %vm608, %v560, %v627
  %v629 = vsel %vm610, %v561, %v628
  %v630 = vsel %vm612, %v562, %v629
  %v631 = vsel %vm614, %v563, %v630
  %v632 = vsel %vm616, %v564, %v631
  %v633 = vsel %vm618, %v565, %v632
  %v634 = vsel %vm606, %v567, %v566
  %v635 = vsel %vm608, %v568, %v634
  %v636 = vsel %vm610, %v569, %v635
  %v637 = vsel %vm612, %v570, %v636
  %v638 = vsel %vm614, %v571, %v637
  %v639 = vsel %vm616, %v572, %v638
  %v640 = vsel %vm618, %v573, %v639
  %v645 = vsel %vm317, %v619, 0.0
  %646 = vadd.xlane.f32.xlu0 %v645
  %v647 = vpop.xlane.xlu0 %646
  %v648 = vsel %vm317, %v626, 0.0
  %649 = vadd.xlane.f32.xlu0 %v648
  %v650 = vpop.xlane.xlu0 %649
  %v651 = vsel %vm317, %v633, 0.0
  %652 = vadd.xlane.f32.xlu0 %v651
  %v653 = vpop.xlane.xlu0 %652
  %v654 = vsel %vm317, %v640, 0.0
  %655 = vadd.xlane.f32.xlu0 %v654
  %v656 = vpop.xlane.xlu0 %655
  %v657 = vmax.f32 %v647, 1e-24
  %v658 = vmax.f32 %v650, 1e-24
  %v659 = vmax.f32 %v653, 1e-24
  %v660 = vmax.f32 %v656, 1e-24
  %v661 = vrsqrt.pop %v657
  %v662 = vrsqrt.pop %v658
  %v663 = vrsqrt.pop %v659
  %v664 = vrsqrt.pop %v660
  %v669 = vrot.slane %v661, 1
  %v670 = vrot.slane %v661, 2
  %v671 = vrot.slane %v661, 3
  %v672 = vrot.slane %v661, 4
  %v673 = vrot.slane %v661, 5
  %v674 = vrot.slane %v661, 6
  %v675 = vrot.slane %v661, 7
  %v676 = vrot.slane %v662, 1
  %v677 = vrot.slane %v662, 2
  %v678 = vrot.slane %v662, 3
  %v679 = vrot.slane %v662, 4
  %v680 = vrot.slane %v662, 5
  %v681 = vrot.slane %v662, 6
  %v682 = vrot.slane %v662, 7
  %v683 = vrot.slane %v663, 1
  %v684 = vrot.slane %v663, 2
  %v685 = vrot.slane %v663, 3
  %v686 = vrot.slane %v663, 4
  %v687 = vrot.slane %v663, 5
  %v688 = vrot.slane %v663, 6
  %v689 = vrot.slane %v663, 7
  %v690 = vrot.slane %v664, 1
  %v691 = vrot.slane %v664, 2
  %v692 = vrot.slane %v664, 3
  %v693 = vrot.slane %v664, 4
  %v694 = vrot.slane %v664, 5
  %v695 = vrot.slane %v664, 6
  %v696 = vrot.slane %v664, 7
  %v729 = vmul.f32 %v324, %v661
  %v730 = vmul.f32 %v331, %v669
  %v731 = vmul.f32 %v338, %v670
  %v732 = vmul.f32 %v345, %v671
  %v733 = vmul.f32 %v352, %v672
  %v734 = vmul.f32 %v359, %v673
  %v735 = vmul.f32 %v366, %v674
  %v736 = vmul.f32 %v373, %v675
  %v737 = vmul.f32 %v380, %v662
  %v738 = vmul.f32 %v387, %v676
  %v739 = vmul.f32 %v394, %v677
  %v740 = vmul.f32 %v401, %v678
  %v741 = vmul.f32 %v408, %v679
  %v742 = vmul.f32 %v415, %v680
  %v743 = vmul.f32 %v422, %v681
  %v744 = vmul.f32 %v429, %v682
  %v745 = vmul.f32 %v436, %v663
  %v746 = vmul.f32 %v443, %v683
  %v747 = vmul.f32 %v450, %v684
  %v748 = vmul.f32 %v457, %v685
  %v749 = vmul.f32 %v464, %v686
  %v750 = vmul.f32 %v471, %v687
  %v751 = vmul.f32 %v478, %v688
  %v752 = vmul.f32 %v485, %v689
  %v753 = vmul.f32 %v492, %v664
  %v754 = vmul.f32 %v499, %v690
  %v755 = vmul.f32 %v506, %v691
  %v756 = vmul.f32 %v513, %v692
  %v757 = vmul.f32 %v520, %v693
  %v758 = vmul.f32 %v527, %v694
  %v759 = vmul.f32 %v534, %v695
  %v760 = vmul.f32 %v541, %v696
  %v761 = vld [vmem:[%s3] sm:$0xff]
  %v762 = vld [vmem:[%s3 + $0x8] sm:$0xff]
  %v763 = vld [vmem:[%s3 + $0x10] sm:$0xff]
  %v764 = vld [vmem:[%s3 + $0x18] sm:$0xff]
  %v765 = vxor.u32 %v761, 2147483648
  %v766 = vxor.u32 %v762, 2147483648
  %v767 = vxor.u32 %v763, 2147483648
  %v768 = vxor.u32 %v764, 2147483648
  %v769 = vmul.f32 %v765, 1.442695
  %v770 = vpow.pop %v769
  %v771 = vmul.f32 %v766, 1.442695
  %v772 = vpow.pop %v771
  %v773 = vmul.f32 %v767, 1.442695
  %v774 = vpow.pop %v773
  %v775 = vmul.f32 %v768, 1.442695
  %v776 = vpow.pop %v775
  %v777 = vadd.f32 %v770, 1.0
  %v778 = vadd.f32 %v772, 1.0
  %v779 = vadd.f32 %v774, 1.0
  %v780 = vadd.f32 %v776, 1.0
  %v781 = vrcp.pop %v777
  %v782 = vmul.f32 1.0, %v781
  %v783 = vrcp.pop %v778
  %v784 = vmul.f32 1.0, %v783
  %v785 = vrcp.pop %v779
  %v786 = vmul.f32 1.0, %v785
  %v787 = vrcp.pop %v780
  %v788 = vmul.f32 1.0, %v787
  %v793 = vrot.slane %v782, 1
  %v794 = vrot.slane %v782, 2
  %v795 = vrot.slane %v782, 3
  %v796 = vrot.slane %v782, 4
  %v797 = vrot.slane %v782, 5
  %v798 = vrot.slane %v782, 6
  %v799 = vrot.slane %v782, 7
  %v800 = vrot.slane %v784, 1
  %v801 = vrot.slane %v784, 2
  %v802 = vrot.slane %v784, 3
  %v803 = vrot.slane %v784, 4
  %v804 = vrot.slane %v784, 5
  %v805 = vrot.slane %v784, 6
  %v806 = vrot.slane %v784, 7
  %v807 = vrot.slane %v786, 1
  %v808 = vrot.slane %v786, 2
  %v809 = vrot.slane %v786, 3
  %v810 = vrot.slane %v786, 4
  %v811 = vrot.slane %v786, 5
  %v812 = vrot.slane %v786, 6
  %v813 = vrot.slane %v786, 7
  %v814 = vrot.slane %v788, 1
  %v815 = vrot.slane %v788, 2
  %v816 = vrot.slane %v788, 3
  %v817 = vrot.slane %v788, 4
  %v818 = vrot.slane %v788, 5
  %v819 = vrot.slane %v788, 6
  %v820 = vrot.slane %v788, 7
  %v853 = vmul.f32 %v729, %v782
  %v854 = vmul.f32 %v730, %v793
  %v855 = vmul.f32 %v731, %v794
  %v856 = vmul.f32 %v732, %v795
  %v857 = vmul.f32 %v733, %v796
  %v858 = vmul.f32 %v734, %v797
  %v859 = vmul.f32 %v735, %v798
  %v860 = vmul.f32 %v736, %v799
  %v861 = vmul.f32 %v737, %v784
  %v862 = vmul.f32 %v738, %v800
  %v863 = vmul.f32 %v739, %v801
  %v864 = vmul.f32 %v740, %v802
  %v865 = vmul.f32 %v741, %v803
  %v866 = vmul.f32 %v742, %v804
  %v867 = vmul.f32 %v743, %v805
  %v868 = vmul.f32 %v744, %v806
  %v869 = vmul.f32 %v745, %v786
  %v870 = vmul.f32 %v746, %v807
  %v871 = vmul.f32 %v747, %v808
  %v872 = vmul.f32 %v748, %v809
  %v873 = vmul.f32 %v749, %v810
  %v874 = vmul.f32 %v750, %v811
  %v875 = vmul.f32 %v751, %v812
  %v876 = vmul.f32 %v752, %v813
  %v877 = vmul.f32 %v753, %v788
  %v878 = vmul.f32 %v754, %v814
  %v879 = vmul.f32 %v755, %v815
  %v880 = vmul.f32 %v756, %v816
  %v881 = vmul.f32 %v757, %v817
  %v882 = vmul.f32 %v758, %v818
  %v883 = vmul.f32 %v759, %v819
  %v884 = vmul.f32 %v760, %v820
  %v917 = vrot.slane %v854, 7
  %v918 = vsel %vm606, %v917, %v853
  %v919 = vrot.slane %v855, 6
  %v920 = vsel %vm608, %v919, %v918
  %v921 = vrot.slane %v856, 5
  %v922 = vsel %vm610, %v921, %v920
  %v923 = vrot.slane %v857, 4
  %v924 = vsel %vm612, %v923, %v922
  %v925 = vrot.slane %v858, 3
  %v926 = vsel %vm614, %v925, %v924
  %v927 = vrot.slane %v859, 2
  %v928 = vsel %vm616, %v927, %v926
  %v929 = vrot.slane %v860, 1
  %v930 = vsel %vm618, %v929, %v928
  %v931 = vrot.slane %v862, 7
  %v932 = vsel %vm606, %v931, %v861
  %v933 = vrot.slane %v863, 6
  %v934 = vsel %vm608, %v933, %v932
  %v935 = vrot.slane %v864, 5
  %v936 = vsel %vm610, %v935, %v934
  %v937 = vrot.slane %v865, 4
  %v938 = vsel %vm612, %v937, %v936
  %v939 = vrot.slane %v866, 3
  %v940 = vsel %vm614, %v939, %v938
  %v941 = vrot.slane %v867, 2
  %v942 = vsel %vm616, %v941, %v940
  %v943 = vrot.slane %v868, 1
  %v944 = vsel %vm618, %v943, %v942
  %v945 = vrot.slane %v870, 7
  %v946 = vsel %vm606, %v945, %v869
  %v947 = vrot.slane %v871, 6
  %v948 = vsel %vm608, %v947, %v946
  %v949 = vrot.slane %v872, 5
  %v950 = vsel %vm610, %v949, %v948
  %v951 = vrot.slane %v873, 4
  %v952 = vsel %vm612, %v951, %v950
  %v953 = vrot.slane %v874, 3
  %v954 = vsel %vm614, %v953, %v952
  %v955 = vrot.slane %v875, 2
  %v956 = vsel %vm616, %v955, %v954
  %v957 = vrot.slane %v876, 1
  %v958 = vsel %vm618, %v957, %v956
  %v959 = vrot.slane %v878, 7
  %v960 = vsel %vm606, %v959, %v877
  %v961 = vrot.slane %v879, 6
  %v962 = vsel %vm608, %v961, %v960
  %v963 = vrot.slane %v880, 5
  %v964 = vsel %vm610, %v963, %v962
  %v965 = vrot.slane %v881, 4
  %v966 = vsel %vm612, %v965, %v964
  %v967 = vrot.slane %v882, 3
  %v968 = vsel %vm614, %v967, %v966
  %v969 = vrot.slane %v883, 2
  %v970 = vsel %vm616, %v969, %v968
  %v971 = vrot.slane %v884, 1
  %v972 = vsel %vm618, %v971, %v970
  %977 = vst.msk [vmem:[%s4] sm:$0xff] %vm317, %v930
  %978 = vst.msk [vmem:[%s4 + $0x8] sm:$0xff] %vm317, %v944
  %979 = vst.msk [vmem:[%s4 + $0x10] sm:$0xff] %vm317, %v958
  %980 = vst.msk [vmem:[%s4 + $0x18] sm:$0xff] %vm317, %v972
  // Predicated region
  $region18: #{lcao_interaction.7} parent=0 // pred_check
    _
  $region19: #{lcao_interaction.7} parent=0 // pred_check_branch
    %982 = sbr.rel (0) target = $region21
  $region20: #{lcao_interaction.7} parent=0 // pred_region
    _
  $region21: #{lcao_interaction.7} parent=0 // pred_fallthru
    _
  // Predicated region
  $region22: #{lcao_interaction.7} parent=0 // pred_check
    _
  $region23: #{lcao_interaction.7} parent=0 // pred_check_branch
    %984 = sbr.rel (0) target = $region25
  $region24: #{lcao_interaction.7} parent=0 // pred_region
    _
  $region25: #{lcao_interaction.7} parent=0 // pred_fallthru
    _

// kernel: lcao_interaction.9
$region0: #{lcao_interaction.9}
  #allocation0 [shape = 'u32[]', space=smem, size = 0x4, offset = 0x4, fixed_abs, tag = 'smem constant byte address 0x4 - core index']
  #allocation1 [shape = 'u32[144,128]{1,0:T(1,128)}', space=vmem, size = 0x12000, scoped, tag = 'internal scratch']
  %s0 = inlined_call_operand.vmem [shape: f32[16,32], index: 0, kind: input, shape index: {}]
  %s1 = inlined_call_operand.vmem [shape: f32[16,32], index: 1, kind: input, shape index: {}]
  %s2 = inlined_call_operand.vmem [shape: f32[32,32], index: 2, kind: input, shape index: {}]
  %s3 = inlined_call_operand.hbm [shape: f32[16,32], index: 3, kind: output, shape index: {}]
  %s4 = sld [smem:[#allocation0]]
  $region22: #{lcao_interaction.9} parent=0
    _
  %s6 = ssub.s32 1, %s4
  %s7 = scalar_select 0, %s6, %s4
  $region1: #{lcao_interaction.9} parent=0
    #allocation2 [shape = 'u8[8192]{0}', space=vmem, size = 0x2000, scoped, tag = 'output window, operand 0, single buffered']
    #allocation3 [shape = 's32[1]{0}', space=sflag, size = 0x4, scoped, tag = 'scoped memory for lcao_interaction.9']
    %8 = vsyncpa [#allocation3], 0
    // Predicated region
    $region2: #{lcao_interaction.9} parent=1 // pred_check
      _
    $region3: #{lcao_interaction.9} parent=1 // pred_check_branch
      %10 = sbr.rel (0) target = $region5
    $region4: #{lcao_interaction.9} parent=1 // pred_region
      _
    $region5: #{lcao_interaction.9} parent=1 // pred_fallthru
      _
    // Predicated region
    $region6: #{lcao_interaction.9} parent=1 // pred_check
      _
    $region7: #{lcao_interaction.9} parent=1 // pred_check_branch
      %12 = sbr.rel (0) target = $region9
    $region8: #{lcao_interaction.9} parent=1 // pred_region
      _
    $region9: #{lcao_interaction.9} parent=1 // pred_fallthru
      _
    // Predicated region
    $region10: #{lcao_interaction.9} parent=1 // pred_check
      _
    $region11: #{lcao_interaction.9} parent=1 // pred_check_branch
      %14 = sbr.rel (0) target = $region13
    $region12: #{lcao_interaction.9} parent=1 // pred_region
      _
    $region13: #{lcao_interaction.9} parent=1 // pred_fallthru
      _
    %v15 = vld [vmem:[%s1] sm:$0xff]
    %v16 = vld [vmem:[%s1 + $0x8] sm:$0xff]
    %v17 = vld [vmem:[%s0] sm:$0xff]
    %v18 = vld [vmem:[%s0 + $0x8] sm:$0xff]
    %v19 = vld [vmem:[%s2] sm:$0xff]
    %v20 = vld [vmem:[%s2 + $0x8] sm:$0xff]
    %v21 = vld [vmem:[%s2 + $0x10] sm:$0xff]
    %v22 = vld [vmem:[%s2 + $0x18] sm:$0xff]
    %vm23 = vcmask 261120
    %v25 = vsel %vm23, %v17, 0
    %v28 = vsel %vm23, %v18, 0
    %30 = vmatprep.subr.mxu0 0.0
    %31 = vmatpush1.msra.mxu0 %v19
    %32 = vmatprep.subr.mxu0 0.0
    %33 = vmatpush1.msra.mxu0 %v20
    %34 = vmatprep.subr.mxu0 0.0
    %35 = vmatpush1.msra.mxu0 %v21
    %36 = vmatprep.subr.mxu0 0.0
    %37 = vmatpush1.msra.mxu0 %v22
    %38 = vmatprep.subr.mxu0 0.0
    %39 = vmatpush1.msra.mxu0 0.0
    %40 = vmatprep.subr.mxu0 0.0
    %41 = vmatpush1.msra.mxu0 0.0
    %42 = vmatprep.subr.mxu0 0.0
    %43 = vmatpush1.msra.mxu0 0.0
    %44 = vmatprep.subr.mxu0 0.0
    %45 = vmatpush1.msra.mxu0 0.0
    %46 = vmatprep.subr.mxu0 0.0
    %47 = vmatpush1.msra.mxu0 0.0
    %48 = vmatprep.subr.mxu0 0.0
    %49 = vmatpush1.msra.mxu0 0.0
    %50 = vmatprep.subr.mxu0 0.0
    %51 = vmatpush1.msra.mxu0 0.0
    %52 = vmatprep.subr.mxu0 0.0
    %53 = vmatpush1.msra.mxu0 0.0
    %54 = vmatprep.subr.mxu0 0.0
    %55 = vmatpush1.msra.mxu0 0.0
    %56 = vmatprep.subr.mxu0 0.0
    %57 = vmatpush1.msra.mxu0 0.0
    %58 = vmatprep.subr.mxu0 0.0
    %59 = vmatpush1.msra.mxu0 0.0
    %60 = vmatprep.subr.mxu0 0.0
    %61 = vmatpush1.msra.mxu0 0.0
    %62 = vmatprep.subr.mxu0 0.0
    %63 = vmatpush1.msra.mxu0 0.0
    %64 = vmatprep.subr.mxu0 0.0
    %65 = vmatpush1.msra.mxu0 0.0
    %66 = vmatprep.subr.mxu0 0.0
    %67 = vmatpush1.msra.mxu0 0.0
    %68 = vmatprep.subr.mxu0 0.0
    %69 = vmatpush1.msra.mxu0 0.0
    %70 = vmatprep.subr.mxu0 0.0
    %71 = vmatpush1.msra.mxu0 0.0
    %72 = vmatprep.subr.mxu0 0.0
    %73 = vmatpush1.msra.mxu0 0.0
    %74 = vmatprep.subr.mxu0 0.0
    %75 = vmatpush1.msra.mxu0 0.0
    %76 = vmatprep.subr.mxu0 0.0
    %77 = vmatpush1.msra.mxu0 0.0
    %78 = vmatprep.subr.mxu0 0.0
    %79 = vmatpush1.msra.mxu0 0.0
    %80 = vmatprep.subr.mxu0 0.0
    %81 = vmatpush1.msra.mxu0 0.0
    %82 = vmatprep.subr.mxu0 0.0
    %83 = vmatpush1.msra.mxu0 0.0
    %84 = vmatprep.subr.mxu0 0.0
    %85 = vmatpush1.msra.mxu0 0.0
    %86 = vmatprep.subr.mxu0 0.0
    %87 = vmatpush1.msra.mxu0 0.0
    %88 = vmatprep.subr.mxu0 0.0
    %89 = vmatpush1.msra.mxu0 0.0
    %90 = vmatprep.subr.mxu0 0.0
    %91 = vmatpush1.msra.mxu0 0.0
    %92 = vmatprep.subr.mxu0 0.0
    %93 = vmatpush1.msra.mxu0 0.0
    %94 = vmatprep.mubr.f32.mxu0 0.0
    %95 = vmatmul.mubr.f32.gmra.mrb[0].mxu0 %v25
    %v96 = vpop.f32.mrb[0].mxu0
    %v97 = vadd.f32 0.0, %v96
    %v98 = vpop.f32.mrb[0].mxu0
    %99 = vmatprep.mubr.f32.mxu0 0.0
    %100 = vmatmul.mubr.f32.gmra.mrb[0].mxu0 %v28
    %v101 = vpop.f32.mrb[0].mxu0
    %v102 = vadd.f32 0.0, %v101
    %v103 = vpop.f32.mrb[0].mxu0
    %104 = vdwg.mxu0
    %v105 = vadd.f32 %v15, %v97
    %v106 = vadd.f32 %v16, %v102
    %107 = vst.msk [vmem:[#allocation2] sm:$0xff] %vm23, %v105
    %108 = vst.msk [vmem:[#allocation2 + $0x8] sm:$0xff] %vm23, %v106
    // Predicated region
    $region14: #{lcao_interaction.9} parent=1 // pred_check
      _
    $region15: #{lcao_interaction.9} parent=1 // pred_check_branch
      %110 = sbr.rel (0) target = $region17
    $region16: #{lcao_interaction.9} parent=1 // pred_region
      %s112 = ssub.s32 256, 256
      %113 = vsyncadd [#allocation3], %s112
      %s114 = sshll.u32 [#allocation2], 4
      %s115 = int_to_ptr.vmem [resolvable:$true] %s114
      %120 = dma.vmem_to_hbm [thread:$0]  %s115, 256, %s3, [#allocation3], 128, 128, 8
    $region17: #{lcao_interaction.9} parent=1 // pred_fallthru
      _
    // Predicated region
    $region18: #{lcao_interaction.9} parent=1 // pred_check
      _
    $region19: #{lcao_interaction.9} parent=1 // pred_check_branch
      %122 = sbr.rel (0) target = $region21
    $region20: #{lcao_interaction.9} parent=1 // pred_region
      %123 = dma.done [#allocation3], 256
    $region21: #{lcao_interaction.9} parent=1 // pred_fallthru
      _
    %124 = vsyncpa [#allocation3], 1

// kernel: lcao_interaction.8
$region0: #{lcao_interaction.8}
  #allocation0 [shape = 'u32[]', space=smem, size = 0x4, offset = 0x4, fixed_abs, tag = 'smem constant byte address 0x4 - core index']
  #allocation1 [shape = 'u32[144,128]{1,0:T(1,128)}', space=vmem, size = 0x12000, scoped, tag = 'internal scratch']
  %s0 = inlined_call_operand.vmem [shape: f32[24,8,32], index: 0, kind: input, shape index: {}]
  %s1 = inlined_call_operand.vmem [shape: f32[24,32], index: 1, kind: input, shape index: {}]
  %s2 = inlined_call_operand.vmem [shape: f32[24,8], index: 2, kind: input, shape index: {}]
  %s3 = inlined_call_operand.vmem [shape: f32[24,64], index: 3, kind: input, shape index: {}]
  %s4 = inlined_call_operand.vmem [shape: f32[32,32], index: 4, kind: input, shape index: {}]
  %s5 = inlined_call_operand.vmem [shape: f32[32,32], index: 5, kind: input, shape index: {}]
  %s6 = inlined_call_operand.vmem [shape: f32[64,32], index: 6, kind: input, shape index: {}]
  %s7 = inlined_call_operand.vmem [shape: f32[1,32], index: 7, kind: input, shape index: {}]
  %s8 = inlined_call_operand.vmem [shape: f32[32,32], index: 8, kind: input, shape index: {}]
  %s9 = inlined_call_operand.vmem [shape: f32[1,32], index: 9, kind: input, shape index: {}]
  %s10 = inlined_call_operand.vmem [shape: f32[24,32], index: 10, kind: output, shape index: {}]
  %s11 = sld [smem:[#allocation0]]
  $region50: #{lcao_interaction.8} parent=0
    _
  %s13 = ssub.s32 1, %s11
  %s14 = scalar_select 0, %s13, %s11
  // Predicated region
  $region2: #{lcao_interaction.8} parent=0 // pred_check
    _
  $region3: #{lcao_interaction.8} parent=0 // pred_check_branch
    %16 = sbr.rel (0) target = $region5
  $region4: #{lcao_interaction.8} parent=0 // pred_region
    _
  $region5: #{lcao_interaction.8} parent=0 // pred_fallthru
    _
  // Predicated region
  $region6: #{lcao_interaction.8} parent=0 // pred_check
    _
  $region7: #{lcao_interaction.8} parent=0 // pred_check_branch
    %18 = sbr.rel (0) target = $region9
  $region8: #{lcao_interaction.8} parent=0 // pred_region
    _
  $region9: #{lcao_interaction.8} parent=0 // pred_fallthru
    _
  // Predicated region
  $region10: #{lcao_interaction.8} parent=0 // pred_check
    _
  $region11: #{lcao_interaction.8} parent=0 // pred_check_branch
    %20 = sbr.rel (0) target = $region13
  $region12: #{lcao_interaction.8} parent=0 // pred_region
    _
  $region13: #{lcao_interaction.8} parent=0 // pred_fallthru
    _
  // Predicated region
  $region14: #{lcao_interaction.8} parent=0 // pred_check
    _
  $region15: #{lcao_interaction.8} parent=0 // pred_check_branch
    %22 = sbr.rel (0) target = $region17
  $region16: #{lcao_interaction.8} parent=0 // pred_region
    _
  $region17: #{lcao_interaction.8} parent=0 // pred_fallthru
    _
  // Predicated region
  $region18: #{lcao_interaction.8} parent=0 // pred_check
    _
  $region19: #{lcao_interaction.8} parent=0 // pred_check_branch
    %24 = sbr.rel (0) target = $region21
  $region20: #{lcao_interaction.8} parent=0 // pred_region
    _
  $region21: #{lcao_interaction.8} parent=0 // pred_fallthru
    _
  // Predicated region
  $region22: #{lcao_interaction.8} parent=0 // pred_check
    _
  $region23: #{lcao_interaction.8} parent=0 // pred_check_branch
    %26 = sbr.rel (0) target = $region25
  $region24: #{lcao_interaction.8} parent=0 // pred_region
    _
  $region25: #{lcao_interaction.8} parent=0 // pred_fallthru
    _
  // Predicated region
  $region26: #{lcao_interaction.8} parent=0 // pred_check
    _
  $region27: #{lcao_interaction.8} parent=0 // pred_check_branch
    %28 = sbr.rel (0) target = $region29
  $region28: #{lcao_interaction.8} parent=0 // pred_region
    _
  $region29: #{lcao_interaction.8} parent=0 // pred_fallthru
    _
  // Predicated region
  $region30: #{lcao_interaction.8} parent=0 // pred_check
    _
  $region31: #{lcao_interaction.8} parent=0 // pred_check_branch
    %30 = sbr.rel (0) target = $region33
  $region32: #{lcao_interaction.8} parent=0 // pred_region
    _
  $region33: #{lcao_interaction.8} parent=0 // pred_fallthru
    _
  // Predicated region
  $region34: #{lcao_interaction.8} parent=0 // pred_check
    _
  $region35: #{lcao_interaction.8} parent=0 // pred_check_branch
    %32 = sbr.rel (0) target = $region37
  $region36: #{lcao_interaction.8} parent=0 // pred_region
    _
  $region37: #{lcao_interaction.8} parent=0 // pred_fallthru
    _
  // Predicated region
  $region38: #{lcao_interaction.8} parent=0 // pred_check
    _
  $region39: #{lcao_interaction.8} parent=0 // pred_check_branch
    %34 = sbr.rel (0) target = $region41
  $region40: #{lcao_interaction.8} parent=0 // pred_region
    _
  $region41: #{lcao_interaction.8} parent=0 // pred_fallthru
    _
  %v35 = vld [vmem:[%s2] sm:$0xff]
  %v36 = vld [vmem:[%s2 + $0x8] sm:$0xff]
  %v37 = vld [vmem:[%s2 + $0x10] sm:$0xff]
  %v38 = vlaneseq
  %v39 = vshrl.u32 %v38, 7
  %v40 = vsub.s32 0, %v39
  %v41 = vrot.slane %v35, %v40
  %43 = vbcast.lane.b32.xlu0 %v41, 256
  %v44 = vpop.permute.xlu0 %43
  %v45 = vlaneseq
  %v46 = vshrl.u32 %v45, 7
  %v47 = vsub.s32 1, %v46
  %v48 = vrot.slane %v35, %v47
  %50 = vbcast.lane.b32.xlu0 %v48, 256
  %v51 = vpop.permute.xlu0 %50
  %v52 = vlaneseq
  %v53 = vshrl.u32 %v52, 7
  %v54 = vsub.s32 2, %v53
  %v55 = vrot.slane %v35, %v54
  %57 = vbcast.lane.b32.xlu0 %v55, 256
  %v58 = vpop.permute.xlu0 %57
  %v59 = vlaneseq
  %v60 = vshrl.u32 %v59, 7
  %v61 = vsub.s32 3, %v60
  %v62 = vrot.slane %v35, %v61
  %64 = vbcast.lane.b32.xlu0 %v62, 256
  %v65 = vpop.permute.xlu0 %64
  %v66 = vlaneseq
  %v67 = vshrl.u32 %v66, 7
  %v68 = vsub.s32 4, %v67
  %v69 = vrot.slane %v35, %v68
  %71 = vbcast.lane.b32.xlu0 %v69, 256
  %v72 = vpop.permute.xlu0 %71
  %v73 = vlaneseq
  %v74 = vshrl.u32 %v73, 7
  %v75 = vsub.s32 5, %v74
  %v76 = vrot.slane %v35, %v75
  %78 = vbcast.lane.b32.xlu0 %v76, 256
  %v79 = vpop.permute.xlu0 %78
  %v80 = vlaneseq
  %v81 = vshrl.u32 %v80, 7
  %v82 = vsub.s32 6, %v81
  %v83 = vrot.slane %v35, %v82
  %85 = vbcast.lane.b32.xlu0 %v83, 256
  %v86 = vpop.permute.xlu0 %85
  %v87 = vlaneseq
  %v88 = vshrl.u32 %v87, 7
  %v89 = vsub.s32 7, %v88
  %v90 = vrot.slane %v35, %v89
  %92 = vbcast.lane.b32.xlu0 %v90, 256
  %v93 = vpop.permute.xlu0 %92
  %v94 = vlaneseq
  %v95 = vshrl.u32 %v94, 7
  %v96 = vsub.s32 0, %v95
  %v97 = vrot.slane %v36, %v96
  %99 = vbcast.lane.b32.xlu0 %v97, 256
  %v100 = vpop.permute.xlu0 %99
  %v101 = vlaneseq
  %v102 = vshrl.u32 %v101, 7
  %v103 = vsub.s32 1, %v102
  %v104 = vrot.slane %v36, %v103
  %106 = vbcast.lane.b32.xlu0 %v104, 256
  %v107 = vpop.permute.xlu0 %106
  %v108 = vlaneseq
  %v109 = vshrl.u32 %v108, 7
  %v110 = vsub.s32 2, %v109
  %v111 = vrot.slane %v36, %v110
  %113 = vbcast.lane.b32.xlu0 %v111, 256
  %v114 = vpop.permute.xlu0 %113
  %v115 = vlaneseq
  %v116 = vshrl.u32 %v115, 7
  %v117 = vsub.s32 3, %v116
  %v118 = vrot.slane %v36, %v117
  %120 = vbcast.lane.b32.xlu0 %v118, 256
  %v121 = vpop.permute.xlu0 %120
  %v122 = vlaneseq
  %v123 = vshrl.u32 %v122, 7
  %v124 = vsub.s32 4, %v123
  %v125 = vrot.slane %v36, %v124
  %127 = vbcast.lane.b32.xlu0 %v125, 256
  %v128 = vpop.permute.xlu0 %127
  %v129 = vlaneseq
  %v130 = vshrl.u32 %v129, 7
  %v131 = vsub.s32 5, %v130
  %v132 = vrot.slane %v36, %v131
  %134 = vbcast.lane.b32.xlu0 %v132, 256
  %v135 = vpop.permute.xlu0 %134
  %v136 = vlaneseq
  %v137 = vshrl.u32 %v136, 7
  %v138 = vsub.s32 6, %v137
  %v139 = vrot.slane %v36, %v138
  %141 = vbcast.lane.b32.xlu0 %v139, 256
  %v142 = vpop.permute.xlu0 %141
  %v143 = vlaneseq
  %v144 = vshrl.u32 %v143, 7
  %v145 = vsub.s32 7, %v144
  %v146 = vrot.slane %v36, %v145
  %148 = vbcast.lane.b32.xlu0 %v146, 256
  %v149 = vpop.permute.xlu0 %148
  %v150 = vlaneseq
  %v151 = vshrl.u32 %v150, 7
  %v152 = vsub.s32 0, %v151
  %v153 = vrot.slane %v37, %v152
  %155 = vbcast.lane.b32.xlu0 %v153, 256
  %v156 = vpop.permute.xlu0 %155
  %v157 = vlaneseq
  %v158 = vshrl.u32 %v157, 7
  %v159 = vsub.s32 1, %v158
  %v160 = vrot.slane %v37, %v159
  %162 = vbcast.lane.b32.xlu0 %v160, 256
  %v163 = vpop.permute.xlu0 %162
  %v164 = vlaneseq
  %v165 = vshrl.u32 %v164, 7
  %v166 = vsub.s32 2, %v165
  %v167 = vrot.slane %v37, %v166
  %169 = vbcast.lane.b32.xlu0 %v167, 256
  %v170 = vpop.permute.xlu0 %169
  %v171 = vlaneseq
  %v172 = vshrl.u32 %v171, 7
  %v173 = vsub.s32 3, %v172
  %v174 = vrot.slane %v37, %v173
  %176 = vbcast.lane.b32.xlu0 %v174, 256
  %v177 = vpop.permute.xlu0 %176
  %v178 = vlaneseq
  %v179 = vshrl.u32 %v178, 7
  %v180 = vsub.s32 4, %v179
  %v181 = vrot.slane %v37, %v180
  %183 = vbcast.lane.b32.xlu0 %v181, 256
  %v184 = vpop.permute.xlu0 %183
  %v185 = vlaneseq
  %v186 = vshrl.u32 %v185, 7
  %v187 = vsub.s32 5, %v186
  %v188 = vrot.slane %v37, %v187
  %190 = vbcast.lane.b32.xlu0 %v188, 256
  %v191 = vpop.permute.xlu0 %190
  %v192 = vlaneseq
  %v193 = vshrl.u32 %v192, 7
  %v194 = vsub.s32 6, %v193
  %v195 = vrot.slane %v37, %v194
  %197 = vbcast.lane.b32.xlu0 %v195, 256
  %v198 = vpop.permute.xlu0 %197
  %v199 = vlaneseq
  %v200 = vshrl.u32 %v199, 7
  %v201 = vsub.s32 7, %v200
  %v202 = vrot.slane %v37, %v201
  %204 = vbcast.lane.b32.xlu0 %v202, 256
  %v205 = vpop.permute.xlu0 %204
  %v206 = vld [vmem:[%s0] sm:$0xff]
  %v207 = vld [vmem:[%s0 + $0x8] sm:$0xff]
  %v208 = vld [vmem:[%s0 + $0x10] sm:$0xff]
  %v209 = vld [vmem:[%s0 + $0x18] sm:$0xff]
  %v210 = vld [vmem:[%s0 + $0x20] sm:$0xff]
  %v211 = vld [vmem:[%s0 + $0x28] sm:$0xff]
  %v212 = vld [vmem:[%s0 + $0x30] sm:$0xff]
  %v213 = vld [vmem:[%s0 + $0x38] sm:$0xff]
  %v214 = vld [vmem:[%s0 + $0x40] sm:$0xff]
  %v215 = vld [vmem:[%s0 + $0x48] sm:$0xff]
  %v216 = vld [vmem:[%s0 + $0x50] sm:$0xff]
  %v217 = vld [vmem:[%s0 + $0x58] sm:$0xff]
  %v218 = vld [vmem:[%s0 + $0x60] sm:$0xff]
  %v219 = vld [vmem:[%s0 + $0x68] sm:$0xff]
  %v220 = vld [vmem:[%s0 + $0x70] sm:$0xff]
  %v221 = vld [vmem:[%s0 + $0x78] sm:$0xff]
  %v222 = vld [vmem:[%s0 + $0x80] sm:$0xff]
  %v223 = vld [vmem:[%s0 + $0x88] sm:$0xff]
  %v224 = vld [vmem:[%s0 + $0x90] sm:$0xff]
  %v225 = vld [vmem:[%s0 + $0x98] sm:$0xff]
  %v226 = vld [vmem:[%s0 + $0xa0] sm:$0xff]
  %v227 = vld [vmem:[%s0 + $0xa8] sm:$0xff]
  %v228 = vld [vmem:[%s0 + $0xb0] sm:$0xff]
  %v229 = vld [vmem:[%s0 + $0xb8] sm:$0xff]
  %v230 = vmul.f32 %v44, %v206
  %v231 = vmul.f32 %v51, %v207
  %v232 = vmul.f32 %v58, %v208
  %v233 = vmul.f32 %v65, %v209
  %v234 = vmul.f32 %v72, %v210
  %v235 = vmul.f32 %v79, %v211
  %v236 = vmul.f32 %v86, %v212
  %v237 = vmul.f32 %v93, %v213
  %v238 = vmul.f32 %v100, %v214
  %v239 = vmul.f32 %v107, %v215
  %v240 = vmul.f32 %v114, %v216
  %v241 = vmul.f32 %v121, %v217
  %v242 = vmul.f32 %v128, %v218
  %v243 = vmul.f32 %v135, %v219
  %v244 = vmul.f32 %v142, %v220
  %v245 = vmul.f32 %v149, %v221
  %v246 = vmul.f32 %v156, %v222
  %v247 = vmul.f32 %v163, %v223
  %v248 = vmul.f32 %v170, %v224
  %v249 = vmul.f32 %v177, %v225
  %v250 = vmul.f32 %v184, %v226
  %v251 = vmul.f32 %v191, %v227
  %v252 = vmul.f32 %v198, %v228
  %v253 = vmul.f32 %v205, %v229
  %vm254 = vcmask 261120
  %v255 = vsel %vm254, %v230, 0.0
  %v256 = vrot.slane %v255, 4
  %v257 = vadd.f32 %v255, %v256
  %v258 = vrot.slane %v257, 2
  %v259 = vadd.f32 %v257, %v258
  %v260 = vrot.slane %v259, 1
  %v261 = vadd.f32 %v259, %v260
  %v262 = vsel %vm254, %v231, 0.0
  %v263 = vrot.slane %v262, 4
  %v264 = vadd.f32 %v262, %v263
  %v265 = vrot.slane %v264, 2
  %v266 = vadd.f32 %v264, %v265
  %v267 = vrot.slane %v266, 1
  %v268 = vadd.f32 %v266, %v267
  %v269 = vsel %vm254, %v232, 0.0
  %v270 = vrot.slane %v269, 4
  %v271 = vadd.f32 %v269, %v270
  %v272 = vrot.slane %v271, 2
  %v273 = vadd.f32 %v271, %v272
  %v274 = vrot.slane %v273, 1
  %v275 = vadd.f32 %v273, %v274
  %v276 = vsel %vm254, %v233, 0.0
  %v277 = vrot.slane %v276, 4
  %v278 = vadd.f32 %v276, %v277
  %v279 = vrot.slane %v278, 2
  %v280 = vadd.f32 %v278, %v279
  %v281 = vrot.slane %v280, 1
  %v282 = vadd.f32 %v280, %v281
  %v283 = vsel %vm254, %v234, 0.0
  %v284 = vrot.slane %v283, 4
  %v285 = vadd.f32 %v283, %v284
  %v286 = vrot.slane %v285, 2
  %v287 = vadd.f32 %v285, %v286
  %v288 = vrot.slane %v287, 1
  %v289 = vadd.f32 %v287, %v288
  %v290 = vsel %vm254, %v235, 0.0
  %v291 = vrot.slane %v290, 4
  %v292 = vadd.f32 %v290, %v291
  %v293 = vrot.slane %v292, 2
  %v294 = vadd.f32 %v292, %v293
  %v295 = vrot.slane %v294, 1
  %v296 = vadd.f32 %v294, %v295
  %v297 = vsel %vm254, %v236, 0.0
  %v298 = vrot.slane %v297, 4
  %v299 = vadd.f32 %v297, %v298
  %v300 = vrot.slane %v299, 2
  %v301 = vadd.f32 %v299, %v300
  %v302 = vrot.slane %v301, 1
  %v303 = vadd.f32 %v301, %v302
  %v304 = vsel %vm254, %v237, 0.0
  %v305 = vrot.slane %v304, 4
  %v306 = vadd.f32 %v304, %v305
  %v307 = vrot.slane %v306, 2
  %v308 = vadd.f32 %v306, %v307
  %v309 = vrot.slane %v308, 1
  %v310 = vadd.f32 %v308, %v309
  %v311 = vsel %vm254, %v238, 0.0
  %v312 = vrot.slane %v311, 4
  %v313 = vadd.f32 %v311, %v312
  %v314 = vrot.slane %v313, 2
  %v315 = vadd.f32 %v313, %v314
  %v316 = vrot.slane %v315, 1
  %v317 = vadd.f32 %v315, %v316
  %v318 = vsel %vm254, %v239, 0.0
  %v319 = vrot.slane %v318, 4
  %v320 = vadd.f32 %v318, %v319
  %v321 = vrot.slane %v320, 2
  %v322 = vadd.f32 %v320, %v321
  %v323 = vrot.slane %v322, 1
  %v324 = vadd.f32 %v322, %v323
  %v325 = vsel %vm254, %v240, 0.0
  %v326 = vrot.slane %v325, 4
  %v327 = vadd.f32 %v325, %v326
  %v328 = vrot.slane %v327, 2
  %v329 = vadd.f32 %v327, %v328
  %v330 = vrot.slane %v329, 1
  %v331 = vadd.f32 %v329, %v330
  %v332 = vsel %vm254, %v241, 0.0
  %v333 = vrot.slane %v332, 4
  %v334 = vadd.f32 %v332, %v333
  %v335 = vrot.slane %v334, 2
  %v336 = vadd.f32 %v334, %v335
  %v337 = vrot.slane %v336, 1
  %v338 = vadd.f32 %v336, %v337
  %v339 = vsel %vm254, %v242, 0.0
  %v340 = vrot.slane %v339, 4
  %v341 = vadd.f32 %v339, %v340
  %v342 = vrot.slane %v341, 2
  %v343 = vadd.f32 %v341, %v342
  %v344 = vrot.slane %v343, 1
  %v345 = vadd.f32 %v343, %v344
  %v346 = vsel %vm254, %v243, 0.0
  %v347 = vrot.slane %v346, 4
  %v348 = vadd.f32 %v346, %v347
  %v349 = vrot.slane %v348, 2
  %v350 = vadd.f32 %v348, %v349
  %v351 = vrot.slane %v350, 1
  %v352 = vadd.f32 %v350, %v351
  %v353 = vsel %vm254, %v244, 0.0
  %v354 = vrot.slane %v353, 4
  %v355 = vadd.f32 %v353, %v354
  %v356 = vrot.slane %v355, 2
  %v357 = vadd.f32 %v355, %v356
  %v358 = vrot.slane %v357, 1
  %v359 = vadd.f32 %v357, %v358
  %v360 = vsel %vm254, %v245, 0.0
  %v361 = vrot.slane %v360, 4
  %v362 = vadd.f32 %v360, %v361
  %v363 = vrot.slane %v362, 2
  %v364 = vadd.f32 %v362, %v363
  %v365 = vrot.slane %v364, 1
  %v366 = vadd.f32 %v364, %v365
  %v367 = vsel %vm254, %v246, 0.0
  %v368 = vrot.slane %v367, 4
  %v369 = vadd.f32 %v367, %v368
  %v370 = vrot.slane %v369, 2
  %v371 = vadd.f32 %v369, %v370
  %v372 = vrot.slane %v371, 1
  %v373 = vadd.f32 %v371, %v372
  %v374 = vsel %vm254, %v247, 0.0
  %v375 = vrot.slane %v374, 4
  %v376 = vadd.f32 %v374, %v375
  %v377 = vrot.slane %v376, 2
  %v378 = vadd.f32 %v376, %v377
  %v379 = vrot.slane %v378, 1
  %v380 = vadd.f32 %v378, %v379
  %v381 = vsel %vm254, %v248, 0.0
  %v382 = vrot.slane %v381, 4
  %v383 = vadd.f32 %v381, %v382
  %v384 = vrot.slane %v383, 2
  %v385 = vadd.f32 %v383, %v384
  %v386 = vrot.slane %v385, 1
  %v387 = vadd.f32 %v385, %v386
  %v388 = vsel %vm254, %v249, 0.0
  %v389 = vrot.slane %v388, 4
  %v390 = vadd.f32 %v388, %v389
  %v391 = vrot.slane %v390, 2
  %v392 = vadd.f32 %v390, %v391
  %v393 = vrot.slane %v392, 1
  %v394 = vadd.f32 %v392, %v393
  %v395 = vsel %vm254, %v250, 0.0
  %v396 = vrot.slane %v395, 4
  %v397 = vadd.f32 %v395, %v396
  %v398 = vrot.slane %v397, 2
  %v399 = vadd.f32 %v397, %v398
  %v400 = vrot.slane %v399, 1
  %v401 = vadd.f32 %v399, %v400
  %v402 = vsel %vm254, %v251, 0.0
  %v403 = vrot.slane %v402, 4
  %v404 = vadd.f32 %v402, %v403
  %v405 = vrot.slane %v404, 2
  %v406 = vadd.f32 %v404, %v405
  %v407 = vrot.slane %v406, 1
  %v408 = vadd.f32 %v406, %v407
  %v409 = vsel %vm254, %v252, 0.0
  %v410 = vrot.slane %v409, 4
  %v411 = vadd.f32 %v409, %v410
  %v412 = vrot.slane %v411, 2
  %v413 = vadd.f32 %v411, %v412
  %v414 = vrot.slane %v413, 1
  %v415 = vadd.f32 %v413, %v414
  %v416 = vsel %vm254, %v253, 0.0
  %v417 = vrot.slane %v416, 4
  %v418 = vadd.f32 %v416, %v417
  %v419 = vrot.slane %v418, 2
  %v420 = vadd.f32 %v418, %v419
  %v421 = vrot.slane %v420, 1
  %v422 = vadd.f32 %v420, %v421
  %v423 = vld [vmem:[%s1] sm:$0xff]
  %v424 = vld [vmem:[%s1 + $0x8] sm:$0xff]
  %v425 = vld [vmem:[%s1 + $0x10] sm:$0xff]
  %v426 = vld [vmem:[%s4] sm:$0xff]
  %v427 = vld [vmem:[%s4 + $0x8] sm:$0xff]
  %v428 = vld [vmem:[%s4 + $0x10] sm:$0xff]
  %v429 = vld [vmem:[%s4 + $0x18] sm:$0xff]
  %v431 = vsel %vm254, %v423, 0
  %v434 = vsel %vm254, %v424, 0
  %v437 = vsel %vm254, %v425, 0
  %439 = vmatprep.subr.mxu0 0.0
  %440 = vmatpush1.msra.mxu0 %v426
  %441 = vmatprep.subr.mxu0 0.0
  %442 = vmatpush1.msra.mxu0 %v427
  %443 = vmatprep.subr.mxu0 0.0
  %444 = vmatpush1.msra.mxu0 %v428
  %445 = vmatprep.subr.mxu0 0.0
  %446 = vmatpush1.msra.mxu0 %v429
  %447 = vmatprep.subr.mxu0 0.0
  %448 = vmatpush1.msra.mxu0 0.0
  %449 = vmatprep.subr.mxu0 0.0
  %450 = vmatpush1.msra.mxu0 0.0
  %451 = vmatprep.subr.mxu0 0.0
  %452 = vmatpush1.msra.mxu0 0.0
  %453 = vmatprep.subr.mxu0 0.0
  %454 = vmatpush1.msra.mxu0 0.0
  %455 = vmatprep.subr.mxu0 0.0
  %456 = vmatpush1.msra.mxu0 0.0
  %457 = vmatprep.subr.mxu0 0.0
  %458 = vmatpush1.msra.mxu0 0.0
  %459 = vmatprep.subr.mxu0 0.0
  %460 = vmatpush1.msra.mxu0 0.0
  %461 = vmatprep.subr.mxu0 0.0
  %462 = vmatpush1.msra.mxu0 0.0
  %463 = vmatprep.subr.mxu0 0.0
  %464 = vmatpush1.msra.mxu0 0.0
  %465 = vmatprep.subr.mxu0 0.0
  %466 = vmatpush1.msra.mxu0 0.0
  %467 = vmatprep.subr.mxu0 0.0
  %468 = vmatpush1.msra.mxu0 0.0
  %469 = vmatprep.subr.mxu0 0.0
  %470 = vmatpush1.msra.mxu0 0.0
  %471 = vmatprep.subr.mxu0 0.0
  %472 = vmatpush1.msra.mxu0 0.0
  %473 = vmatprep.subr.mxu0 0.0
  %474 = vmatpush1.msra.mxu0 0.0
  %475 = vmatprep.subr.mxu0 0.0
  %476 = vmatpush1.msra.mxu0 0.0
  %477 = vmatprep.subr.mxu0 0.0
  %478 = vmatpush1.msra.mxu0 0.0
  %479 = vmatprep.subr.mxu0 0.0
  %480 = vmatpush1.msra.mxu0 0.0
  %481 = vmatprep.subr.mxu0 0.0
  %482 = vmatpush1.msra.mxu0 0.0
  %483 = vmatprep.subr.mxu0 0.0
  %484 = vmatpush1.msra.mxu0 0.0
  %485 = vmatprep.subr.mxu0 0.0
  %486 = vmatpush1.msra.mxu0 0.0
  %487 = vmatprep.subr.mxu0 0.0
  %488 = vmatpush1.msra.mxu0 0.0
  %489 = vmatprep.subr.mxu0 0.0
  %490 = vmatpush1.msra.mxu0 0.0
  %491 = vmatprep.subr.mxu0 0.0
  %492 = vmatpush1.msra.mxu0 0.0
  %493 = vmatprep.subr.mxu0 0.0
  %494 = vmatpush1.msra.mxu0 0.0
  %495 = vmatprep.subr.mxu0 0.0
  %496 = vmatpush1.msra.mxu0 0.0
  %497 = vmatprep.subr.mxu0 0.0
  %498 = vmatpush1.msra.mxu0 0.0
  %499 = vmatprep.subr.mxu0 0.0
  %500 = vmatpush1.msra.mxu0 0.0
  %501 = vmatprep.subr.mxu0 0.0
  %502 = vmatpush1.msra.mxu0 0.0
  %503 = vmatprep.mubr.f32.mxu0 0.0
  %504 = vmatmul.mubr.f32.gmra.mrb[0].mxu0 %v431
  %v505 = vpop.f32.mrb[0].mxu0
  %v506 = vadd.f32 1.0, %v505
  %v507 = vpop.f32.mrb[0].mxu0
  %508 = vmatprep.mubr.f32.mxu0 0.0
  %509 = vmatmul.mubr.f32.gmra.mrb[0].mxu0 %v434
  %v510 = vpop.f32.mrb[0].mxu0
  %v511 = vadd.f32 1.0, %v510
  %v512 = vpop.f32.mrb[0].mxu0
  %513 = vmatprep.mubr.f32.mxu0 0.0
  %514 = vmatmul.mubr.f32.gmra.mrb[0].mxu0 %v437
  %v515 = vpop.f32.mrb[0].mxu0
  %v516 = vadd.f32 1.0, %v515
  %v517 = vpop.f32.mrb[0].mxu0
  %518 = vdwg.mxu0
  %v522 = vrot.slane %v506, 1
  %v523 = vrot.slane %v506, 2
  %v524 = vrot.slane %v506, 3
  %v525 = vrot.slane %v506, 4
  %v526 = vrot.slane %v506, 5
  %v527 = vrot.slane %v506, 6
  %v528 = vrot.slane %v506, 7
  %v529 = vrot.slane %v511, 1
  %v530 = vrot.slane %v511, 2
  %v531 = vrot.slane %v511, 3
  %v532 = vrot.slane %v511, 4
  %v533 = vrot.slane %v511, 5
  %v534 = vrot.slane %v511, 6
  %v535 = vrot.slane %v511, 7
  %v536 = vrot.slane %v516, 1
  %v537 = vrot.slane %v516, 2
  %v538 = vrot.slane %v516, 3
  %v539 = vrot.slane %v516, 4
  %v540 = vrot.slane %v516, 5
  %v541 = vrot.slane %v516, 6
  %v542 = vrot.slane %v516, 7
  %v567 = vmul.f32 %v261, %v506
  %v568 = vmul.f32 %v268, %v522
  %v569 = vmul.f32 %v275, %v523
  %v570 = vmul.f32 %v282, %v524
  %v571 = vmul.f32 %v289, %v525
  %v572 = vmul.f32 %v296, %v526
  %v573 = vmul.f32 %v303, %v527
  %v574 = vmul.f32 %v310, %v528
  %v575 = vmul.f32 %v317, %v511
  %v576 = vmul.f32 %v324, %v529
  %v577 = vmul.f32 %v331, %v530
  %v578 = vmul.f32 %v338, %v531
  %v579 = vmul.f32 %v345, %v532
  %v580 = vmul.f32 %v352, %v533
  %v581 = vmul.f32 %v359, %v534
  %v582 = vmul.f32 %v366, %v535
  %v583 = vmul.f32 %v373, %v516
  %v584 = vmul.f32 %v380, %v536
  %v585 = vmul.f32 %v387, %v537
  %v586 = vmul.f32 %v394, %v538
  %v587 = vmul.f32 %v401, %v539
  %v588 = vmul.f32 %v408, %v540
  %v589 = vmul.f32 %v415, %v541
  %v590 = vmul.f32 %v422, %v542
  %v591 = vmul.f32 %v567, %v567
  %v592 = vmul.f32 %v568, %v568
  %v593 = vmul.f32 %v569, %v569
  %v594 = vmul.f32 %v570, %v570
  %v595 = vmul.f32 %v571, %v571
  %v596 = vmul.f32 %v572, %v572
  %v597 = vmul.f32 %v573, %v573
  %v598 = vmul.f32 %v574, %v574
  %v599 = vmul.f32 %v575, %v575
  %v600 = vmul.f32 %v576, %v576
  %v601 = vmul.f32 %v577, %v577
  %v602 = vmul.f32 %v578, %v578
  %v603 = vmul.f32 %v579, %v579
  %v604 = vmul.f32 %v580, %v580
  %v605 = vmul.f32 %v581, %v581
  %v606 = vmul.f32 %v582, %v582
  %v607 = vmul.f32 %v583, %v583
  %v608 = vmul.f32 %v584, %v584
  %v609 = vmul.f32 %v585, %v585
  %v610 = vmul.f32 %v586, %v586
  %v611 = vmul.f32 %v587, %v587
  %v612 = vmul.f32 %v588, %v588
  %v613 = vmul.f32 %v589, %v589
  %v614 = vmul.f32 %v590, %v590
  %v639 = vrot.slane %v592, 7
  %vm640 = vcmask 1041409
  %v641 = vsel %vm640, %v639, %v591
  %v642 = vrot.slane %v593, 6
  %vm643 = vcmask 1042434
  %v644 = vsel %vm643, %v642, %v641
  %v645 = vrot.slane %v594, 5
  %vm646 = vcmask 1043459
  %v647 = vsel %vm646, %v645, %v644
  %v648 = vrot.slane %v595, 4
  %vm649 = vcmask 1044484
  %v650 = vsel %vm649, %v648, %v647
  %v651 = vrot.slane %v596, 3
  %vm652 = vcmask 1045509
  %v653 = vsel %vm652, %v651, %v650
  %v654 = vrot.slane %v597, 2
  %vm655 = vcmask 1046534
  %v656 = vsel %vm655, %v654, %v653
  %v657 = vrot.slane %v598, 1
  %vm658 = vcmask 1047559
  %v659 = vsel %vm658, %v657, %v656
  %v660 = vrot.slane %v600, 7
  %v661 = vsel %vm640, %v660, %v599
  %v662 = vrot.slane %v601, 6
  %v663 = vsel %vm643, %v662, %v661
  %v664 = vrot.slane %v602, 5
  %v665 = vsel %vm646, %v664, %v663
  %v666 = vrot.slane %v603, 4
  %v667 = vsel %vm649, %v666, %v665
  %v668 = vrot.slane %v604, 3
  %v669 = vsel %vm652, %v668, %v667
  %v670 = vrot.slane %v605, 2
  %v671 = vsel %vm655, %v670, %v669
  %v672 = vrot.slane %v606, 1
  %v673 = vsel %vm658, %v672, %v671
  %v674 = vrot.slane %v608, 7
  %v675 = vsel %vm640, %v674, %v607
  %v676 = vrot.slane %v609, 6
  %v677 = vsel %vm643, %v676, %v675
  %v678 = vrot.slane %v610, 5
  %v679 = vsel %vm646, %v678, %v677
  %v680 = vrot.slane %v611, 4
  %v681 = vsel %vm649, %v680, %v679
  %v682 = vrot.slane %v612, 3
  %v683 = vsel %vm652, %v682, %v681
  %v684 = vrot.slane %v613, 2
  %v685 = vsel %vm655, %v684, %v683
  %v686 = vrot.slane %v614, 1
  %v687 = vsel %vm658, %v686, %v685
  %v691 = vsel %vm254, %v659, 0.0
  %692 = vadd.xlane.f32.xlu0 %v691
  %v693 = vpop.xlane.xlu0 %692
  %v694 = vsel %vm254, %v673, 0.0
  %695 = vadd.xlane.f32.xlu0 %v694
  %v696 = vpop.xlane.xlu0 %695
  %v697 = vsel %vm254, %v687, 0.0
  %698 = vadd.xlane.f32.xlu0 %v697
  %v699 = vpop.xlane.xlu0 %698
  %v700 = vmax.f32 %v693, 1e-24
  %v701 = vmax.f32 %v696, 1e-24
  %v702 = vmax.f32 %v699, 1e-24
  %v703 = vrsqrt.pop %v700
  %v704 = vrsqrt.pop %v701
  %v705 = vrsqrt.pop %v702
  %v709 = vrot.slane %v703, 1
  %v710 = vrot.slane %v703, 2
  %v711 = vrot.slane %v703, 3
  %v712 = vrot.slane %v703, 4
  %v713 = vrot.slane %v703, 5
  %v714 = vrot.slane %v703, 6
  %v715 = vrot.slane %v703, 7
  %v716 = vrot.slane %v704, 1
  %v717 = vrot.slane %v704, 2
  %v718 = vrot.slane %v704, 3
  %v719 = vrot.slane %v704, 4
  %v720 = vrot.slane %v704, 5
  %v721 = vrot.slane %v704, 6
  %v722 = vrot.slane %v704, 7
  %v723 = vrot.slane %v705, 1
  %v724 = vrot.slane %v705, 2
  %v725 = vrot.slane %v705, 3
  %v726 = vrot.slane %v705, 4
  %v727 = vrot.slane %v705, 5
  %v728 = vrot.slane %v705, 6
  %v729 = vrot.slane %v705, 7
  %v754 = vmul.f32 %v567, %v703
  %v755 = vmul.f32 %v568, %v709
  %v756 = vmul.f32 %v569, %v710
  %v757 = vmul.f32 %v570, %v711
  %v758 = vmul.f32 %v571, %v712
  %v759 = vmul.f32 %v572, %v713
  %v760 = vmul.f32 %v573, %v714
  %v761 = vmul.f32 %v574, %v715
  %v762 = vmul.f32 %v575, %v704
  %v763 = vmul.f32 %v576, %v716
  %v764 = vmul.f32 %v577, %v717
  %v765 = vmul.f32 %v578, %v718
  %v766 = vmul.f32 %v579, %v719
  %v767 = vmul.f32 %v580, %v720
  %v768 = vmul.f32 %v581, %v721
  %v769 = vmul.f32 %v582, %v722
  %v770 = vmul.f32 %v583, %v705
  %v771 = vmul.f32 %v584, %v723
  %v772 = vmul.f32 %v585, %v724
  %v773 = vmul.f32 %v586, %v725
  %v774 = vmul.f32 %v587, %v726
  %v775 = vmul.f32 %v588, %v727
  %v776 = vmul.f32 %v589, %v728
  %v777 = vmul.f32 %v590, %v729
  %v778 = vld [vmem:[%s5] sm:$0xff]
  %v779 = vld [vmem:[%s5 + $0x8] sm:$0xff]
  %v780 = vld [vmem:[%s5 + $0x10] sm:$0xff]
  %v781 = vld [vmem:[%s5 + $0x18] sm:$0xff]
  %v806 = vrot.slane %v755, 7
  %v807 = vsel %vm640, %v806, %v754
  %v808 = vrot.slane %v756, 6
  %v809 = vsel %vm643, %v808, %v807
  %v810 = vrot.slane %v757, 5
  %v811 = vsel %vm646, %v810, %v809
  %v812 = vrot.slane %v758, 4
  %v813 = vsel %vm649, %v812, %v811
  %v814 = vrot.slane %v759, 3
  %v815 = vsel %vm652, %v814, %v813
  %v816 = vrot.slane %v760, 2
  %v817 = vsel %vm655, %v816, %v815
  %v818 = vrot.slane %v761, 1
  %v819 = vsel %vm658, %v818, %v817
  %v820 = vrot.slane %v763, 7
  %v821 = vsel %vm640, %v820, %v762
  %v822 = vrot.slane %v764, 6
  %v823 = vsel %vm643, %v822, %v821
  %v824 = vrot.slane %v765, 5
  %v825 = vsel %vm646, %v824, %v823
  %v826 = vrot.slane %v766, 4
  %v827 = vsel %vm649, %v826, %v825
  %v828 = vrot.slane %v767, 3
  %v829 = vsel %vm652, %v828, %v827
  %v830 = vrot.slane %v768, 2
  %v831 = vsel %vm655, %v830, %v829
  %v832 = vrot.slane %v769, 1
  %v833 = vsel %vm658, %v832, %v831
  %v834 = vrot.slane %v771, 7
  %v835 = vsel %vm640, %v834, %v770
  %v836 = vrot.slane %v772, 6
  %v837 = vsel %vm643, %v836, %v835
  %v838 = vrot.slane %v773, 5
  %v839 = vsel %vm646, %v838, %v837
  %v840 = vrot.slane %v774, 4
  %v841 = vsel %vm649, %v840, %v839
  %v842 = vrot.slane %v775, 3
  %v843 = vsel %vm652, %v842, %v841
  %v844 = vrot.slane %v776, 2
  %v845 = vsel %vm655, %v844, %v843
  %v846 = vrot.slane %v777, 1
  %v847 = vsel %vm658, %v846, %v845
  %v848 = vsel %vm254, %v819, 0
  %v850 = vsel %vm254, %v833, 0
  %v852 = vsel %vm254, %v847, 0
  %854 = vmatprep.subr.mxu0 0.0
  %855 = vmatpush1.msra.mxu0 %v778
  %856 = vmatprep.subr.mxu0 0.0
  %857 = vmatpush1.msra.mxu0 %v779
  %858 = vmatprep.subr.mxu0 0.0
  %859 = vmatpush1.msra.mxu0 %v780
  %860 = vmatprep.subr.mxu0 0.0
  %861 = vmatpush1.msra.mxu0 %v781
  %862 = vmatprep.subr.mxu0 0.0
  %863 = vmatpush1.msra.mxu0 0.0
  %864 = vmatprep.subr.mxu0 0.0
  %865 = vmatpush1.msra.mxu0 0.0
  %866 = vmatprep.subr.mxu0 0.0
  %867 = vmatpush1.msra.mxu0 0.0
  %868 = vmatprep.subr.mxu0 0.0
  %869 = vmatpush1.msra.mxu0 0.0
  %870 = vmatprep.subr.mxu0 0.0
  %871 = vmatpush1.msra.mxu0 0.0
  %872 = vmatprep.subr.mxu0 0.0
  %873 = vmatpush1.msra.mxu0 0.0
  %874 = vmatprep.subr.mxu0 0.0
  %875 = vmatpush1.msra.mxu0 0.0
  %876 = vmatprep.subr.mxu0 0.0
  %877 = vmatpush1.msra.mxu0 0.0
  %878 = vmatprep.subr.mxu0 0.0
  %879 = vmatpush1.msra.mxu0 0.0
  %880 = vmatprep.subr.mxu0 0.0
  %881 = vmatpush1.msra.mxu0 0.0
  %882 = vmatprep.subr.mxu0 0.0
  %883 = vmatpush1.msra.mxu0 0.0
  %884 = vmatprep.subr.mxu0 0.0
  %885 = vmatpush1.msra.mxu0 0.0
  %886 = vmatprep.subr.mxu0 0.0
  %887 = vmatpush1.msra.mxu0 0.0
  %888 = vmatprep.subr.mxu0 0.0
  %889 = vmatpush1.msra.mxu0 0.0
  %890 = vmatprep.subr.mxu0 0.0
  %891 = vmatpush1.msra.mxu0 0.0
  %892 = vmatprep.subr.mxu0 0.0
  %893 = vmatpush1.msra.mxu0 0.0
  %894 = vmatprep.subr.mxu0 0.0
  %895 = vmatpush1.msra.mxu0 0.0
  %896 = vmatprep.subr.mxu0 0.0
  %897 = vmatpush1.msra.mxu0 0.0
  %898 = vmatprep.subr.mxu0 0.0
  %899 = vmatpush1.msra.mxu0 0.0
  %900 = vmatprep.subr.mxu0 0.0
  %901 = vmatpush1.msra.mxu0 0.0
  %902 = vmatprep.subr.mxu0 0.0
  %903 = vmatpush1.msra.mxu0 0.0
  %904 = vmatprep.subr.mxu0 0.0
  %905 = vmatpush1.msra.mxu0 0.0
  %906 = vmatprep.subr.mxu0 0.0
  %907 = vmatpush1.msra.mxu0 0.0
  %908 = vmatprep.subr.mxu0 0.0
  %909 = vmatpush1.msra.mxu0 0.0
  %910 = vmatprep.subr.mxu0 0.0
  %911 = vmatpush1.msra.mxu0 0.0
  %912 = vmatprep.subr.mxu0 0.0
  %913 = vmatpush1.msra.mxu0 0.0
  %914 = vmatprep.subr.mxu0 0.0
  %915 = vmatpush1.msra.mxu0 0.0
  %916 = vmatprep.subr.mxu0 0.0
  %917 = vmatpush1.msra.mxu0 0.0
  %918 = vmatprep.mubr.f32.mxu0 0.0
  %919 = vmatmul.mubr.f32.gmra.mrb[0].mxu0 %v848
  %v920 = vpop.f32.mrb[0].mxu0
  %v921 = vadd.f32 0.0, %v920
  %v922 = vpop.f32.mrb[0].mxu0
  %923 = vmatprep.mubr.f32.mxu0 0.0
  %924 = vmatmul.mubr.f32.gmra.mrb[0].mxu0 %v850
  %v925 = vpop.f32.mrb[0].mxu0
  %v926 = vadd.f32 0.0, %v925
  %v927 = vpop.f32.mrb[0].mxu0
  %928 = vmatprep.mubr.f32.mxu0 0.0
  %929 = vmatmul.mubr.f32.gmra.mrb[0].mxu0 %v852
  %v930 = vpop.f32.mrb[0].mxu0
  %v931 = vadd.f32 0.0, %v930
  %v932 = vpop.f32.mrb[0].mxu0
  %933 = vdwg.mxu0
  %v934 = vld [vmem:[%s3] sm:$0xff]
  %v935 = vld [vmem:[%s3 + $0x8] sm:$0xff]
  %v936 = vld [vmem:[%s3 + $0x10] sm:$0xff]
  %v937 = vld [vmem:[%s6] sm:$0xff]
  %v938 = vld [vmem:[%s6 + $0x8] sm:$0xff]
  %v939 = vld [vmem:[%s6 + $0x10] sm:$0xff]
  %v940 = vld [vmem:[%s6 + $0x18] sm:$0xff]
  %v941 = vld [vmem:[%s6 + $0x20] sm:$0xff]
  %v942 = vld [vmem:[%s6 + $0x28] sm:$0xff]
  %v943 = vld [vmem:[%s6 + $0x30] sm:$0xff]
  %v944 = vld [vmem:[%s6 + $0x38] sm:$0xff]
  %v945 = vld [vmem:[%s7] sm:$0x1]
  %v947 = vlaneseq
  %v948 = vshrl.u32 %v947, 7
  %v949 = vsub.s32 0, %v948
  %v950 = vrot.slane %v945, %v949
  %vm952 = vcmask 523264
  %v954 = vsel %vm952, %v934, 0
  %v957 = vsel %vm952, %v935, 0
  %v960 = vsel %vm952, %v936, 0
  %962 = vmatprep.subr.mxu0 0.0
  %963 = vmatpush1.msra.mxu0 %v937
  %964 = vmatprep.subr.mxu0 0.0
  %965 = vmatpush1.msra.mxu0 %v938
  %966 = vmatprep.subr.mxu0 0.0
  %967 = vmatpush1.msra.mxu0 %v939
  %968 = vmatprep.subr.mxu0 0.0
  %969 = vmatpush1.msra.mxu0 %v940
  %970 = vmatprep.subr.mxu0 0.0
  %971 = vmatpush1.msra.mxu0 %v941
  %972 = vmatprep.subr.mxu0 0.0
  %973 = vmatpush1.msra.mxu0 %v942
  %974 = vmatprep.subr.mxu0 0.0
  %975 = vmatpush1.msra.mxu0 %v943
  %976 = vmatprep.subr.mxu0 0.0
  %977 = vmatpush1.msra.mxu0 %v944
  %978 = vmatprep.subr.mxu0 0.0
  %979 = vmatpush1.msra.mxu0 0.0
  %980 = vmatprep.subr.mxu0 0.0
  %981 = vmatpush1.msra.mxu0 0.0
  %982 = vmatprep.subr.mxu0 0.0
  %983 = vmatpush1.msra.mxu0 0.0
  %984 = vmatprep.subr.mxu0 0.0
  %985 = vmatpush1.msra.mxu0 0.0
  %986 = vmatprep.subr.mxu0 0.0
  %987 = vmatpush1.msra.mxu0 0.0
  %988 = vmatprep.subr.mxu0 0.0
  %989 = vmatpush1.msra.mxu0 0.0
  %990 = vmatprep.subr.mxu0 0.0
  %991 = vmatpush1.msra.mxu0 0.0
  %992 = vmatprep.subr.mxu0 0.0
  %993 = vmatpush1.msra.mxu0 0.0
  %994 = vmatprep.subr.mxu0 0.0
  %995 = vmatpush1.msra.mxu0 0.0
  %996 = vmatprep.subr.mxu0 0.0
  %997 = vmatpush1.msra.mxu0 0.0
  %998 = vmatprep.subr.mxu0 0.0
  %999 = vmatpush1.msra.mxu0 0.0
  %1000 = vmatprep.subr.mxu0 0.0
  %1001 = vmatpush1.msra.mxu0 0.0
  %1002 = vmatprep.subr.mxu0 0.0
  %1003 = vmatpush1.msra.mxu0 0.0
  %1004 = vmatprep.subr.mxu0 0.0
  %1005 = vmatpush1.msra.mxu0 0.0
  %1006 = vmatprep.subr.mxu0 0.0
  %1007 = vmatpush1.msra.mxu0 0.0
  %1008 = vmatprep.subr.mxu0 0.0
  %1009 = vmatpush1.msra.mxu0 0.0
  %1010 = vmatprep.subr.mxu0 0.0
  %1011 = vmatpush1.msra.mxu0 0.0
  %1012 = vmatprep.subr.mxu0 0.0
  %1013 = vmatpush1.msra.mxu0 0.0
  %1014 = vmatprep.subr.mxu0 0.0
  %1015 = vmatpush1.msra.mxu0 0.0
  %1016 = vmatprep.subr.mxu0 0.0
  %1017 = vmatpush1.msra.mxu0 0.0
  %1018 = vmatprep.subr.mxu0 0.0
  %1019 = vmatpush1.msra.mxu0 0.0
  %1020 = vmatprep.subr.mxu0 0.0
  %1021 = vmatpush1.msra.mxu0 0.0
  %1022 = vmatprep.subr.mxu0 0.0
  %1023 = vmatpush1.msra.mxu0 0.0
  %1024 = vmatprep.subr.mxu0 0.0
  %1025 = vmatpush1.msra.mxu0 0.0
  %1026 = vmatprep.mubr.f32.mxu0 0.0
  %1027 = vmatmul.mubr.f32.gmra.mrb[0].mxu0 %v954
  %v1028 = vpop.f32.mrb[0].mxu0
  %v1029 = vadd.f32 %v950, %v1028
  %v1030 = vpop.f32.mrb[0].mxu0
  %1031 = vmatprep.mubr.f32.mxu0 0.0
  %1032 = vmatmul.mubr.f32.gmra.mrb[0].mxu0 %v957
  %v1033 = vpop.f32.mrb[0].mxu0
  %v1034 = vadd.f32 %v950, %v1033
  %v1035 = vpop.f32.mrb[0].mxu0
  %1036 = vmatprep.mubr.f32.mxu0 0.0
  %1037 = vmatmul.mubr.f32.gmra.mrb[0].mxu0 %v960
  %v1038 = vpop.f32.mrb[0].mxu0
  %v1039 = vadd.f32 %v950, %v1038
  %v1040 = vpop.f32.mrb[0].mxu0
  %1041 = vdwg.mxu0
  %v1042 = vxor.u32 %v1029, 2147483648
  %v1043 = vxor.u32 %v1034, 2147483648
  %v1044 = vxor.u32 %v1039, 2147483648
  %v1045 = vmul.f32 %v1042, 1.442695
  %v1046 = vpow.pop %v1045
  %v1047 = vmul.f32 %v1043, 1.442695
  %v1048 = vpow.pop %v1047
  %v1049 = vmul.f32 %v1044, 1.442695
  %v1050 = vpow.pop %v1049
  %v1051 = vadd.f32 %v1046, 1.0
  %v1052 = vadd.f32 %v1048, 1.0
  %v1053 = vadd.f32 %v1050, 1.0
  %v1054 = vrcp.pop %v1051
  %v1055 = vmul.f32 1.0, %v1054
  %v1056 = vrcp.pop %v1052
  %v1057 = vmul.f32 1.0, %v1056
  %v1058 = vrcp.pop %v1053
  %v1059 = vmul.f32 1.0, %v1058
  %v1060 = vmul.f32 %v1029, %v1055
  %v1061 = vmul.f32 %v1034, %v1057
  %v1062 = vmul.f32 %v1039, %v1059
  %v1063 = vld [vmem:[%s8] sm:$0xff]
  %v1064 = vld [vmem:[%s8 + $0x8] sm:$0xff]
  %v1065 = vld [vmem:[%s8 + $0x10] sm:$0xff]
  %v1066 = vld [vmem:[%s8 + $0x18] sm:$0xff]
  %v1067 = vld [vmem:[%s9] sm:$0x1]
  %v1069 = vlaneseq
  %v1070 = vshrl.u32 %v1069, 7
  %v1071 = vsub.s32 0, %v1070
  %v1072 = vrot.slane %v1067, %v1071
  %v1075 = vsel %vm254, %v1060, 0
  %v1078 = vsel %vm254, %v1061, 0
  %v1081 = vsel %vm254, %v1062, 0
  %1083 = vmatprep.subr.mxu0 0.0
  %1084 = vmatpush1.msra.mxu0 %v1063
  %1085 = vmatprep.subr.mxu0 0.0
  %1086 = vmatpush1.msra.mxu0 %v1064
  %1087 = vmatprep.subr.mxu0 0.0
  %1088 = vmatpush1.msra.mxu0 %v1065
  %1089 = vmatprep.subr.mxu0 0.0
  %1090 = vmatpush1.msra.mxu0 %v1066
  %1091 = vmatprep.subr.mxu0 0.0
  %1092 = vmatpush1.msra.mxu0 0.0
  %1093 = vmatprep.subr.mxu0 0.0
  %1094 = vmatpush1.msra.mxu0 0.0
  %1095 = vmatprep.subr.mxu0 0.0
  %1096 = vmatpush1.msra.mxu0 0.0
  %1097 = vmatprep.subr.mxu0 0.0
  %1098 = vmatpush1.msra.mxu0 0.0
  %1099 = vmatprep.subr.mxu0 0.0
  %1100 = vmatpush1.msra.mxu0 0.0
  %1101 = vmatprep.subr.mxu0 0.0
  %1102 = vmatpush1.msra.mxu0 0.0
  %1103 = vmatprep.subr.mxu0 0.0
  %1104 = vmatpush1.msra.mxu0 0.0
  %1105 = vmatprep.subr.mxu0 0.0
  %1106 = vmatpush1.msra.mxu0 0.0
  %1107 = vmatprep.subr.mxu0 0.0
  %1108 = vmatpush1.msra.mxu0 0.0
  %1109 = vmatprep.subr.mxu0 0.0
  %1110 = vmatpush1.msra.mxu0 0.0
  %1111 = vmatprep.subr.mxu0 0.0
  %1112 = vmatpush1.msra.mxu0 0.0
  %1113 = vmatprep.subr.mxu0 0.0
  %1114 = vmatpush1.msra.mxu0 0.0
  %1115 = vmatprep.subr.mxu0 0.0
  %1116 = vmatpush1.msra.mxu0 0.0
  %1117 = vmatprep.subr.mxu0 0.0
  %1118 = vmatpush1.msra.mxu0 0.0
  %1119 = vmatprep.subr.mxu0 0.0
  %1120 = vmatpush1.msra.mxu0 0.0
  %1121 = vmatprep.subr.mxu0 0.0
  %1122 = vmatpush1.msra.mxu0 0.0
  %1123 = vmatprep.subr.mxu0 0.0
  %1124 = vmatpush1.msra.mxu0 0.0
  %1125 = vmatprep.subr.mxu0 0.0
  %1126 = vmatpush1.msra.mxu0 0.0
  %1127 = vmatprep.subr.mxu0 0.0
  %1128 = vmatpush1.msra.mxu0 0.0
  %1129 = vmatprep.subr.mxu0 0.0
  %1130 = vmatpush1.msra.mxu0 0.0
  %1131 = vmatprep.subr.mxu0 0.0
  %1132 = vmatpush1.msra.mxu0 0.0
  %1133 = vmatprep.subr.mxu0 0.0
  %1134 = vmatpush1.msra.mxu0 0.0
  %1135 = vmatprep.subr.mxu0 0.0
  %1136 = vmatpush1.msra.mxu0 0.0
  %1137 = vmatprep.subr.mxu0 0.0
  %1138 = vmatpush1.msra.mxu0 0.0
  %1139 = vmatprep.subr.mxu0 0.0
  %1140 = vmatpush1.msra.mxu0 0.0
  %1141 = vmatprep.subr.mxu0 0.0
  %1142 = vmatpush1.msra.mxu0 0.0
  %1143 = vmatprep.subr.mxu0 0.0
  %1144 = vmatpush1.msra.mxu0 0.0
  %1145 = vmatprep.subr.mxu0 0.0
  %1146 = vmatpush1.msra.mxu0 0.0
  %1147 = vmatprep.mubr.f32.mxu0 0.0
  %1148 = vmatmul.mubr.f32.gmra.mrb[0].mxu0 %v1075
  %v1149 = vpop.f32.mrb[0].mxu0
  %v1150 = vadd.f32 %v1072, %v1149
  %v1151 = vpop.f32.mrb[0].mxu0
  %1152 = vmatprep.mubr.f32.mxu0 0.0
  %1153 = vmatmul.mubr.f32.gmra.mrb[0].mxu0 %v1078
  %v1154 = vpop.f32.mrb[0].mxu0
  %v1155 = vadd.f32 %v1072, %v1154
  %v1156 = vpop.f32.mrb[0].mxu0
  %1157 = vmatprep.mubr.f32.mxu0 0.0
  %1158 = vmatmul.mubr.f32.gmra.mrb[0].mxu0 %v1081
  %v1159 = vpop.f32.mrb[0].mxu0
  %v1160 = vadd.f32 %v1072, %v1159
  %v1161 = vpop.f32.mrb[0].mxu0
  %1162 = vdwg.mxu0
  %v1163 = vxor.u32 %v1150, 2147483648
  %v1164 = vxor.u32 %v1155, 2147483648
  %v1165 = vxor.u32 %v1160, 2147483648
  %v1166 = vmul.f32 %v1163, 1.442695
  %v1167 = vpow.pop %v1166
  %v1168 = vmul.f32 %v1164, 1.442695
  %v1169 = vpow.pop %v1168
  %v1170 = vmul.f32 %v1165, 1.442695
  %v1171 = vpow.pop %v1170
  %v1172 = vadd.f32 %v1167, 1.0
  %v1173 = vadd.f32 %v1169, 1.0
  %v1174 = vadd.f32 %v1171, 1.0
  %v1175 = vrcp.pop %v1172
  %v1176 = vmul.f32 1.0, %v1175
  %v1177 = vrcp.pop %v1173
  %v1178 = vmul.f32 1.0, %v1177
  %v1179 = vrcp.pop %v1174
  %v1180 = vmul.f32 1.0, %v1179
  %v1181 = vmul.f32 %v1150, %v1176
  %v1182 = vmul.f32 %v1155, %v1178
  %v1183 = vmul.f32 %v1160, %v1180
  %v1184 = vmul.f32 %v921, %v1181
  %v1185 = vmul.f32 %v926, %v1182
  %v1186 = vmul.f32 %v931, %v1183
  %1187 = vst.msk [vmem:[%s10] sm:$0xff] %vm254, %v1184
  %1188 = vst.msk [vmem:[%s10 + $0x8] sm:$0xff] %vm254, %v1185
  %1189 = vst.msk [vmem:[%s10 + $0x10] sm:$0xff] %vm254, %v1186
  // Predicated region
  $region42: #{lcao_interaction.8} parent=0 // pred_check
    _
  $region43: #{lcao_interaction.8} parent=0 // pred_check_branch
    %1191 = sbr.rel (0) target = $region45
  $region44: #{lcao_interaction.8} parent=0 // pred_region
    _
  $region45: #{lcao_interaction.8} parent=0 // pred_fallthru
    _
  // Predicated region
  $region46: #{lcao_interaction.8} parent=0 // pred_check
    _
  $region47: #{lcao_interaction.8} parent=0 // pred_check_branch
    %1193 = sbr.rel (0) target = $region49
  $region48: #{lcao_interaction.8} parent=0 // pred_region
    _
  $region49: #{lcao_interaction.8} parent=0 // pred_fallthru
    _

</llo_original>
